<compile_context>
chip_gen: v5e
topology: v5e:2x2
jax: 0.10.0
libtpu: 0.0.40
codegen_flags: <defaults>
</compile_context>

<pallas_src>
import functools

import jax
import jax.numpy as jnp
from jax.experimental import pallas as pl
from jax.experimental.pallas import tpu as pltpu


def _deblur_loss_kernel(t_ref, blur_ref, xi_ref, out_ref, *, C, H, W, KH, is_rgb):
    ph = KH // 2
    R = xi_ref.shape[0]                      # (C if is_rgb else 1) * H rows

    # E(x_i): identity (undefined upstream); clip to [0, 1].
    est = jnp.clip(xi_ref[...].astype(jnp.float32), 0.0, 1.0)

    # Min-max normalize: scalar reciprocal + broadcast multiply (no eps, per reference).
    mn = jnp.min(est)
    mx = jnp.max(est)
    est = (est - mn) * (1.0 / (mx - mn))

    # Per-channel row index (channels stacked along sublanes).  Only row (sublane)
    # masks are needed now: lane-direction boundaries live in the zero bands of T_u.
    row = jax.lax.broadcasted_iota(jnp.int32, (R, W), 0)
    y = row % H

    # 'same' cross-correlation, one blur-kernel row at a time:
    #   out = sum_u  rows_u @ T_u
    # rows_u = est shifted by dy=u-ph along sublanes (XLU roll); rows that wrap across
    # image/channel boundaries are zeroed by the mask, i.e. zero padding.  The lane
    # direction is a single (R, W) x (W, W) MXU matmul per u.  Accumulation stays in
    # vregs; nothing is written back to VMEM until the final loss.
    acc = None
    for u in range(KH):
        dy = u - ph
        rows = est
        if dy != 0:
            rows = pltpu.roll(est, (-dy) % R, axis=0)
            rows = jnp.where((y >= -dy) & (y < H - dy), rows, 0.0)
        term = jnp.dot(rows, t_ref[u],
                       preferred_element_type=jnp.float32,
                       precision=jax.lax.Precision.HIGHEST)
        acc = term if acc is None else acc + term

    mnb = jnp.min(acc)
    mxb = jnp.max(acc)
    est_b = (acc - mnb) * (1.0 / (mxb - mnb))

    if is_rgb:
        diff = blur_ref[...].astype(jnp.float32) - est_b
        loss = jnp.sum(diff * diff)
    else:
        # Grayscale: est_b is a single (H, W) slab; accumulate the squared diff per
        # blurred channel instead of materializing C copies of est_b.
        loss = jnp.float32(0.0)
        for c in range(C):
            d = blur_ref[pl.ds(c * H, H), :].astype(jnp.float32) - est_b
            loss = loss + jnp.sum(d * d)

    out_ref[...] = loss.reshape(1, 1)        # torch.norm(.)**2


def _banded_toeplitz(kernel, W):
    """T[u, x_src, x_out] = kernel[u, x_src - x_out + pw]; zeros outside the band."""
    KH, KW = kernel.shape
    pw = KW // 2
    xs = jnp.arange(W)
    v = xs[:, None] - xs[None, :] + pw               # (x_src, x_out) -> tap index
    valid = (v >= 0) & (v < KW)
    taps = kernel[:, jnp.clip(v, 0, KW - 1)]          # (KH, W, W)
    return jnp.where(valid[None], taps, 0.0).astype(jnp.float32)


def deblur_loss(blur_image, x_i, kernel, *, is_rgb=True):
    """Pallas implementation of the deblur data-fidelity loss forward(kernel)."""
    C, H, W = blur_image.shape
    Ci = x_i.shape[0]                        # C if is_rgb else 1
    KH, KW = kernel.shape

    # Lane-dense 2-D layout (free XLA reshape); W should ideally be a multiple of 128.
    blur2d = blur_image.reshape(C * H, W)
    xi2d = x_i.reshape(Ci * H, W)
    toep = _banded_toeplitz(kernel, W)       # (KH, W, W) MXU operands, built on host/XLA

    body = functools.partial(_deblur_loss_kernel,
                             C=C, H=H, W=W, KH=KH, is_rgb=is_rgb)

    # VMEM budget: whole-image single-buffered blocks + Toeplitz bank + headroom for
    # in-flight temporaries, capped below the physical VMEM of this chip generation
    # (64 MiB on v7x, 128 MiB on v5e/v6e) with ~25% headroom.
    try:
        vmem_cap = pltpu.get_tpu_info().vmem_capacity_bytes
    except Exception:  # conservative fallback if the query is unavailable
        vmem_cap = 64 * 2 ** 20
    f32 = 4
    resident = (KH * W * W + C * H * W + 2 * Ci * H * W) * f32
    vmem_limit = int(min(int(vmem_cap * 0.75), max(4 * 2 ** 20, 8 * resident)))
    # TODO(synk): for images too large for a single VMEM block, switch to an H-tiled
    # multi-pass grid (global min/max pass, conv pass, normalize+reduce pass) with a
    # leading "parallel" axis so v7x's second TensorCore is also used.

    out = pl.pallas_call(
        body,
        out_shape=jax.ShapeDtypeStruct((1, 1), jnp.float32),
        in_specs=[
            pl.BlockSpec(memory_space=pltpu.MemorySpace.VMEM),   # banded Toeplitz bank
            pl.BlockSpec(memory_space=pltpu.MemorySpace.VMEM),   # blurred image (whole)
            pl.BlockSpec(memory_space=pltpu.MemorySpace.VMEM),   # learned image (whole)
        ],
        out_specs=pl.BlockSpec(memory_space=pltpu.MemorySpace.VMEM),
        compiler_params=pltpu.CompilerParams(vmem_limit_bytes=vmem_limit),
    )(toep, blur2d, xi2d)
    return out[0, 0]


def _reference(blur, x_i, kern, is_rgb=True):
    """Pure-JAX reference for correctness checking."""
    C, H, W = blur.shape
    KH, KW = kern.shape
    ph, pw = KH // 2, KW // 2
    est = x_i if is_rgb else jnp.broadcast_to(x_i, (C, H, W))
    est = jnp.clip(est.astype(jnp.float32), 0.0, 1.0)
    est = (est - est.min()) / (est.max() - est.min())
    pad = jnp.pad(est, ((0, 0), (ph, KH - 1 - ph), (pw, KW - 1 - pw)))
    acc = jnp.zeros((C, H, W), jnp.float32)
    for u in range(KH):
        for v in range(KW):
            acc = acc + kern[u, v] * pad[:, u:u + H, v:v + W]
    acc = (acc - acc.min()) / (acc.max() - acc.min())
    d = blur - acc
    return jnp.sum(d * d)


if __name__ == "__main__":
    key = jax.random.PRNGKey(0)
    k1, k2, k3 = jax.random.split(key, 3)

    # Module state (deterministic, synthetic): blur_image + learnable image_init.
    # W = 128 keeps the lane axis fully dense; H, C stay small.
    C, H, W = 3, 32, 128
    blur_image = jax.random.uniform(k1, (C, H, W), dtype=jnp.float32)
    image_init = jax.random.uniform(k2, (C, H, W), dtype=jnp.float32) * 1.5 - 0.25  # exercises clip
    # forward(kernel) argument: a small blur kernel.
    blur_kernel = jax.random.uniform(k3, (5, 5), dtype=jnp.float32)
    blur_kernel = blur_kernel / jnp.sum(blur_kernel)

    loss = deblur_loss(blur_image, image_init, blur_kernel, is_rgb=True)
    loss = jax.block_until_ready(loss)

    ref = _reference(blur_image, image_init, blur_kernel, is_rgb=True)
    assert jnp.allclose(loss, ref, rtol=1e-4, atol=1e-4), (float(loss), float(ref))

    print("KERNEL_OK")
</pallas_src>

<mosaic_0001>
module attributes {stable_mosaic.version = 11 : i64} {
  func.func @_deblur_loss_kernel(%arg0: memref<5x128x128xf32, #tpu.memory_space<vmem>>, %arg1: memref<96x128xf32, #tpu.memory_space<vmem>>, %arg2: memref<96x128xf32, #tpu.memory_space<vmem>>, %arg3: memref<1x1xf32, #tpu.memory_space<vmem>>) attributes {dimension_semantics = [], scalar_prefetch = 0 : i64, scratch_operands = 0 : i64, tpu.core_type = #tpu.core_type<tc>} {
    %c0 = arith.constant 0 : index
    %c0_0 = arith.constant 0 : index
    %0 = vector.load %arg2[%c0, %c0_0] : memref<96x128xf32, #tpu.memory_space<vmem>>, vector<96x128xf32>
    %cst = arith.constant 0.000000e+00 : f32
    %cst_1 = arith.constant 1.000000e+00 : f32
    %1 = vector.broadcast %cst : f32 to vector<96x128xf32>
    %2 = arith.maximumf %1, %0 : vector<96x128xf32>
    %3 = vector.broadcast %cst_1 : f32 to vector<96x128xf32>
    %4 = arith.minimumf %3, %2 : vector<96x128xf32>
    %5 = vector.shape_cast %4 : vector<96x128xf32> to vector<1x96x128xf32>
    %cst_2 = arith.constant dense<0x7F800000> : vector<1xf32>
    %6 = vector.multi_reduction <minimumf>, %5, %cst_2 [1, 2] : vector<1x96x128xf32> to vector<1xf32>
    %7 = vector.shape_cast %6 : vector<1xf32> to vector<1x1x1xf32>
    %8 = vector.extract %7[0, 0, 0] : f32 from vector<1x1x1xf32>
    %9 = vector.shape_cast %4 : vector<96x128xf32> to vector<1x96x128xf32>
    %cst_3 = arith.constant dense<0xFF800000> : vector<1xf32>
    %10 = vector.multi_reduction <maximumf>, %9, %cst_3 [1, 2] : vector<1x96x128xf32> to vector<1xf32>
    %11 = vector.shape_cast %10 : vector<1xf32> to vector<1x1x1xf32>
    %12 = vector.extract %11[0, 0, 0] : f32 from vector<1x1x1xf32>
    %13 = vector.broadcast %8 : f32 to vector<96x128xf32>
    %14 = arith.subf %4, %13 : vector<96x128xf32>
    %15 = arith.subf %12, %8 : f32
    %cst_4 = arith.constant 1.000000e+00 : f32
    %16 = arith.divf %cst_4, %15 : f32
    %17 = vector.broadcast %16 : f32 to vector<96x128xf32>
    %18 = arith.mulf %14, %17 : vector<96x128xf32>
    %19 = tpu.iota {dimensions = array<i32: 0>} : vector<96x128xi32>
    %c32_i32 = arith.constant 32 : i32
    %c0_i32 = arith.constant 0 : i32
    %20 = arith.cmpi eq, %c32_i32, %c0_i32 : i32
    %c1_i32 = arith.constant 1 : i32
    %21 = arith.select %20, %c1_i32, %c32_i32 : i32
    %22 = vector.broadcast %21 : i32 to vector<96x128xi32>
    %23 = arith.remsi %19, %22 : vector<96x128xi32>
    %c0_i32_5 = arith.constant 0 : i32
    %24 = vector.broadcast %c0_i32_5 : i32 to vector<96x128xi32>
    %25 = arith.cmpi ne, %23, %24 : vector<96x128xi32>
    %c0_i32_6 = arith.constant 0 : i32
    %26 = vector.broadcast %c0_i32_6 : i32 to vector<96x128xi32>
    %27 = arith.cmpi slt, %23, %26 : vector<96x128xi32>
    %c0_i32_7 = arith.constant 0 : i32
    %28 = arith.cmpi slt, %21, %c0_i32_7 : i32
    %29 = vector.broadcast %28 : i1 to vector<96x128xi1>
    %30 = vector.broadcast %29 : vector<96x128xi1> to vector<96x128xi1>
    %31 = arith.xori %27, %30 : vector<96x128xi1>
    %32 = arith.andi %31, %25 : vector<96x128xi1>
    %33 = vector.broadcast %21 : i32 to vector<96x128xi32>
    %34 = arith.addi %23, %33 : vector<96x128xi32>
    %35 = arith.select %32, %34, %23 : vector<96x128xi1>, vector<96x128xi32>
    %c2_i32 = arith.constant 2 : i32
    %36 = tpu.dynamic_rotate %18 by %c2_i32 dim 0 : vector<96x128xf32>, i32 -> vector<96x128xf32>
    %c2_i32_8 = arith.constant 2 : i32
    %37 = vector.broadcast %c2_i32_8 : i32 to vector<96x128xi32>
    %38 = arith.cmpi sge, %35, %37 : vector<96x128xi32>
    %c34_i32 = arith.constant 34 : i32
    %39 = vector.broadcast %c34_i32 : i32 to vector<96x128xi32>
    %40 = arith.cmpi slt, %35, %39 : vector<96x128xi32>
    %41 = arith.andi %38, %40 : vector<96x128xi1>
    %cst_9 = arith.constant 0.000000e+00 : f32
    %42 = vector.broadcast %cst_9 : f32 to vector<96x128xf32>
    %43 = arith.select %41, %36, %42 : vector<96x128xi1>, vector<96x128xf32>
    %c0_10 = arith.constant 0 : index
    %c0_11 = arith.constant 0 : index
    %c0_12 = arith.constant 0 : index
    %44 = vector.load %arg0[%c0_10, %c0_11, %c0_12] : memref<5x128x128xf32, #tpu.memory_space<vmem>>, vector<1x128x128xf32>
    %45 = vector.shape_cast %44 : vector<1x128x128xf32> to vector<128x128xf32>
    %cst_13 = arith.constant dense<0.000000e+00> : vector<96x128xf32>
    %46 = tpu.matmul %43, %45, %cst_13 {dimension_numbers = #tpu.dot_dimension_numbers<[1], [0], [0], [1], [0, 0, 1, 1], [], []>, precision = #tpu.contract_precision<fp32>} : vector<96x128xf32>, vector<128x128xf32>, vector<96x128xf32> -> vector<96x128xf32>
    %c1_i32_14 = arith.constant 1 : i32
    %47 = tpu.dynamic_rotate %18 by %c1_i32_14 dim 0 : vector<96x128xf32>, i32 -> vector<96x128xf32>
    %c1_i32_15 = arith.constant 1 : i32
    %48 = vector.broadcast %c1_i32_15 : i32 to vector<96x128xi32>
    %49 = arith.cmpi sge, %35, %48 : vector<96x128xi32>
    %c33_i32 = arith.constant 33 : i32
    %50 = vector.broadcast %c33_i32 : i32 to vector<96x128xi32>
    %51 = arith.cmpi slt, %35, %50 : vector<96x128xi32>
    %52 = arith.andi %49, %51 : vector<96x128xi1>
    %cst_16 = arith.constant 0.000000e+00 : f32
    %53 = vector.broadcast %cst_16 : f32 to vector<96x128xf32>
    %54 = arith.select %52, %47, %53 : vector<96x128xi1>, vector<96x128xf32>
    %c1 = arith.constant 1 : index
    %c0_17 = arith.constant 0 : index
    %c0_18 = arith.constant 0 : index
    %55 = vector.load %arg0[%c1, %c0_17, %c0_18] : memref<5x128x128xf32, #tpu.memory_space<vmem>>, vector<1x128x128xf32>
    %56 = vector.shape_cast %55 : vector<1x128x128xf32> to vector<128x128xf32>
    %cst_19 = arith.constant dense<0.000000e+00> : vector<96x128xf32>
    %57 = tpu.matmul %54, %56, %cst_19 {dimension_numbers = #tpu.dot_dimension_numbers<[1], [0], [0], [1], [0, 0, 1, 1], [], []>, precision = #tpu.contract_precision<fp32>} : vector<96x128xf32>, vector<128x128xf32>, vector<96x128xf32> -> vector<96x128xf32>
    %58 = arith.addf %46, %57 : vector<96x128xf32>
    %c2 = arith.constant 2 : index
    %c0_20 = arith.constant 0 : index
    %c0_21 = arith.constant 0 : index
    %59 = vector.load %arg0[%c2, %c0_20, %c0_21] : memref<5x128x128xf32, #tpu.memory_space<vmem>>, vector<1x128x128xf32>
    %60 = vector.shape_cast %59 : vector<1x128x128xf32> to vector<128x128xf32>
    %cst_22 = arith.constant dense<0.000000e+00> : vector<96x128xf32>
    %61 = tpu.matmul %18, %60, %cst_22 {dimension_numbers = #tpu.dot_dimension_numbers<[1], [0], [0], [1], [0, 0, 1, 1], [], []>, precision = #tpu.contract_precision<fp32>} : vector<96x128xf32>, vector<128x128xf32>, vector<96x128xf32> -> vector<96x128xf32>
    %62 = arith.addf %58, %61 : vector<96x128xf32>
    %c95_i32 = arith.constant 95 : i32
    %63 = tpu.dynamic_rotate %18 by %c95_i32 dim 0 : vector<96x128xf32>, i32 -> vector<96x128xf32>
    %c-1_i32 = arith.constant -1 : i32
    %64 = vector.broadcast %c-1_i32 : i32 to vector<96x128xi32>
    %65 = arith.cmpi sge, %35, %64 : vector<96x128xi32>
    %c31_i32 = arith.constant 31 : i32
    %66 = vector.broadcast %c31_i32 : i32 to vector<96x128xi32>
    %67 = arith.cmpi slt, %35, %66 : vector<96x128xi32>
    %68 = arith.andi %65, %67 : vector<96x128xi1>
    %cst_23 = arith.constant 0.000000e+00 : f32
    %69 = vector.broadcast %cst_23 : f32 to vector<96x128xf32>
    %70 = arith.select %68, %63, %69 : vector<96x128xi1>, vector<96x128xf32>
    %c3 = arith.constant 3 : index
    %c0_24 = arith.constant 0 : index
    %c0_25 = arith.constant 0 : index
    %71 = vector.load %arg0[%c3, %c0_24, %c0_25] : memref<5x128x128xf32, #tpu.memory_space<vmem>>, vector<1x128x128xf32>
    %72 = vector.shape_cast %71 : vector<1x128x128xf32> to vector<128x128xf32>
    %cst_26 = arith.constant dense<0.000000e+00> : vector<96x128xf32>
    %73 = tpu.matmul %70, %72, %cst_26 {dimension_numbers = #tpu.dot_dimension_numbers<[1], [0], [0], [1], [0, 0, 1, 1], [], []>, precision = #tpu.contract_precision<fp32>} : vector<96x128xf32>, vector<128x128xf32>, vector<96x128xf32> -> vector<96x128xf32>
    %74 = arith.addf %62, %73 : vector<96x128xf32>
    %c94_i32 = arith.constant 94 : i32
    %75 = tpu.dynamic_rotate %18 by %c94_i32 dim 0 : vector<96x128xf32>, i32 -> vector<96x128xf32>
    %c-2_i32 = arith.constant -2 : i32
    %76 = vector.broadcast %c-2_i32 : i32 to vector<96x128xi32>
    %77 = arith.cmpi sge, %35, %76 : vector<96x128xi32>
    %c30_i32 = arith.constant 30 : i32
    %78 = vector.broadcast %c30_i32 : i32 to vector<96x128xi32>
    %79 = arith.cmpi slt, %35, %78 : vector<96x128xi32>
    %80 = arith.andi %77, %79 : vector<96x128xi1>
    %cst_27 = arith.constant 0.000000e+00 : f32
    %81 = vector.broadcast %cst_27 : f32 to vector<96x128xf32>
    %82 = arith.select %80, %75, %81 : vector<96x128xi1>, vector<96x128xf32>
    %c4 = arith.constant 4 : index
    %c0_28 = arith.constant 0 : index
    %c0_29 = arith.constant 0 : index
    %83 = vector.load %arg0[%c4, %c0_28, %c0_29] : memref<5x128x128xf32, #tpu.memory_space<vmem>>, vector<1x128x128xf32>
    %84 = vector.shape_cast %83 : vector<1x128x128xf32> to vector<128x128xf32>
    %cst_30 = arith.constant dense<0.000000e+00> : vector<96x128xf32>
    %85 = tpu.matmul %82, %84, %cst_30 {dimension_numbers = #tpu.dot_dimension_numbers<[1], [0], [0], [1], [0, 0, 1, 1], [], []>, precision = #tpu.contract_precision<fp32>} : vector<96x128xf32>, vector<128x128xf32>, vector<96x128xf32> -> vector<96x128xf32>
    %86 = arith.addf %74, %85 : vector<96x128xf32>
    %87 = vector.shape_cast %86 : vector<96x128xf32> to vector<1x96x128xf32>
    %cst_31 = arith.constant dense<0x7F800000> : vector<1xf32>
    %88 = vector.multi_reduction <minimumf>, %87, %cst_31 [1, 2] : vector<1x96x128xf32> to vector<1xf32>
    %89 = vector.shape_cast %88 : vector<1xf32> to vector<1x1x1xf32>
    %90 = vector.extract %89[0, 0, 0] : f32 from vector<1x1x1xf32>
    %91 = vector.shape_cast %86 : vector<96x128xf32> to vector<1x96x128xf32>
    %cst_32 = arith.constant dense<0xFF800000> : vector<1xf32>
    %92 = vector.multi_reduction <maximumf>, %91, %cst_32 [1, 2] : vector<1x96x128xf32> to vector<1xf32>
    %93 = vector.shape_cast %92 : vector<1xf32> to vector<1x1x1xf32>
    %94 = vector.extract %93[0, 0, 0] : f32 from vector<1x1x1xf32>
    %95 = vector.broadcast %90 : f32 to vector<96x128xf32>
    %96 = arith.subf %86, %95 : vector<96x128xf32>
    %97 = arith.subf %94, %90 : f32
    %cst_33 = arith.constant 1.000000e+00 : f32
    %98 = arith.divf %cst_33, %97 : f32
    %99 = vector.broadcast %98 : f32 to vector<96x128xf32>
    %100 = arith.mulf %96, %99 : vector<96x128xf32>
    %c0_34 = arith.constant 0 : index
    %c0_35 = arith.constant 0 : index
    %101 = vector.load %arg1[%c0_34, %c0_35] : memref<96x128xf32, #tpu.memory_space<vmem>>, vector<96x128xf32>
    %102 = arith.subf %101, %100 : vector<96x128xf32>
    %103 = arith.mulf %102, %102 : vector<96x128xf32>
    %104 = vector.shape_cast %103 : vector<96x128xf32> to vector<1x96x128xf32>
    %cst_36 = arith.constant dense<0.000000e+00> : vector<1xf32>
    %105 = vector.multi_reduction <add>, %104, %cst_36 [1, 2] : vector<1x96x128xf32> to vector<1xf32>
    %106 = vector.shape_cast %105 : vector<1xf32> to vector<1x1x1xf32>
    %107 = vector.extract %106[0, 0, 0] : f32 from vector<1x1x1xf32>
    %108 = vector.broadcast %107 : f32 to vector<1x1xf32>
    %c0_37 = arith.constant 0 : index
    %c0_38 = arith.constant 0 : index
    %109 = vector.load %arg3[%c0_37, %c0_38] : memref<1x1xf32, #tpu.memory_space<vmem>>, vector<1x1xf32>
    tpu.vector_store %arg3[%c0_37, %c0_38], %108 {strides = array<i32>} : memref<1x1xf32, #tpu.memory_space<vmem>>, vector<1x1xf32>,
    return
  }
}

</mosaic_0001>

<llo_original>
// kernel: tpu_custom_call.1
$region0: #{tpu_custom_call.1}
  #allocation0 [shape = 'u32[]', space=smem, size = 0x4, offset = 0x4, fixed_abs, tag = 'smem constant byte address 0x4 - core index']
  #allocation1 [shape = 'u32[72,128]{1,0:T(1,128)}', space=vmem, size = 0x9000, scoped, tag = 'internal scratch']
  %s0 = inlined_call_operand.hbm [shape: f32[5,128,128], index: 0, kind: input, shape index: {}]
  %s1 = inlined_call_operand.hbm [shape: f32[96,128], index: 1, kind: input, shape index: {}]
  %s2 = inlined_call_operand.hbm [shape: f32[96,128], index: 2, kind: input, shape index: {}]
  %s3 = inlined_call_operand.hbm [shape: f32[1,1], index: 3, kind: output, shape index: {}]
  %s4 = sld [smem:[#allocation0]]
  $region34: #{tpu_custom_call.1} parent=0
    _
  %s6 = ssub.s32 1, %s4
  %s7 = scalar_select 0, %s6, %s4
  $region1: #{tpu_custom_call.1} parent=0
    #allocation2 [shape = 'u8[327680]{0}', space=vmem, size = 0x50000, scoped, tag = 'input window, operand 0, single buffered']
    #allocation3 [shape = 's32[1]{0}', space=sflag, size = 0x4, scoped, tag = 'scoped memory for tpu_custom_call.1']
    #allocation4 [shape = 's32[1]{0}', space=sflag, size = 0x4, scoped, tag = 'scoped memory for tpu_custom_call.1']
    #allocation5 [shape = 'u8[49152]{0}', space=vmem, size = 0xc000, scoped, tag = 'input window, operand 1, single buffered']
    #allocation6 [shape = 's32[1]{0}', space=sflag, size = 0x4, scoped, tag = 'scoped memory for tpu_custom_call.1']
    #allocation7 [shape = 'u8[49152]{0}', space=vmem, size = 0xc000, scoped, tag = 'input window, operand 2, single buffered']
    #allocation8 [shape = 'u8[512]{0}', space=vmem, size = 0x400, scoped, tag = 'output window, operand 0, single buffered']
    %8 = vsyncpa [#allocation3], 0
    %9 = vsyncpa [#allocation6], 0
    %10 = vsyncpa [#allocation4], 0
    // Predicated region
    $region2: #{tpu_custom_call.1} parent=1 // pred_check
      _
    $region3: #{tpu_custom_call.1} parent=1 // pred_check_branch
      %12 = sbr.rel (0) target = $region5
    $region4: #{tpu_custom_call.1} parent=1 // pred_region
      %14 = vsyncadd [#allocation3], 0
      %s15 = sshll.u32 %s0, 4
      %s16 = int_to_ptr.hbm [resolvable:$true] %s15
      %s17 = sshll.u32 [#allocation2], 4
      %s18 = int_to_ptr.vmem [resolvable:$true] %s17
      %23 = dma.hbm_to_vmem [thread:$0]  %s16, 10240, %s18, [#allocation3], 128, 128, 8
    $region5: #{tpu_custom_call.1} parent=1 // pred_fallthru
      _
    // Predicated region
    $region6: #{tpu_custom_call.1} parent=1 // pred_check
      _
    $region7: #{tpu_custom_call.1} parent=1 // pred_check_branch
      %25 = sbr.rel (0) target = $region9
    $region8: #{tpu_custom_call.1} parent=1 // pred_region
      %27 = vsyncadd [#allocation6], 0
      %s28 = sshll.u32 %s1, 4
      %s29 = int_to_ptr.hbm [resolvable:$true] %s28
      %s30 = sshll.u32 [#allocation5], 4
      %s31 = int_to_ptr.vmem [resolvable:$true] %s30
      %36 = dma.hbm_to_vmem [thread:$0]  %s29, 1536, %s31, [#allocation6], 128, 128, 8
    $region9: #{tpu_custom_call.1} parent=1 // pred_fallthru
      _
    // Predicated region
    $region10: #{tpu_custom_call.1} parent=1 // pred_check
      _
    $region11: #{tpu_custom_call.1} parent=1 // pred_check_branch
      %38 = sbr.rel (0) target = $region13
    $region12: #{tpu_custom_call.1} parent=1 // pred_region
      %40 = vsyncadd [#allocation6], 0
      %s41 = sshll.u32 %s2, 4
      %s42 = int_to_ptr.hbm [resolvable:$true] %s41
      %s43 = sshll.u32 [#allocation7], 4
      %s44 = int_to_ptr.vmem [resolvable:$true] %s43
      %49 = dma.hbm_to_vmem [thread:$0]  %s42, 1536, %s44, [#allocation6], 128, 128, 8
    $region13: #{tpu_custom_call.1} parent=1 // pred_fallthru
      _
    // Predicated region
    $region14: #{tpu_custom_call.1} parent=1 // pred_check
      _
    $region15: #{tpu_custom_call.1} parent=1 // pred_check_branch
      %51 = sbr.rel (0) target = $region17
    $region16: #{tpu_custom_call.1} parent=1 // pred_region
      %53 = dma.done [#allocation3], 10240
    $region17: #{tpu_custom_call.1} parent=1 // pred_fallthru
      _
    // Predicated region
    $region18: #{tpu_custom_call.1} parent=1 // pred_check
      _
    $region19: #{tpu_custom_call.1} parent=1 // pred_check_branch
      %55 = sbr.rel (0) target = $region21
    $region20: #{tpu_custom_call.1} parent=1 // pred_region
      %57 = dma.done [#allocation6], 1536
    $region21: #{tpu_custom_call.1} parent=1 // pred_fallthru
      _
    // Predicated region
    $region22: #{tpu_custom_call.1} parent=1 // pred_check
      _
    $region23: #{tpu_custom_call.1} parent=1 // pred_check_branch
      %59 = sbr.rel (0) target = $region25
    $region24: #{tpu_custom_call.1} parent=1 // pred_region
      %61 = dma.done [#allocation6], 1536
    $region25: #{tpu_custom_call.1} parent=1 // pred_fallthru
      _
    %v62 = vld [vmem:[#allocation7] sm:$0xff]
    %v63 = vld [vmem:[#allocation7 + $0x8] sm:$0xff]
    %v64 = vld [vmem:[#allocation7 + $0x10] sm:$0xff]
    %v65 = vld [vmem:[#allocation7 + $0x18] sm:$0xff]
    %v66 = vld [vmem:[#allocation7 + $0x20] sm:$0xff]
    %v67 = vld [vmem:[#allocation7 + $0x28] sm:$0xff]
    %v68 = vld [vmem:[#allocation7 + $0x30] sm:$0xff]
    %v69 = vld [vmem:[#allocation7 + $0x38] sm:$0xff]
    %v70 = vld [vmem:[#allocation7 + $0x40] sm:$0xff]
    %v71 = vld [vmem:[#allocation7 + $0x48] sm:$0xff]
    %v72 = vld [vmem:[#allocation7 + $0x50] sm:$0xff]
    %v73 = vld [vmem:[#allocation7 + $0x58] sm:$0xff]
    %v74 = vmax.f32 %v62, 0.0
    %v75 = vmax.f32 %v63, 0.0
    %v76 = vmax.f32 %v64, 0.0
    %v77 = vmax.f32 %v65, 0.0
    %v78 = vmax.f32 %v66, 0.0
    %v79 = vmax.f32 %v67, 0.0
    %v80 = vmax.f32 %v68, 0.0
    %v81 = vmax.f32 %v69, 0.0
    %v82 = vmax.f32 %v70, 0.0
    %v83 = vmax.f32 %v71, 0.0
    %v84 = vmax.f32 %v72, 0.0
    %v85 = vmax.f32 %v73, 0.0
    %v86 = vmin.f32 %v74, 1.0
    %v87 = vmin.f32 %v75, 1.0
    %v88 = vmin.f32 %v76, 1.0
    %v89 = vmin.f32 %v77, 1.0
    %v90 = vmin.f32 %v78, 1.0
    %v91 = vmin.f32 %v79, 1.0
    %v92 = vmin.f32 %v80, 1.0
    %v93 = vmin.f32 %v81, 1.0
    %v94 = vmin.f32 %v82, 1.0
    %v95 = vmin.f32 %v83, 1.0
    %v96 = vmin.f32 %v84, 1.0
    %v97 = vmin.f32 %v85, 1.0
    %v98 = vmin.f32 %v86, %v90
    %v99 = vmin.f32 %v87, %v91
    %v100 = vmin.f32 %v88, %v92
    %v101 = vmin.f32 %v89, %v93
    %v102 = vmin.f32 %v98, %v94
    %v103 = vmin.f32 %v99, %v95
    %v104 = vmin.f32 %v100, %v96
    %v105 = vmin.f32 %v101, %v97
    %v106 = vmin.f32 %v102, %v103
    %v107 = vmin.f32 %v104, %v105
    %v108 = vmin.f32 %v106, %v107
    %109 = vmin.xlane.f32.xlu0 %v108
    %v110 = vpop.xlane.xlu0 %109
    %v111 = vrot.slane %v110, 4
    %v112 = vmin.f32 %v110, %v111
    %v113 = vrot.slane %v112, 2
    %v114 = vmin.f32 %v112, %v113
    %v115 = vrot.slane %v114, 1
    %v116 = vmin.f32 %v114, %v115
    %s117 = vtos %v116
    %v118 = vmax.f32 %v86, %v90
    %v119 = vmax.f32 %v87, %v91
    %v120 = vmax.f32 %v88, %v92
    %v121 = vmax.f32 %v89, %v93
    %v122 = vmax.f32 %v118, %v94
    %v123 = vmax.f32 %v119, %v95
    %v124 = vmax.f32 %v120, %v96
    %v125 = vmax.f32 %v121, %v97
    %v126 = vmax.f32 %v122, %v123
    %v127 = vmax.f32 %v124, %v125
    %v128 = vmax.f32 %v126, %v127
    %129 = vmax.xlane.f32.xlu0 %v128
    %v130 = vpop.xlane.xlu0 %129
    %v131 = vrot.slane %v130, 4
    %v132 = vmax.f32 %v130, %v131
    %v133 = vrot.slane %v132, 2
    %v134 = vmax.f32 %v132, %v133
    %v135 = vrot.slane %v134, 1
    %v136 = vmax.f32 %v134, %v135
    %s137 = vtos %v136
    %v138 = vstv %s117
    %v139 = vsub.f32 %v86, %v138
    %v140 = vsub.f32 %v87, %v138
    %v141 = vsub.f32 %v88, %v138
    %v142 = vsub.f32 %v89, %v138
    %v143 = vsub.f32 %v90, %v138
    %v144 = vsub.f32 %v91, %v138
    %v145 = vsub.f32 %v92, %v138
    %v146 = vsub.f32 %v93, %v138
    %v147 = vsub.f32 %v94, %v138
    %v148 = vsub.f32 %v95, %v138
    %v149 = vsub.f32 %v96, %v138
    %v150 = vsub.f32 %v97, %v138
    %s151 = ssub.f32 %s137, %s117
    %v152 = vstv %s151
    %v153 = vrcp.pop %v152
    %v154 = vmul.f32 %v152, %v153
    %v155 = vsub.f32 1.0, %v154
    %v156 = vmul.f32 %v153, %v155
    %v157 = vadd.f32 %v153, %v156
    %vm158 = vweird.f32 %v152
    %vm159 = vweird.f32 %v153
    %vm160 = vmor %vm158, %vm159
    %v161 = vsel %vm160, %v153, %v157
    %v162 = vand.u32 2147483647, %v152
    %vm163 = vcmp.eq.f32.partialorder %v162, 8.507059e+37
    %v164 = vand.u32 %v152, 2147483648
    %v165 = vor.u32 1.1754944e-38, %v164
    %v166 = vsel %vm163, %v165, %v161
    %s167 = vtos %v166
    %v168 = vstv %s167
    %v169 = vmul.f32 %v139, %v168
    %v170 = vmul.f32 %v140, %v168
    %v171 = vmul.f32 %v141, %v168
    %v172 = vmul.f32 %v142, %v168
    %v173 = vmul.f32 %v143, %v168
    %v174 = vmul.f32 %v144, %v168
    %v175 = vmul.f32 %v145, %v168
    %v176 = vmul.f32 %v146, %v168
    %v177 = vmul.f32 %v147, %v168
    %v178 = vmul.f32 %v148, %v168
    %v179 = vmul.f32 %v149, %v168
    %v180 = vmul.f32 %v150, %v168
    %v181 = vlaneseq
    %v182 = vshrl.u32 %v181, 7
    %v183 = vadd.s32 %v182, 8
    %v184 = vadd.s32 %v182, 16
    %v185 = vadd.s32 %v182, 24
    %v186 = vadd.s32 %v182, 32
    %v187 = vadd.s32 %v182, 40
    %v188 = vadd.s32 %v182, 48
    %v189 = vadd.s32 %v182, 56
    %v190 = vadd.s32 %v182, 64
    %v191 = vadd.s32 %v182, 72
    %v192 = vadd.s32 %v182, 80
    %v193 = vadd.s32 %v182, 88
    %vm194 = vcmp.lt.s32.totalorder %v182, 0
    %v195 = vsub.s32 0, %v182
    %v196 = vsel %vm194, %v195, %v182
    %v197 = vshrl.u32 %v196, 5
    %v198 = vand.u32 %v196, 31
    %v199 = vsub.s32 0, %v198
    %v200 = vsel %vm194, %v199, %v198
    %vm201 = vcmp.lt.s32.totalorder %v183, 0
    %v202 = vsub.s32 0, %v183
    %v203 = vsel %vm201, %v202, %v183
    %v204 = vshrl.u32 %v203, 5
    %v205 = vand.u32 %v203, 31
    %v206 = vsub.s32 0, %v205
    %v207 = vsel %vm201, %v206, %v205
    %vm208 = vcmp.lt.s32.totalorder %v184, 0
    %v209 = vsub.s32 0, %v184
    %v210 = vsel %vm208, %v209, %v184
    %v211 = vshrl.u32 %v210, 5
    %v212 = vand.u32 %v210, 31
    %v213 = vsub.s32 0, %v212
    %v214 = vsel %vm208, %v213, %v212
    %vm215 = vcmp.lt.s32.totalorder %v185, 0
    %v216 = vsub.s32 0, %v185
    %v217 = vsel %vm215, %v216, %v185
    %v218 = vshrl.u32 %v217, 5
    %v219 = vand.u32 %v217, 31
    %v220 = vsub.s32 0, %v219
    %v221 = vsel %vm215, %v220, %v219
    %vm222 = vcmp.lt.s32.totalorder %v186, 0
    %v223 = vsub.s32 0, %v186
    %v224 = vsel %vm222, %v223, %v186
    %v225 = vshrl.u32 %v224, 5
    %v226 = vand.u32 %v224, 31
    %v227 = vsub.s32 0, %v226
    %v228 = vsel %vm222, %v227, %v226
    %vm229 = vcmp.lt.s32.totalorder %v187, 0
    %v230 = vsub.s32 0, %v187
    %v231 = vsel %vm229, %v230, %v187
    %v232 = vshrl.u32 %v231, 5
    %v233 = vand.u32 %v231, 31
    %v234 = vsub.s32 0, %v233
    %v235 = vsel %vm229, %v234, %v233
    %vm236 = vcmp.lt.s32.totalorder %v188, 0
    %v237 = vsub.s32 0, %v188
    %v238 = vsel %vm236, %v237, %v188
    %v239 = vshrl.u32 %v238, 5
    %v240 = vand.u32 %v238, 31
    %v241 = vsub.s32 0, %v240
    %v242 = vsel %vm236, %v241, %v240
    %vm243 = vcmp.lt.s32.totalorder %v189, 0
    %v244 = vsub.s32 0, %v189
    %v245 = vsel %vm243, %v244, %v189
    %v246 = vshrl.u32 %v245, 5
    %v247 = vand.u32 %v245, 31
    %v248 = vsub.s32 0, %v247
    %v249 = vsel %vm243, %v248, %v247
    %vm250 = vcmp.lt.s32.totalorder %v190, 0
    %v251 = vsub.s32 0, %v190
    %v252 = vsel %vm250, %v251, %v190
    %v253 = vshrl.u32 %v252, 5
    %v254 = vand.u32 %v252, 31
    %v255 = vsub.s32 0, %v254
    %v256 = vsel %vm250, %v255, %v254
    %vm257 = vcmp.lt.s32.totalorder %v191, 0
    %v258 = vsub.s32 0, %v191
    %v259 = vsel %vm257, %v258, %v191
    %v260 = vshrl.u32 %v259, 5
    %v261 = vand.u32 %v259, 31
    %v262 = vsub.s32 0, %v261
    %v263 = vsel %vm257, %v262, %v261
    %vm264 = vcmp.lt.s32.totalorder %v192, 0
    %v265 = vsub.s32 0, %v192
    %v266 = vsel %vm264, %v265, %v192
    %v267 = vshrl.u32 %v266, 5
    %v268 = vand.u32 %v266, 31
    %v269 = vsub.s32 0, %v268
    %v270 = vsel %vm264, %v269, %v268
    %vm271 = vcmp.lt.s32.totalorder %v193, 0
    %v272 = vsub.s32 0, %v193
    %v273 = vsel %vm271, %v272, %v193
    %v274 = vshrl.u32 %v273, 5
    %v275 = vand.u32 %v273, 31
    %v276 = vsub.s32 0, %v275
    %v277 = vsel %vm271, %v276, %v275
    %vm278 = vcmp.ne.s32.totalorder %v200, 0
    %vm279 = vcmp.ne.s32.totalorder %v207, 0
    %vm280 = vcmp.ne.s32.totalorder %v214, 0
    %vm281 = vcmp.ne.s32.totalorder %v221, 0
    %vm282 = vcmp.ne.s32.totalorder %v228, 0
    %vm283 = vcmp.ne.s32.totalorder %v235, 0
    %vm284 = vcmp.ne.s32.totalorder %v242, 0
    %vm285 = vcmp.ne.s32.totalorder %v249, 0
    %vm286 = vcmp.ne.s32.totalorder %v256, 0
    %vm287 = vcmp.ne.s32.totalorder %v263, 0
    %vm288 = vcmp.ne.s32.totalorder %v270, 0
    %vm289 = vcmp.ne.s32.totalorder %v277, 0
    %vm290 = vcmp.lt.s32.totalorder %v200, 0
    %vm291 = vcmp.lt.s32.totalorder %v207, 0
    %vm292 = vcmp.lt.s32.totalorder %v214, 0
    %vm293 = vcmp.lt.s32.totalorder %v221, 0
    %vm294 = vcmp.lt.s32.totalorder %v228, 0
    %vm295 = vcmp.lt.s32.totalorder %v235, 0
    %vm296 = vcmp.lt.s32.totalorder %v242, 0
    %vm297 = vcmp.lt.s32.totalorder %v249, 0
    %vm298 = vcmp.lt.s32.totalorder %v256, 0
    %vm299 = vcmp.lt.s32.totalorder %v263, 0
    %vm300 = vcmp.lt.s32.totalorder %v270, 0
    %vm301 = vcmp.lt.s32.totalorder %v277, 0
    %vm302 = vmand %vm290, %vm278
    %vm303 = vmand %vm291, %vm279
    %vm304 = vmand %vm292, %vm280
    %vm305 = vmand %vm293, %vm281
    %vm306 = vmand %vm294, %vm282
    %vm307 = vmand %vm295, %vm283
    %vm308 = vmand %vm296, %vm284
    %vm309 = vmand %vm297, %vm285
    %vm310 = vmand %vm298, %vm286
    %vm311 = vmand %vm299, %vm287
    %vm312 = vmand %vm300, %vm288
    %vm313 = vmand %vm301, %vm289
    %v314 = vadd.s32 %v200, 32
    %v315 = vadd.s32 %v207, 32
    %v316 = vadd.s32 %v214, 32
    %v317 = vadd.s32 %v221, 32
    %v318 = vadd.s32 %v228, 32
    %v319 = vadd.s32 %v235, 32
    %v320 = vadd.s32 %v242, 32
    %v321 = vadd.s32 %v249, 32
    %v322 = vadd.s32 %v256, 32
    %v323 = vadd.s32 %v263, 32
    %v324 = vadd.s32 %v270, 32
    %v325 = vadd.s32 %v277, 32
    %v326 = vsel %vm302, %v314, %v200
    %v327 = vsel %vm303, %v315, %v207
    %v328 = vsel %vm304, %v316, %v214
    %v329 = vsel %vm305, %v317, %v221
    %v330 = vsel %vm306, %v318, %v228
    %v331 = vsel %vm307, %v319, %v235
    %v332 = vsel %vm308, %v320, %v242
    %v333 = vsel %vm309, %v321, %v249
    %v334 = vsel %vm310, %v322, %v256
    %v335 = vsel %vm311, %v323, %v263
    %v336 = vsel %vm312, %v324, %v270
    %v337 = vsel %vm313, %v325, %v277
    %v338 = vrot.slane %v169, 6
    %v339 = vrot.slane %v170, 6
    %v340 = vrot.slane %v171, 6
    %v341 = vrot.slane %v172, 6
    %v342 = vrot.slane %v173, 6
    %v343 = vrot.slane %v174, 6
    %v344 = vrot.slane %v175, 6
    %v345 = vrot.slane %v176, 6
    %v346 = vrot.slane %v177, 6
    %v347 = vrot.slane %v178, 6
    %v348 = vrot.slane %v179, 6
    %v349 = vrot.slane %v180, 6
    %vm350 = vcmp.lt.s32.totalorder %v182, 2
    %v351 = vsel %vm350, %v348, %v349
    %v352 = vsel %vm350, %v347, %v348
    %v353 = vsel %vm350, %v346, %v347
    %v354 = vsel %vm350, %v345, %v346
    %v355 = vsel %vm350, %v344, %v345
    %v356 = vsel %vm350, %v343, %v344
    %v357 = vsel %vm350, %v342, %v343
    %v358 = vsel %vm350, %v341, %v342
    %v359 = vsel %vm350, %v340, %v341
    %v360 = vsel %vm350, %v339, %v340
    %v361 = vsel %vm350, %v338, %v339
    %v362 = vsel %vm350, %v349, %v338
    %vm363 = vcmp.ge.s32.totalorder %v326, 2
    %vm364 = vcmp.ge.s32.totalorder %v327, 2
    %vm365 = vcmp.ge.s32.totalorder %v328, 2
    %vm366 = vcmp.ge.s32.totalorder %v329, 2
    %vm367 = vcmp.ge.s32.totalorder %v330, 2
    %vm368 = vcmp.ge.s32.totalorder %v331, 2
    %vm369 = vcmp.ge.s32.totalorder %v332, 2
    %vm370 = vcmp.ge.s32.totalorder %v333, 2
    %vm371 = vcmp.ge.s32.totalorder %v334, 2
    %vm372 = vcmp.ge.s32.totalorder %v335, 2
    %vm373 = vcmp.ge.s32.totalorder %v336, 2
    %vm374 = vcmp.ge.s32.totalorder %v337, 2
    %vm375 = vcmp.lt.s32.totalorder %v326, 34
    %vm376 = vcmp.lt.s32.totalorder %v327, 34
    %vm377 = vcmp.lt.s32.totalorder %v328, 34
    %vm378 = vcmp.lt.s32.totalorder %v329, 34
    %vm379 = vcmp.lt.s32.totalorder %v330, 34
    %vm380 = vcmp.lt.s32.totalorder %v331, 34
    %vm381 = vcmp.lt.s32.totalorder %v332, 34
    %vm382 = vcmp.lt.s32.totalorder %v333, 34
    %vm383 = vcmp.lt.s32.totalorder %v334, 34
    %vm384 = vcmp.lt.s32.totalorder %v335, 34
    %vm385 = vcmp.lt.s32.totalorder %v336, 34
    %vm386 = vcmp.lt.s32.totalorder %v337, 34
    %vm387 = vmand %vm363, %vm375
    %vm388 = vmand %vm364, %vm376
    %vm389 = vmand %vm365, %vm377
    %vm390 = vmand %vm366, %vm378
    %vm391 = vmand %vm367, %vm379
    %vm392 = vmand %vm368, %vm380
    %vm393 = vmand %vm369, %vm381
    %vm394 = vmand %vm370, %vm382
    %vm395 = vmand %vm371, %vm383
    %vm396 = vmand %vm372, %vm384
    %vm397 = vmand %vm373, %vm385
    %vm398 = vmand %vm374, %vm386
    %v399 = vsel %vm387, %v362, 0.0
    %v400 = vsel %vm388, %v361, 0.0
    %v401 = vsel %vm389, %v360, 0.0
    %v402 = vsel %vm390, %v359, 0.0
    %v403 = vsel %vm391, %v358, 0.0
    %v404 = vsel %vm392, %v357, 0.0
    %v405 = vsel %vm393, %v356, 0.0
    %v406 = vsel %vm394, %v355, 0.0
    %v407 = vsel %vm395, %v354, 0.0
    %v408 = vsel %vm396, %v353, 0.0
    %v409 = vsel %vm397, %v352, 0.0
    %v410 = vsel %vm398, %v351, 0.0
    %v411 = vld [vmem:[#allocation2] sm:$0xff]
    %v412 = vld [vmem:[#allocation2 + $0x8] sm:$0xff]
    %v413 = vld [vmem:[#allocation2 + $0x10] sm:$0xff]
    %v414 = vld [vmem:[#allocation2 + $0x18] sm:$0xff]
    %v415 = vld [vmem:[#allocation2 + $0x20] sm:$0xff]
    %v416 = vld [vmem:[#allocation2 + $0x28] sm:$0xff]
    %v417 = vld [vmem:[#allocation2 + $0x30] sm:$0xff]
    %v418 = vld [vmem:[#allocation2 + $0x38] sm:$0xff]
    %v419 = vld [vmem:[#allocation2 + $0x40] sm:$0xff]
    %v420 = vld [vmem:[#allocation2 + $0x48] sm:$0xff]
    %v421 = vld [vmem:[#allocation2 + $0x50] sm:$0xff]
    %v422 = vld [vmem:[#allocation2 + $0x58] sm:$0xff]
    %v423 = vld [vmem:[#allocation2 + $0x60] sm:$0xff]
    %v424 = vld [vmem:[#allocation2 + $0x68] sm:$0xff]
    %v425 = vld [vmem:[#allocation2 + $0x70] sm:$0xff]
    %v426 = vld [vmem:[#allocation2 + $0x78] sm:$0xff]
    %v427 = vrot.slane %v169, 7
    %v428 = vrot.slane %v170, 7
    %v429 = vrot.slane %v171, 7
    %v430 = vrot.slane %v172, 7
    %v431 = vrot.slane %v173, 7
    %v432 = vrot.slane %v174, 7
    %v433 = vrot.slane %v175, 7
    %v434 = vrot.slane %v176, 7
    %v435 = vrot.slane %v177, 7
    %v436 = vrot.slane %v178, 7
    %v437 = vrot.slane %v179, 7
    %v438 = vrot.slane %v180, 7
    %vm439 = vcmp.lt.s32.totalorder %v182, 1
    %v440 = vsel %vm439, %v437, %v438
    %v441 = vsel %vm439, %v436, %v437
    %v442 = vsel %vm439, %v435, %v436
    %v443 = vsel %vm439, %v434, %v435
    %v444 = vsel %vm439, %v433, %v434
    %v445 = vsel %vm439, %v432, %v433
    %v446 = vsel %vm439, %v431, %v432
    %v447 = vsel %vm439, %v430, %v431
    %v448 = vsel %vm439, %v429, %v430
    %v449 = vsel %vm439, %v428, %v429
    %v450 = vsel %vm439, %v427, %v428
    %v451 = vsel %vm439, %v438, %v427
    %vm452 = vcmp.ge.s32.totalorder %v326, 1
    %vm453 = vcmp.ge.s32.totalorder %v327, 1
    %vm454 = vcmp.ge.s32.totalorder %v328, 1
    %vm455 = vcmp.ge.s32.totalorder %v329, 1
    %vm456 = vcmp.ge.s32.totalorder %v330, 1
    %vm457 = vcmp.ge.s32.totalorder %v331, 1
    %vm458 = vcmp.ge.s32.totalorder %v332, 1
    %vm459 = vcmp.ge.s32.totalorder %v333, 1
    %vm460 = vcmp.ge.s32.totalorder %v334, 1
    %vm461 = vcmp.ge.s32.totalorder %v335, 1
    %vm462 = vcmp.ge.s32.totalorder %v336, 1
    %vm463 = vcmp.ge.s32.totalorder %v337, 1
    %vm464 = vcmp.lt.s32.totalorder %v326, 33
    %vm465 = vcmp.lt.s32.totalorder %v327, 33
    %vm466 = vcmp.lt.s32.totalorder %v328, 33
    %vm467 = vcmp.lt.s32.totalorder %v329, 33
    %vm468 = vcmp.lt.s32.totalorder %v330, 33
    %vm469 = vcmp.lt.s32.totalorder %v331, 33
    %vm470 = vcmp.lt.s32.totalorder %v332, 33
    %vm471 = vcmp.lt.s32.totalorder %v333, 33
    %vm472 = vcmp.lt.s32.totalorder %v334, 33
    %vm473 = vcmp.lt.s32.totalorder %v335, 33
    %vm474 = vcmp.lt.s32.totalorder %v336, 33
    %vm475 = vcmp.lt.s32.totalorder %v337, 33
    %vm476 = vmand %vm452, %vm464
    %vm477 = vmand %vm453, %vm465
    %vm478 = vmand %vm454, %vm466
    %vm479 = vmand %vm455, %vm467
    %vm480 = vmand %vm456, %vm468
    %vm481 = vmand %vm457, %vm469
    %vm482 = vmand %vm458, %vm470
    %vm483 = vmand %vm459, %vm471
    %vm484 = vmand %vm460, %vm472
    %vm485 = vmand %vm461, %vm473
    %vm486 = vmand %vm462, %vm474
    %vm487 = vmand %vm463, %vm475
    %v488 = vsel %vm476, %v451, 0.0
    %v489 = vsel %vm477, %v450, 0.0
    %v490 = vsel %vm478, %v449, 0.0
    %v491 = vsel %vm479, %v448, 0.0
    %v492 = vsel %vm480, %v447, 0.0
    %v493 = vsel %vm481, %v446, 0.0
    %v494 = vsel %vm482, %v445, 0.0
    %v495 = vsel %vm483, %v444, 0.0
    %v496 = vsel %vm484, %v443, 0.0
    %v497 = vsel %vm485, %v442, 0.0
    %v498 = vsel %vm486, %v441, 0.0
    %v499 = vsel %vm487, %v440, 0.0
    %s500 = scalar_lea.vmem [#allocation2], 128
    %v501 = vld [vmem:[%s500] sm:$0xff]
    %v502 = vld [vmem:[%s500 + $0x8] sm:$0xff]
    %v503 = vld [vmem:[%s500 + $0x10] sm:$0xff]
    %v504 = vld [vmem:[%s500 + $0x18] sm:$0xff]
    %v505 = vld [vmem:[%s500 + $0x20] sm:$0xff]
    %v506 = vld [vmem:[%s500 + $0x28] sm:$0xff]
    %v507 = vld [vmem:[%s500 + $0x30] sm:$0xff]
    %v508 = vld [vmem:[%s500 + $0x38] sm:$0xff]
    %v509 = vld [vmem:[%s500 + $0x40] sm:$0xff]
    %v510 = vld [vmem:[%s500 + $0x48] sm:$0xff]
    %v511 = vld [vmem:[%s500 + $0x50] sm:$0xff]
    %v512 = vld [vmem:[%s500 + $0x58] sm:$0xff]
    %v513 = vld [vmem:[%s500 + $0x60] sm:$0xff]
    %v514 = vld [vmem:[%s500 + $0x68] sm:$0xff]
    %v515 = vld [vmem:[%s500 + $0x70] sm:$0xff]
    %v516 = vld [vmem:[%s500 + $0x78] sm:$0xff]
    %v517 = vand.u32 %v516, 4294901760
    %518 = vmatpush.msra.mxu0 %v517
    %v519 = vand.u32 %v515, 4294901760
    %520 = vmatpush.msra.mxu0 %v519
    %v521 = vand.u32 %v514, 4294901760
    %522 = vmatpush.msra.mxu0 %v521
    %v523 = vand.u32 %v513, 4294901760
    %524 = vmatpush.msra.mxu0 %v523
    %v525 = vand.u32 %v512, 4294901760
    %526 = vmatpush.msra.mxu0 %v525
    %v527 = vand.u32 %v511, 4294901760
    %528 = vmatpush.msra.mxu0 %v527
    %v529 = vand.u32 %v510, 4294901760
    %530 = vmatpush.msra.mxu0 %v529
    %v531 = vand.u32 %v509, 4294901760
    %532 = vmatpush.msra.mxu0 %v531
    %v533 = vand.u32 %v508, 4294901760
    %534 = vmatpush.msra.mxu0 %v533
    %v535 = vand.u32 %v507, 4294901760
    %536 = vmatpush.msra.mxu0 %v535
    %v537 = vand.u32 %v506, 4294901760
    %538 = vmatpush.msra.mxu0 %v537
    %v539 = vand.u32 %v505, 4294901760
    %540 = vmatpush.msra.mxu0 %v539
    %v541 = vand.u32 %v504, 4294901760
    %542 = vmatpush.msra.mxu0 %v541
    %v543 = vand.u32 %v503, 4294901760
    %544 = vmatpush.msra.mxu0 %v543
    %v545 = vand.u32 %v502, 4294901760
    %546 = vmatpush.msra.mxu0 %v545
    %v547 = vand.u32 %v501, 4294901760
    %548 = vmatpush.msra.mxu0 %v547
    %v549 = vand.u32 %v488, 4294901760
    %v550 = vsub.f32 %v488, %v549
    %v551 = vand.u32 %v550, 4294901760
    %v552 = vsub.f32 %v550, %v551
    %v553 = vand.u32 %v552, 4294901760
    %554 = vmatmul.f32.gmra.mxu0 %v553
    %v555 = vpop.f32.mrf.mxu0
    %v556 = vadd.f32 0.0, %v555
    %v557 = vand.u32 %v489, 4294901760
    %v558 = vsub.f32 %v489, %v557
    %v559 = vand.u32 %v558, 4294901760
    %v560 = vsub.f32 %v558, %v559
    %v561 = vand.u32 %v560, 4294901760
    %562 = vmatmul.f32.gmra.mxu0 %v561
    %v563 = vpop.f32.mrf.mxu0
    %v564 = vadd.f32 0.0, %v563
    %v565 = vand.u32 %v490, 4294901760
    %v566 = vsub.f32 %v490, %v565
    %v567 = vand.u32 %v566, 4294901760
    %v568 = vsub.f32 %v566, %v567
    %v569 = vand.u32 %v568, 4294901760
    %570 = vmatmul.f32.gmra.mxu0 %v569
    %v571 = vpop.f32.mrf.mxu0
    %v572 = vadd.f32 0.0, %v571
    %v573 = vand.u32 %v491, 4294901760
    %v574 = vsub.f32 %v491, %v573
    %v575 = vand.u32 %v574, 4294901760
    %v576 = vsub.f32 %v574, %v575
    %v577 = vand.u32 %v576, 4294901760
    %578 = vmatmul.f32.gmra.mxu0 %v577
    %v579 = vpop.f32.mrf.mxu0
    %v580 = vadd.f32 0.0, %v579
    %v581 = vand.u32 %v492, 4294901760
    %v582 = vsub.f32 %v492, %v581
    %v583 = vand.u32 %v582, 4294901760
    %v584 = vsub.f32 %v582, %v583
    %v585 = vand.u32 %v584, 4294901760
    %586 = vmatmul.f32.gmra.mxu0 %v585
    %v587 = vpop.f32.mrf.mxu0
    %v588 = vadd.f32 0.0, %v587
    %v589 = vand.u32 %v493, 4294901760
    %v590 = vsub.f32 %v493, %v589
    %v591 = vand.u32 %v590, 4294901760
    %v592 = vsub.f32 %v590, %v591
    %v593 = vand.u32 %v592, 4294901760
    %594 = vmatmul.f32.gmra.mxu0 %v593
    %v595 = vpop.f32.mrf.mxu0
    %v596 = vadd.f32 0.0, %v595
    %v597 = vand.u32 %v494, 4294901760
    %v598 = vsub.f32 %v494, %v597
    %v599 = vand.u32 %v598, 4294901760
    %v600 = vsub.f32 %v598, %v599
    %v601 = vand.u32 %v600, 4294901760
    %602 = vmatmul.f32.gmra.mxu0 %v601
    %v603 = vpop.f32.mrf.mxu0
    %v604 = vadd.f32 0.0, %v603
    %v605 = vand.u32 %v495, 4294901760
    %v606 = vsub.f32 %v495, %v605
    %v607 = vand.u32 %v606, 4294901760
    %v608 = vsub.f32 %v606, %v607
    %v609 = vand.u32 %v608, 4294901760
    %610 = vmatmul.f32.gmra.mxu0 %v609
    %v611 = vpop.f32.mrf.mxu0
    %v612 = vadd.f32 0.0, %v611
    %v613 = vand.u32 %v496, 4294901760
    %v614 = vsub.f32 %v496, %v613
    %v615 = vand.u32 %v614, 4294901760
    %v616 = vsub.f32 %v614, %v615
    %v617 = vand.u32 %v616, 4294901760
    %618 = vmatmul.f32.gmra.mxu0 %v617
    %v619 = vpop.f32.mrf.mxu0
    %v620 = vadd.f32 0.0, %v619
    %v621 = vand.u32 %v497, 4294901760
    %v622 = vsub.f32 %v497, %v621
    %v623 = vand.u32 %v622, 4294901760
    %v624 = vsub.f32 %v622, %v623
    %v625 = vand.u32 %v624, 4294901760
    %626 = vmatmul.f32.gmra.mxu0 %v625
    %v627 = vpop.f32.mrf.mxu0
    %v628 = vadd.f32 0.0, %v627
    %v629 = vand.u32 %v498, 4294901760
    %v630 = vsub.f32 %v498, %v629
    %v631 = vand.u32 %v630, 4294901760
    %v632 = vsub.f32 %v630, %v631
    %v633 = vand.u32 %v632, 4294901760
    %634 = vmatmul.f32.gmra.mxu0 %v633
    %v635 = vpop.f32.mrf.mxu0
    %v636 = vadd.f32 0.0, %v635
    %v637 = vand.u32 %v499, 4294901760
    %v638 = vsub.f32 %v499, %v637
    %v639 = vand.u32 %v638, 4294901760
    %v640 = vsub.f32 %v638, %v639
    %v641 = vand.u32 %v640, 4294901760
    %642 = vmatmul.f32.gmra.mxu0 %v641
    %v643 = vpop.f32.mrf.mxu0
    %v644 = vadd.f32 0.0, %v643
    %645 = vdwg.mxu0
    %v646 = vand.u32 %v516, 4294901760
    %v647 = vsub.f32 %v516, %v646
    %v648 = vand.u32 %v647, 4294901760
    %v649 = vsub.f32 %v647, %v648
    %v650 = vand.u32 %v649, 4294901760
    %651 = vmatpush.msra.mxu0 %v650
    %v652 = vand.u32 %v515, 4294901760
    %v653 = vsub.f32 %v515, %v652
    %v654 = vand.u32 %v653, 4294901760
    %v655 = vsub.f32 %v653, %v654
    %v656 = vand.u32 %v655, 4294901760
    %657 = vmatpush.msra.mxu0 %v656
    %v658 = vand.u32 %v514, 4294901760
    %v659 = vsub.f32 %v514, %v658
    %v660 = vand.u32 %v659, 4294901760
    %v661 = vsub.f32 %v659, %v660
    %v662 = vand.u32 %v661, 4294901760
    %663 = vmatpush.msra.mxu0 %v662
    %v664 = vand.u32 %v513, 4294901760
    %v665 = vsub.f32 %v513, %v664
    %v666 = vand.u32 %v665, 4294901760
    %v667 = vsub.f32 %v665, %v666
    %v668 = vand.u32 %v667, 4294901760
    %669 = vmatpush.msra.mxu0 %v668
    %v670 = vand.u32 %v512, 4294901760
    %v671 = vsub.f32 %v512, %v670
    %v672 = vand.u32 %v671, 4294901760
    %v673 = vsub.f32 %v671, %v672
    %v674 = vand.u32 %v673, 4294901760
    %675 = vmatpush.msra.mxu0 %v674
    %v676 = vand.u32 %v511, 4294901760
    %v677 = vsub.f32 %v511, %v676
    %v678 = vand.u32 %v677, 4294901760
    %v679 = vsub.f32 %v677, %v678
    %v680 = vand.u32 %v679, 4294901760
    %681 = vmatpush.msra.mxu0 %v680
    %v682 = vand.u32 %v510, 4294901760
    %v683 = vsub.f32 %v510, %v682
    %v684 = vand.u32 %v683, 4294901760
    %v685 = vsub.f32 %v683, %v684
    %v686 = vand.u32 %v685, 4294901760
    %687 = vmatpush.msra.mxu0 %v686
    %v688 = vand.u32 %v509, 4294901760
    %v689 = vsub.f32 %v509, %v688
    %v690 = vand.u32 %v689, 4294901760
    %v691 = vsub.f32 %v689, %v690
    %v692 = vand.u32 %v691, 4294901760
    %693 = vmatpush.msra.mxu0 %v692
    %v694 = vand.u32 %v508, 4294901760
    %v695 = vsub.f32 %v508, %v694
    %v696 = vand.u32 %v695, 4294901760
    %v697 = vsub.f32 %v695, %v696
    %v698 = vand.u32 %v697, 4294901760
    %699 = vmatpush.msra.mxu0 %v698
    %v700 = vand.u32 %v507, 4294901760
    %v701 = vsub.f32 %v507, %v700
    %v702 = vand.u32 %v701, 4294901760
    %v703 = vsub.f32 %v701, %v702
    %v704 = vand.u32 %v703, 4294901760
    %705 = vmatpush.msra.mxu0 %v704
    %v706 = vand.u32 %v506, 4294901760
    %v707 = vsub.f32 %v506, %v706
    %v708 = vand.u32 %v707, 4294901760
    %v709 = vsub.f32 %v707, %v708
    %v710 = vand.u32 %v709, 4294901760
    %711 = vmatpush.msra.mxu0 %v710
    %v712 = vand.u32 %v505, 4294901760
    %v713 = vsub.f32 %v505, %v712
    %v714 = vand.u32 %v713, 4294901760
    %v715 = vsub.f32 %v713, %v714
    %v716 = vand.u32 %v715, 4294901760
    %717 = vmatpush.msra.mxu0 %v716
    %v718 = vand.u32 %v504, 4294901760
    %v719 = vsub.f32 %v504, %v718
    %v720 = vand.u32 %v719, 4294901760
    %v721 = vsub.f32 %v719, %v720
    %v722 = vand.u32 %v721, 4294901760
    %723 = vmatpush.msra.mxu0 %v722
    %v724 = vand.u32 %v503, 4294901760
    %v725 = vsub.f32 %v503, %v724
    %v726 = vand.u32 %v725, 4294901760
    %v727 = vsub.f32 %v725, %v726
    %v728 = vand.u32 %v727, 4294901760
    %729 = vmatpush.msra.mxu0 %v728
    %v730 = vand.u32 %v502, 4294901760
    %v731 = vsub.f32 %v502, %v730
    %v732 = vand.u32 %v731, 4294901760
    %v733 = vsub.f32 %v731, %v732
    %v734 = vand.u32 %v733, 4294901760
    %735 = vmatpush.msra.mxu0 %v734
    %v736 = vand.u32 %v501, 4294901760
    %v737 = vsub.f32 %v501, %v736
    %v738 = vand.u32 %v737, 4294901760
    %v739 = vsub.f32 %v737, %v738
    %v740 = vand.u32 %v739, 4294901760
    %741 = vmatpush.msra.mxu0 %v740
    %v742 = vand.u32 %v488, 4294901760
    %743 = vmatmul.f32.gmra.mxu0 %v742
    %v744 = vpop.f32.mrf.mxu0
    %v745 = vadd.f32 %v556, %v744
    %v746 = vand.u32 %v489, 4294901760
    %747 = vmatmul.f32.gmra.mxu0 %v746
    %v748 = vpop.f32.mrf.mxu0
    %v749 = vadd.f32 %v564, %v748
    %v750 = vand.u32 %v490, 4294901760
    %751 = vmatmul.f32.gmra.mxu0 %v750
    %v752 = vpop.f32.mrf.mxu0
    %v753 = vadd.f32 %v572, %v752
    %v754 = vand.u32 %v491, 4294901760
    %755 = vmatmul.f32.gmra.mxu0 %v754
    %v756 = vpop.f32.mrf.mxu0
    %v757 = vadd.f32 %v580, %v756
    %v758 = vand.u32 %v492, 4294901760
    %759 = vmatmul.f32.gmra.mxu0 %v758
    %v760 = vpop.f32.mrf.mxu0
    %v761 = vadd.f32 %v588, %v760
    %v762 = vand.u32 %v493, 4294901760
    %763 = vmatmul.f32.gmra.mxu0 %v762
    %v764 = vpop.f32.mrf.mxu0
    %v765 = vadd.f32 %v596, %v764
    %v766 = vand.u32 %v494, 4294901760
    %767 = vmatmul.f32.gmra.mxu0 %v766
    %v768 = vpop.f32.mrf.mxu0
    %v769 = vadd.f32 %v604, %v768
    %v770 = vand.u32 %v495, 4294901760
    %771 = vmatmul.f32.gmra.mxu0 %v770
    %v772 = vpop.f32.mrf.mxu0
    %v773 = vadd.f32 %v612, %v772
    %v774 = vand.u32 %v496, 4294901760
    %775 = vmatmul.f32.gmra.mxu0 %v774
    %v776 = vpop.f32.mrf.mxu0
    %v777 = vadd.f32 %v620, %v776
    %v778 = vand.u32 %v497, 4294901760
    %779 = vmatmul.f32.gmra.mxu0 %v778
    %v780 = vpop.f32.mrf.mxu0
    %v781 = vadd.f32 %v628, %v780
    %v782 = vand.u32 %v498, 4294901760
    %783 = vmatmul.f32.gmra.mxu0 %v782
    %v784 = vpop.f32.mrf.mxu0
    %v785 = vadd.f32 %v636, %v784
    %v786 = vand.u32 %v499, 4294901760
    %787 = vmatmul.f32.gmra.mxu0 %v786
    %v788 = vpop.f32.mrf.mxu0
    %v789 = vadd.f32 %v644, %v788
    %790 = vdwg.mxu0
    %v791 = vand.u32 %v516, 4294901760
    %v792 = vsub.f32 %v516, %v791
    %793 = vmatpush.msra.mxu0 %v792
    %v794 = vand.u32 %v515, 4294901760
    %v795 = vsub.f32 %v515, %v794
    %796 = vmatpush.msra.mxu0 %v795
    %v797 = vand.u32 %v514, 4294901760
    %v798 = vsub.f32 %v514, %v797
    %799 = vmatpush.msra.mxu0 %v798
    %v800 = vand.u32 %v513, 4294901760
    %v801 = vsub.f32 %v513, %v800
    %802 = vmatpush.msra.mxu0 %v801
    %v803 = vand.u32 %v512, 4294901760
    %v804 = vsub.f32 %v512, %v803
    %805 = vmatpush.msra.mxu0 %v804
    %v806 = vand.u32 %v511, 4294901760
    %v807 = vsub.f32 %v511, %v806
    %808 = vmatpush.msra.mxu0 %v807
    %v809 = vand.u32 %v510, 4294901760
    %v810 = vsub.f32 %v510, %v809
    %811 = vmatpush.msra.mxu0 %v810
    %v812 = vand.u32 %v509, 4294901760
    %v813 = vsub.f32 %v509, %v812
    %814 = vmatpush.msra.mxu0 %v813
    %v815 = vand.u32 %v508, 4294901760
    %v816 = vsub.f32 %v508, %v815
    %817 = vmatpush.msra.mxu0 %v816
    %v818 = vand.u32 %v507, 4294901760
    %v819 = vsub.f32 %v507, %v818
    %820 = vmatpush.msra.mxu0 %v819
    %v821 = vand.u32 %v506, 4294901760
    %v822 = vsub.f32 %v506, %v821
    %823 = vmatpush.msra.mxu0 %v822
    %v824 = vand.u32 %v505, 4294901760
    %v825 = vsub.f32 %v505, %v824
    %826 = vmatpush.msra.mxu0 %v825
    %v827 = vand.u32 %v504, 4294901760
    %v828 = vsub.f32 %v504, %v827
    %829 = vmatpush.msra.mxu0 %v828
    %v830 = vand.u32 %v503, 4294901760
    %v831 = vsub.f32 %v503, %v830
    %832 = vmatpush.msra.mxu0 %v831
    %v833 = vand.u32 %v502, 4294901760
    %v834 = vsub.f32 %v502, %v833
    %835 = vmatpush.msra.mxu0 %v834
    %v836 = vand.u32 %v501, 4294901760
    %v837 = vsub.f32 %v501, %v836
    %838 = vmatpush.msra.mxu0 %v837
    %v839 = vand.u32 %v488, 4294901760
    %v840 = vsub.f32 %v488, %v839
    %841 = vmatmul.f32.gmra.mxu0 %v840
    %v842 = vpop.f32.mrf.mxu0
    %v843 = vadd.f32 %v745, %v842
    %v844 = vand.u32 %v489, 4294901760
    %v845 = vsub.f32 %v489, %v844
    %846 = vmatmul.f32.gmra.mxu0 %v845
    %v847 = vpop.f32.mrf.mxu0
    %v848 = vadd.f32 %v749, %v847
    %v849 = vand.u32 %v490, 4294901760
    %v850 = vsub.f32 %v490, %v849
    %851 = vmatmul.f32.gmra.mxu0 %v850
    %v852 = vpop.f32.mrf.mxu0
    %v853 = vadd.f32 %v753, %v852
    %v854 = vand.u32 %v491, 4294901760
    %v855 = vsub.f32 %v491, %v854
    %856 = vmatmul.f32.gmra.mxu0 %v855
    %v857 = vpop.f32.mrf.mxu0
    %v858 = vadd.f32 %v757, %v857
    %v859 = vand.u32 %v492, 4294901760
    %v860 = vsub.f32 %v492, %v859
    %861 = vmatmul.f32.gmra.mxu0 %v860
    %v862 = vpop.f32.mrf.mxu0
    %v863 = vadd.f32 %v761, %v862
    %v864 = vand.u32 %v493, 4294901760
    %v865 = vsub.f32 %v493, %v864
    %866 = vmatmul.f32.gmra.mxu0 %v865
    %v867 = vpop.f32.mrf.mxu0
    %v868 = vadd.f32 %v765, %v867
    %v869 = vand.u32 %v494, 4294901760
    %v870 = vsub.f32 %v494, %v869
    %871 = vmatmul.f32.gmra.mxu0 %v870
    %v872 = vpop.f32.mrf.mxu0
    %v873 = vadd.f32 %v769, %v872
    %v874 = vand.u32 %v495, 4294901760
    %v875 = vsub.f32 %v495, %v874
    %876 = vmatmul.f32.gmra.mxu0 %v875
    %v877 = vpop.f32.mrf.mxu0
    %v878 = vadd.f32 %v773, %v877
    %v879 = vand.u32 %v496, 4294901760
    %v880 = vsub.f32 %v496, %v879
    %881 = vmatmul.f32.gmra.mxu0 %v880
    %v882 = vpop.f32.mrf.mxu0
    %v883 = vadd.f32 %v777, %v882
    %v884 = vand.u32 %v497, 4294901760
    %v885 = vsub.f32 %v497, %v884
    %886 = vmatmul.f32.gmra.mxu0 %v885
    %v887 = vpop.f32.mrf.mxu0
    %v888 = vadd.f32 %v781, %v887
    %v889 = vand.u32 %v498, 4294901760
    %v890 = vsub.f32 %v498, %v889
    %891 = vmatmul.f32.gmra.mxu0 %v890
    %v892 = vpop.f32.mrf.mxu0
    %v893 = vadd.f32 %v785, %v892
    %v894 = vand.u32 %v499, 4294901760
    %v895 = vsub.f32 %v499, %v894
    %896 = vmatmul.f32.gmra.mxu0 %v895
    %v897 = vpop.f32.mrf.mxu0
    %v898 = vadd.f32 %v789, %v897
    %899 = vdwg.mxu0
    %v900 = vand.u32 %v516, 4294901760
    %901 = vmatpush.msra.mxu0 %v900
    %v902 = vand.u32 %v515, 4294901760
    %903 = vmatpush.msra.mxu0 %v902
    %v904 = vand.u32 %v514, 4294901760
    %905 = vmatpush.msra.mxu0 %v904
    %v906 = vand.u32 %v513, 4294901760
    %907 = vmatpush.msra.mxu0 %v906
    %v908 = vand.u32 %v512, 4294901760
    %909 = vmatpush.msra.mxu0 %v908
    %v910 = vand.u32 %v511, 4294901760
    %911 = vmatpush.msra.mxu0 %v910
    %v912 = vand.u32 %v510, 4294901760
    %913 = vmatpush.msra.mxu0 %v912
    %v914 = vand.u32 %v509, 4294901760
    %915 = vmatpush.msra.mxu0 %v914
    %v916 = vand.u32 %v508, 4294901760
    %917 = vmatpush.msra.mxu0 %v916
    %v918 = vand.u32 %v507, 4294901760
    %919 = vmatpush.msra.mxu0 %v918
    %v920 = vand.u32 %v506, 4294901760
    %921 = vmatpush.msra.mxu0 %v920
    %v922 = vand.u32 %v505, 4294901760
    %923 = vmatpush.msra.mxu0 %v922
    %v924 = vand.u32 %v504, 4294901760
    %925 = vmatpush.msra.mxu0 %v924
    %v926 = vand.u32 %v503, 4294901760
    %927 = vmatpush.msra.mxu0 %v926
    %v928 = vand.u32 %v502, 4294901760
    %929 = vmatpush.msra.mxu0 %v928
    %v930 = vand.u32 %v501, 4294901760
    %931 = vmatpush.msra.mxu0 %v930
    %v932 = vand.u32 %v488, 4294901760
    %v933 = vsub.f32 %v488, %v932
    %v934 = vand.u32 %v933, 4294901760
    %935 = vmatmul.f32.gmra.mxu0 %v934
    %v936 = vpop.f32.mrf.mxu0
    %v937 = vadd.f32 %v843, %v936
    %v938 = vand.u32 %v489, 4294901760
    %v939 = vsub.f32 %v489, %v938
    %v940 = vand.u32 %v939, 4294901760
    %941 = vmatmul.f32.gmra.mxu0 %v940
    %v942 = vpop.f32.mrf.mxu0
    %v943 = vadd.f32 %v848, %v942
    %v944 = vand.u32 %v490, 4294901760
    %v945 = vsub.f32 %v490, %v944
    %v946 = vand.u32 %v945, 4294901760
    %947 = vmatmul.f32.gmra.mxu0 %v946
    %v948 = vpop.f32.mrf.mxu0
    %v949 = vadd.f32 %v853, %v948
    %v950 = vand.u32 %v491, 4294901760
    %v951 = vsub.f32 %v491, %v950
    %v952 = vand.u32 %v951, 4294901760
    %953 = vmatmul.f32.gmra.mxu0 %v952
    %v954 = vpop.f32.mrf.mxu0
    %v955 = vadd.f32 %v858, %v954
    %v956 = vand.u32 %v492, 4294901760
    %v957 = vsub.f32 %v492, %v956
    %v958 = vand.u32 %v957, 4294901760
    %959 = vmatmul.f32.gmra.mxu0 %v958
    %v960 = vpop.f32.mrf.mxu0
    %v961 = vadd.f32 %v863, %v960
    %v962 = vand.u32 %v493, 4294901760
    %v963 = vsub.f32 %v493, %v962
    %v964 = vand.u32 %v963, 4294901760
    %965 = vmatmul.f32.gmra.mxu0 %v964
    %v966 = vpop.f32.mrf.mxu0
    %v967 = vadd.f32 %v868, %v966
    %v968 = vand.u32 %v494, 4294901760
    %v969 = vsub.f32 %v494, %v968
    %v970 = vand.u32 %v969, 4294901760
    %971 = vmatmul.f32.gmra.mxu0 %v970
    %v972 = vpop.f32.mrf.mxu0
    %v973 = vadd.f32 %v873, %v972
    %v974 = vand.u32 %v495, 4294901760
    %v975 = vsub.f32 %v495, %v974
    %v976 = vand.u32 %v975, 4294901760
    %977 = vmatmul.f32.gmra.mxu0 %v976
    %v978 = vpop.f32.mrf.mxu0
    %v979 = vadd.f32 %v878, %v978
    %v980 = vand.u32 %v496, 4294901760
    %v981 = vsub.f32 %v496, %v980
    %v982 = vand.u32 %v981, 4294901760
    %983 = vmatmul.f32.gmra.mxu0 %v982
    %v984 = vpop.f32.mrf.mxu0
    %v985 = vadd.f32 %v883, %v984
    %v986 = vand.u32 %v497, 4294901760
    %v987 = vsub.f32 %v497, %v986
    %v988 = vand.u32 %v987, 4294901760
    %989 = vmatmul.f32.gmra.mxu0 %v988
    %v990 = vpop.f32.mrf.mxu0
    %v991 = vadd.f32 %v888, %v990
    %v992 = vand.u32 %v498, 4294901760
    %v993 = vsub.f32 %v498, %v992
    %v994 = vand.u32 %v993, 4294901760
    %995 = vmatmul.f32.gmra.mxu0 %v994
    %v996 = vpop.f32.mrf.mxu0
    %v997 = vadd.f32 %v893, %v996
    %v998 = vand.u32 %v499, 4294901760
    %v999 = vsub.f32 %v499, %v998
    %v1000 = vand.u32 %v999, 4294901760
    %1001 = vmatmul.f32.gmra.mxu0 %v1000
    %v1002 = vpop.f32.mrf.mxu0
    %v1003 = vadd.f32 %v898, %v1002
    %1004 = vdwg.mxu0
    %v1005 = vand.u32 %v516, 4294901760
    %v1006 = vsub.f32 %v516, %v1005
    %v1007 = vand.u32 %v1006, 4294901760
    %1008 = vmatpush.msra.mxu0 %v1007
    %v1009 = vand.u32 %v515, 4294901760
    %v1010 = vsub.f32 %v515, %v1009
    %v1011 = vand.u32 %v1010, 4294901760
    %1012 = vmatpush.msra.mxu0 %v1011
    %v1013 = vand.u32 %v514, 4294901760
    %v1014 = vsub.f32 %v514, %v1013
    %v1015 = vand.u32 %v1014, 4294901760
    %1016 = vmatpush.msra.mxu0 %v1015
    %v1017 = vand.u32 %v513, 4294901760
    %v1018 = vsub.f32 %v513, %v1017
    %v1019 = vand.u32 %v1018, 4294901760
    %1020 = vmatpush.msra.mxu0 %v1019
    %v1021 = vand.u32 %v512, 4294901760
    %v1022 = vsub.f32 %v512, %v1021
    %v1023 = vand.u32 %v1022, 4294901760
    %1024 = vmatpush.msra.mxu0 %v1023
    %v1025 = vand.u32 %v511, 4294901760
    %v1026 = vsub.f32 %v511, %v1025
    %v1027 = vand.u32 %v1026, 4294901760
    %1028 = vmatpush.msra.mxu0 %v1027
    %v1029 = vand.u32 %v510, 4294901760
    %v1030 = vsub.f32 %v510, %v1029
    %v1031 = vand.u32 %v1030, 4294901760
    %1032 = vmatpush.msra.mxu0 %v1031
    %v1033 = vand.u32 %v509, 4294901760
    %v1034 = vsub.f32 %v509, %v1033
    %v1035 = vand.u32 %v1034, 4294901760
    %1036 = vmatpush.msra.mxu0 %v1035
    %v1037 = vand.u32 %v508, 4294901760
    %v1038 = vsub.f32 %v508, %v1037
    %v1039 = vand.u32 %v1038, 4294901760
    %1040 = vmatpush.msra.mxu0 %v1039
    %v1041 = vand.u32 %v507, 4294901760
    %v1042 = vsub.f32 %v507, %v1041
    %v1043 = vand.u32 %v1042, 4294901760
    %1044 = vmatpush.msra.mxu0 %v1043
    %v1045 = vand.u32 %v506, 4294901760
    %v1046 = vsub.f32 %v506, %v1045
    %v1047 = vand.u32 %v1046, 4294901760
    %1048 = vmatpush.msra.mxu0 %v1047
    %v1049 = vand.u32 %v505, 4294901760
    %v1050 = vsub.f32 %v505, %v1049
    %v1051 = vand.u32 %v1050, 4294901760
    %1052 = vmatpush.msra.mxu0 %v1051
    %v1053 = vand.u32 %v504, 4294901760
    %v1054 = vsub.f32 %v504, %v1053
    %v1055 = vand.u32 %v1054, 4294901760
    %1056 = vmatpush.msra.mxu0 %v1055
    %v1057 = vand.u32 %v503, 4294901760
    %v1058 = vsub.f32 %v503, %v1057
    %v1059 = vand.u32 %v1058, 4294901760
    %1060 = vmatpush.msra.mxu0 %v1059
    %v1061 = vand.u32 %v502, 4294901760
    %v1062 = vsub.f32 %v502, %v1061
    %v1063 = vand.u32 %v1062, 4294901760
    %1064 = vmatpush.msra.mxu0 %v1063
    %v1065 = vand.u32 %v501, 4294901760
    %v1066 = vsub.f32 %v501, %v1065
    %v1067 = vand.u32 %v1066, 4294901760
    %1068 = vmatpush.msra.mxu0 %v1067
    %v1069 = vand.u32 %v488, 4294901760
    %1070 = vmatmul.f32.gmra.mxu0 %v1069
    %v1071 = vpop.f32.mrf.mxu0
    %v1072 = vadd.f32 %v937, %v1071
    %v1073 = vand.u32 %v489, 4294901760
    %1074 = vmatmul.f32.gmra.mxu0 %v1073
    %v1075 = vpop.f32.mrf.mxu0
    %v1076 = vadd.f32 %v943, %v1075
    %v1077 = vand.u32 %v490, 4294901760
    %1078 = vmatmul.f32.gmra.mxu0 %v1077
    %v1079 = vpop.f32.mrf.mxu0
    %v1080 = vadd.f32 %v949, %v1079
    %v1081 = vand.u32 %v491, 4294901760
    %1082 = vmatmul.f32.gmra.mxu0 %v1081
    %v1083 = vpop.f32.mrf.mxu0
    %v1084 = vadd.f32 %v955, %v1083
    %v1085 = vand.u32 %v492, 4294901760
    %1086 = vmatmul.f32.gmra.mxu0 %v1085
    %v1087 = vpop.f32.mrf.mxu0
    %v1088 = vadd.f32 %v961, %v1087
    %v1089 = vand.u32 %v493, 4294901760
    %1090 = vmatmul.f32.gmra.mxu0 %v1089
    %v1091 = vpop.f32.mrf.mxu0
    %v1092 = vadd.f32 %v967, %v1091
    %v1093 = vand.u32 %v494, 4294901760
    %1094 = vmatmul.f32.gmra.mxu0 %v1093
    %v1095 = vpop.f32.mrf.mxu0
    %v1096 = vadd.f32 %v973, %v1095
    %v1097 = vand.u32 %v495, 4294901760
    %1098 = vmatmul.f32.gmra.mxu0 %v1097
    %v1099 = vpop.f32.mrf.mxu0
    %v1100 = vadd.f32 %v979, %v1099
    %v1101 = vand.u32 %v496, 4294901760
    %1102 = vmatmul.f32.gmra.mxu0 %v1101
    %v1103 = vpop.f32.mrf.mxu0
    %v1104 = vadd.f32 %v985, %v1103
    %v1105 = vand.u32 %v497, 4294901760
    %1106 = vmatmul.f32.gmra.mxu0 %v1105
    %v1107 = vpop.f32.mrf.mxu0
    %v1108 = vadd.f32 %v991, %v1107
    %v1109 = vand.u32 %v498, 4294901760
    %1110 = vmatmul.f32.gmra.mxu0 %v1109
    %v1111 = vpop.f32.mrf.mxu0
    %v1112 = vadd.f32 %v997, %v1111
    %v1113 = vand.u32 %v499, 4294901760
    %1114 = vmatmul.f32.gmra.mxu0 %v1113
    %v1115 = vpop.f32.mrf.mxu0
    %v1116 = vadd.f32 %v1003, %v1115
    %1117 = vdwg.mxu0
    %v1118 = vand.u32 %v516, 4294901760
    %1119 = vmatpush.msra.mxu0 %v1118
    %v1120 = vand.u32 %v515, 4294901760
    %1121 = vmatpush.msra.mxu0 %v1120
    %v1122 = vand.u32 %v514, 4294901760
    %1123 = vmatpush.msra.mxu0 %v1122
    %v1124 = vand.u32 %v513, 4294901760
    %1125 = vmatpush.msra.mxu0 %v1124
    %v1126 = vand.u32 %v512, 4294901760
    %1127 = vmatpush.msra.mxu0 %v1126
    %v1128 = vand.u32 %v511, 4294901760
    %1129 = vmatpush.msra.mxu0 %v1128
    %v1130 = vand.u32 %v510, 4294901760
    %1131 = vmatpush.msra.mxu0 %v1130
    %v1132 = vand.u32 %v509, 4294901760
    %1133 = vmatpush.msra.mxu0 %v1132
    %v1134 = vand.u32 %v508, 4294901760
    %1135 = vmatpush.msra.mxu0 %v1134
    %v1136 = vand.u32 %v507, 4294901760
    %1137 = vmatpush.msra.mxu0 %v1136
    %v1138 = vand.u32 %v506, 4294901760
    %1139 = vmatpush.msra.mxu0 %v1138
    %v1140 = vand.u32 %v505, 4294901760
    %1141 = vmatpush.msra.mxu0 %v1140
    %v1142 = vand.u32 %v504, 4294901760
    %1143 = vmatpush.msra.mxu0 %v1142
    %v1144 = vand.u32 %v503, 4294901760
    %1145 = vmatpush.msra.mxu0 %v1144
    %v1146 = vand.u32 %v502, 4294901760
    %1147 = vmatpush.msra.mxu0 %v1146
    %v1148 = vand.u32 %v501, 4294901760
    %1149 = vmatpush.msra.mxu0 %v1148
    %v1150 = vand.u32 %v488, 4294901760
    %1151 = vmatmul.f32.gmra.mxu0 %v1150
    %v1152 = vpop.f32.mrf.mxu0
    %v1153 = vadd.f32 %v1072, %v1152
    %v1154 = vand.u32 %v489, 4294901760
    %1155 = vmatmul.f32.gmra.mxu0 %v1154
    %v1156 = vpop.f32.mrf.mxu0
    %v1157 = vadd.f32 %v1076, %v1156
    %v1158 = vand.u32 %v490, 4294901760
    %1159 = vmatmul.f32.gmra.mxu0 %v1158
    %v1160 = vpop.f32.mrf.mxu0
    %v1161 = vadd.f32 %v1080, %v1160
    %v1162 = vand.u32 %v491, 4294901760
    %1163 = vmatmul.f32.gmra.mxu0 %v1162
    %v1164 = vpop.f32.mrf.mxu0
    %v1165 = vadd.f32 %v1084, %v1164
    %v1166 = vand.u32 %v492, 4294901760
    %1167 = vmatmul.f32.gmra.mxu0 %v1166
    %v1168 = vpop.f32.mrf.mxu0
    %v1169 = vadd.f32 %v1088, %v1168
    %v1170 = vand.u32 %v493, 4294901760
    %1171 = vmatmul.f32.gmra.mxu0 %v1170
    %v1172 = vpop.f32.mrf.mxu0
    %v1173 = vadd.f32 %v1092, %v1172
    %v1174 = vand.u32 %v494, 4294901760
    %1175 = vmatmul.f32.gmra.mxu0 %v1174
    %v1176 = vpop.f32.mrf.mxu0
    %v1177 = vadd.f32 %v1096, %v1176
    %v1178 = vand.u32 %v495, 4294901760
    %1179 = vmatmul.f32.gmra.mxu0 %v1178
    %v1180 = vpop.f32.mrf.mxu0
    %v1181 = vadd.f32 %v1100, %v1180
    %v1182 = vand.u32 %v496, 4294901760
    %1183 = vmatmul.f32.gmra.mxu0 %v1182
    %v1184 = vpop.f32.mrf.mxu0
    %v1185 = vadd.f32 %v1104, %v1184
    %v1186 = vand.u32 %v497, 4294901760
    %1187 = vmatmul.f32.gmra.mxu0 %v1186
    %v1188 = vpop.f32.mrf.mxu0
    %v1189 = vadd.f32 %v1108, %v1188
    %v1190 = vand.u32 %v498, 4294901760
    %1191 = vmatmul.f32.gmra.mxu0 %v1190
    %v1192 = vpop.f32.mrf.mxu0
    %v1193 = vadd.f32 %v1112, %v1192
    %v1194 = vand.u32 %v499, 4294901760
    %1195 = vmatmul.f32.gmra.mxu0 %v1194
    %v1196 = vpop.f32.mrf.mxu0
    %v1197 = vadd.f32 %v1116, %v1196
    %1198 = vdwg.mxu0
    %v1199 = vand.u32 %v426, 4294901760
    %1200 = vmatpush.msra.mxu0 %v1199
    %v1201 = vand.u32 %v425, 4294901760
    %1202 = vmatpush.msra.mxu0 %v1201
    %v1203 = vand.u32 %v424, 4294901760
    %1204 = vmatpush.msra.mxu0 %v1203
    %v1205 = vand.u32 %v423, 4294901760
    %1206 = vmatpush.msra.mxu0 %v1205
    %v1207 = vand.u32 %v422, 4294901760
    %1208 = vmatpush.msra.mxu0 %v1207
    %v1209 = vand.u32 %v421, 4294901760
    %1210 = vmatpush.msra.mxu0 %v1209
    %v1211 = vand.u32 %v420, 4294901760
    %1212 = vmatpush.msra.mxu0 %v1211
    %v1213 = vand.u32 %v419, 4294901760
    %1214 = vmatpush.msra.mxu0 %v1213
    %v1215 = vand.u32 %v418, 4294901760
    %1216 = vmatpush.msra.mxu0 %v1215
    %v1217 = vand.u32 %v417, 4294901760
    %1218 = vmatpush.msra.mxu0 %v1217
    %v1219 = vand.u32 %v416, 4294901760
    %1220 = vmatpush.msra.mxu0 %v1219
    %v1221 = vand.u32 %v415, 4294901760
    %1222 = vmatpush.msra.mxu0 %v1221
    %v1223 = vand.u32 %v414, 4294901760
    %1224 = vmatpush.msra.mxu0 %v1223
    %v1225 = vand.u32 %v413, 4294901760
    %1226 = vmatpush.msra.mxu0 %v1225
    %v1227 = vand.u32 %v412, 4294901760
    %1228 = vmatpush.msra.mxu0 %v1227
    %v1229 = vand.u32 %v411, 4294901760
    %1230 = vmatpush.msra.mxu0 %v1229
    %v1231 = vand.u32 %v399, 4294901760
    %v1232 = vsub.f32 %v399, %v1231
    %v1233 = vand.u32 %v1232, 4294901760
    %v1234 = vsub.f32 %v1232, %v1233
    %v1235 = vand.u32 %v1234, 4294901760
    %1236 = vmatmul.f32.gmra.mxu0 %v1235
    %v1237 = vpop.f32.mrf.mxu0
    %v1238 = vadd.f32 %v1153, %v1237
    %v1239 = vand.u32 %v400, 4294901760
    %v1240 = vsub.f32 %v400, %v1239
    %v1241 = vand.u32 %v1240, 4294901760
    %v1242 = vsub.f32 %v1240, %v1241
    %v1243 = vand.u32 %v1242, 4294901760
    %1244 = vmatmul.f32.gmra.mxu0 %v1243
    %v1245 = vpop.f32.mrf.mxu0
    %v1246 = vadd.f32 %v1157, %v1245
    %v1247 = vand.u32 %v401, 4294901760
    %v1248 = vsub.f32 %v401, %v1247
    %v1249 = vand.u32 %v1248, 4294901760
    %v1250 = vsub.f32 %v1248, %v1249
    %v1251 = vand.u32 %v1250, 4294901760
    %1252 = vmatmul.f32.gmra.mxu0 %v1251
    %v1253 = vpop.f32.mrf.mxu0
    %v1254 = vadd.f32 %v1161, %v1253
    %v1255 = vand.u32 %v402, 4294901760
    %v1256 = vsub.f32 %v402, %v1255
    %v1257 = vand.u32 %v1256, 4294901760
    %v1258 = vsub.f32 %v1256, %v1257
    %v1259 = vand.u32 %v1258, 4294901760
    %1260 = vmatmul.f32.gmra.mxu0 %v1259
    %v1261 = vpop.f32.mrf.mxu0
    %v1262 = vadd.f32 %v1165, %v1261
    %v1263 = vand.u32 %v403, 4294901760
    %v1264 = vsub.f32 %v403, %v1263
    %v1265 = vand.u32 %v1264, 4294901760
    %v1266 = vsub.f32 %v1264, %v1265
    %v1267 = vand.u32 %v1266, 4294901760
    %1268 = vmatmul.f32.gmra.mxu0 %v1267
    %v1269 = vpop.f32.mrf.mxu0
    %v1270 = vadd.f32 %v1169, %v1269
    %v1271 = vand.u32 %v404, 4294901760
    %v1272 = vsub.f32 %v404, %v1271
    %v1273 = vand.u32 %v1272, 4294901760
    %v1274 = vsub.f32 %v1272, %v1273
    %v1275 = vand.u32 %v1274, 4294901760
    %1276 = vmatmul.f32.gmra.mxu0 %v1275
    %v1277 = vpop.f32.mrf.mxu0
    %v1278 = vadd.f32 %v1173, %v1277
    %v1279 = vand.u32 %v405, 4294901760
    %v1280 = vsub.f32 %v405, %v1279
    %v1281 = vand.u32 %v1280, 4294901760
    %v1282 = vsub.f32 %v1280, %v1281
    %v1283 = vand.u32 %v1282, 4294901760
    %1284 = vmatmul.f32.gmra.mxu0 %v1283
    %v1285 = vpop.f32.mrf.mxu0
    %v1286 = vadd.f32 %v1177, %v1285
    %v1287 = vand.u32 %v406, 4294901760
    %v1288 = vsub.f32 %v406, %v1287
    %v1289 = vand.u32 %v1288, 4294901760
    %v1290 = vsub.f32 %v1288, %v1289
    %v1291 = vand.u32 %v1290, 4294901760
    %1292 = vmatmul.f32.gmra.mxu0 %v1291
    %v1293 = vpop.f32.mrf.mxu0
    %v1294 = vadd.f32 %v1181, %v1293
    %v1295 = vand.u32 %v407, 4294901760
    %v1296 = vsub.f32 %v407, %v1295
    %v1297 = vand.u32 %v1296, 4294901760
    %v1298 = vsub.f32 %v1296, %v1297
    %v1299 = vand.u32 %v1298, 4294901760
    %1300 = vmatmul.f32.gmra.mxu0 %v1299
    %v1301 = vpop.f32.mrf.mxu0
    %v1302 = vadd.f32 %v1185, %v1301
    %v1303 = vand.u32 %v408, 4294901760
    %v1304 = vsub.f32 %v408, %v1303
    %v1305 = vand.u32 %v1304, 4294901760
    %v1306 = vsub.f32 %v1304, %v1305
    %v1307 = vand.u32 %v1306, 4294901760
    %1308 = vmatmul.f32.gmra.mxu0 %v1307
    %v1309 = vpop.f32.mrf.mxu0
    %v1310 = vadd.f32 %v1189, %v1309
    %v1311 = vand.u32 %v409, 4294901760
    %v1312 = vsub.f32 %v409, %v1311
    %v1313 = vand.u32 %v1312, 4294901760
    %v1314 = vsub.f32 %v1312, %v1313
    %v1315 = vand.u32 %v1314, 4294901760
    %1316 = vmatmul.f32.gmra.mxu0 %v1315
    %v1317 = vpop.f32.mrf.mxu0
    %v1318 = vadd.f32 %v1193, %v1317
    %v1319 = vand.u32 %v410, 4294901760
    %v1320 = vsub.f32 %v410, %v1319
    %v1321 = vand.u32 %v1320, 4294901760
    %v1322 = vsub.f32 %v1320, %v1321
    %v1323 = vand.u32 %v1322, 4294901760
    %1324 = vmatmul.f32.gmra.mxu0 %v1323
    %v1325 = vpop.f32.mrf.mxu0
    %v1326 = vadd.f32 %v1197, %v1325
    %1327 = vdwg.mxu0
    %v1328 = vand.u32 %v426, 4294901760
    %v1329 = vsub.f32 %v426, %v1328
    %v1330 = vand.u32 %v1329, 4294901760
    %v1331 = vsub.f32 %v1329, %v1330
    %v1332 = vand.u32 %v1331, 4294901760
    %1333 = vmatpush.msra.mxu0 %v1332
    %v1334 = vand.u32 %v425, 4294901760
    %v1335 = vsub.f32 %v425, %v1334
    %v1336 = vand.u32 %v1335, 4294901760
    %v1337 = vsub.f32 %v1335, %v1336
    %v1338 = vand.u32 %v1337, 4294901760
    %1339 = vmatpush.msra.mxu0 %v1338
    %v1340 = vand.u32 %v424, 4294901760
    %v1341 = vsub.f32 %v424, %v1340
    %v1342 = vand.u32 %v1341, 4294901760
    %v1343 = vsub.f32 %v1341, %v1342
    %v1344 = vand.u32 %v1343, 4294901760
    %1345 = vmatpush.msra.mxu0 %v1344
    %v1346 = vand.u32 %v423, 4294901760
    %v1347 = vsub.f32 %v423, %v1346
    %v1348 = vand.u32 %v1347, 4294901760
    %v1349 = vsub.f32 %v1347, %v1348
    %v1350 = vand.u32 %v1349, 4294901760
    %1351 = vmatpush.msra.mxu0 %v1350
    %v1352 = vand.u32 %v422, 4294901760
    %v1353 = vsub.f32 %v422, %v1352
    %v1354 = vand.u32 %v1353, 4294901760
    %v1355 = vsub.f32 %v1353, %v1354
    %v1356 = vand.u32 %v1355, 4294901760
    %1357 = vmatpush.msra.mxu0 %v1356
    %v1358 = vand.u32 %v421, 4294901760
    %v1359 = vsub.f32 %v421, %v1358
    %v1360 = vand.u32 %v1359, 4294901760
    %v1361 = vsub.f32 %v1359, %v1360
    %v1362 = vand.u32 %v1361, 4294901760
    %1363 = vmatpush.msra.mxu0 %v1362
    %v1364 = vand.u32 %v420, 4294901760
    %v1365 = vsub.f32 %v420, %v1364
    %v1366 = vand.u32 %v1365, 4294901760
    %v1367 = vsub.f32 %v1365, %v1366
    %v1368 = vand.u32 %v1367, 4294901760
    %1369 = vmatpush.msra.mxu0 %v1368
    %v1370 = vand.u32 %v419, 4294901760
    %v1371 = vsub.f32 %v419, %v1370
    %v1372 = vand.u32 %v1371, 4294901760
    %v1373 = vsub.f32 %v1371, %v1372
    %v1374 = vand.u32 %v1373, 4294901760
    %1375 = vmatpush.msra.mxu0 %v1374
    %v1376 = vand.u32 %v418, 4294901760
    %v1377 = vsub.f32 %v418, %v1376
    %v1378 = vand.u32 %v1377, 4294901760
    %v1379 = vsub.f32 %v1377, %v1378
    %v1380 = vand.u32 %v1379, 4294901760
    %1381 = vmatpush.msra.mxu0 %v1380
    %v1382 = vand.u32 %v417, 4294901760
    %v1383 = vsub.f32 %v417, %v1382
    %v1384 = vand.u32 %v1383, 4294901760
    %v1385 = vsub.f32 %v1383, %v1384
    %v1386 = vand.u32 %v1385, 4294901760
    %1387 = vmatpush.msra.mxu0 %v1386
    %v1388 = vand.u32 %v416, 4294901760
    %v1389 = vsub.f32 %v416, %v1388
    %v1390 = vand.u32 %v1389, 4294901760
    %v1391 = vsub.f32 %v1389, %v1390
    %v1392 = vand.u32 %v1391, 4294901760
    %1393 = vmatpush.msra.mxu0 %v1392
    %v1394 = vand.u32 %v415, 4294901760
    %v1395 = vsub.f32 %v415, %v1394
    %v1396 = vand.u32 %v1395, 4294901760
    %v1397 = vsub.f32 %v1395, %v1396
    %v1398 = vand.u32 %v1397, 4294901760
    %1399 = vmatpush.msra.mxu0 %v1398
    %v1400 = vand.u32 %v414, 4294901760
    %v1401 = vsub.f32 %v414, %v1400
    %v1402 = vand.u32 %v1401, 4294901760
    %v1403 = vsub.f32 %v1401, %v1402
    %v1404 = vand.u32 %v1403, 4294901760
    %1405 = vmatpush.msra.mxu0 %v1404
    %v1406 = vand.u32 %v413, 4294901760
    %v1407 = vsub.f32 %v413, %v1406
    %v1408 = vand.u32 %v1407, 4294901760
    %v1409 = vsub.f32 %v1407, %v1408
    %v1410 = vand.u32 %v1409, 4294901760
    %1411 = vmatpush.msra.mxu0 %v1410
    %v1412 = vand.u32 %v412, 4294901760
    %v1413 = vsub.f32 %v412, %v1412
    %v1414 = vand.u32 %v1413, 4294901760
    %v1415 = vsub.f32 %v1413, %v1414
    %v1416 = vand.u32 %v1415, 4294901760
    %1417 = vmatpush.msra.mxu0 %v1416
    %v1418 = vand.u32 %v411, 4294901760
    %v1419 = vsub.f32 %v411, %v1418
    %v1420 = vand.u32 %v1419, 4294901760
    %v1421 = vsub.f32 %v1419, %v1420
    %v1422 = vand.u32 %v1421, 4294901760
    %1423 = vmatpush.msra.mxu0 %v1422
    %v1424 = vand.u32 %v399, 4294901760
    %1425 = vmatmul.f32.gmra.mxu0 %v1424
    %v1426 = vpop.f32.mrf.mxu0
    %v1427 = vadd.f32 %v1238, %v1426
    %v1428 = vand.u32 %v400, 4294901760
    %1429 = vmatmul.f32.gmra.mxu0 %v1428
    %v1430 = vpop.f32.mrf.mxu0
    %v1431 = vadd.f32 %v1246, %v1430
    %v1432 = vand.u32 %v401, 4294901760
    %1433 = vmatmul.f32.gmra.mxu0 %v1432
    %v1434 = vpop.f32.mrf.mxu0
    %v1435 = vadd.f32 %v1254, %v1434
    %v1436 = vand.u32 %v402, 4294901760
    %1437 = vmatmul.f32.gmra.mxu0 %v1436
    %v1438 = vpop.f32.mrf.mxu0
    %v1439 = vadd.f32 %v1262, %v1438
    %v1440 = vand.u32 %v403, 4294901760
    %1441 = vmatmul.f32.gmra.mxu0 %v1440
    %v1442 = vpop.f32.mrf.mxu0
    %v1443 = vadd.f32 %v1270, %v1442
    %v1444 = vand.u32 %v404, 4294901760
    %1445 = vmatmul.f32.gmra.mxu0 %v1444
    %v1446 = vpop.f32.mrf.mxu0
    %v1447 = vadd.f32 %v1278, %v1446
    %v1448 = vand.u32 %v405, 4294901760
    %1449 = vmatmul.f32.gmra.mxu0 %v1448
    %v1450 = vpop.f32.mrf.mxu0
    %v1451 = vadd.f32 %v1286, %v1450
    %v1452 = vand.u32 %v406, 4294901760
    %1453 = vmatmul.f32.gmra.mxu0 %v1452
    %v1454 = vpop.f32.mrf.mxu0
    %v1455 = vadd.f32 %v1294, %v1454
    %v1456 = vand.u32 %v407, 4294901760
    %1457 = vmatmul.f32.gmra.mxu0 %v1456
    %v1458 = vpop.f32.mrf.mxu0
    %v1459 = vadd.f32 %v1302, %v1458
    %v1460 = vand.u32 %v408, 4294901760
    %1461 = vmatmul.f32.gmra.mxu0 %v1460
    %v1462 = vpop.f32.mrf.mxu0
    %v1463 = vadd.f32 %v1310, %v1462
    %v1464 = vand.u32 %v409, 4294901760
    %1465 = vmatmul.f32.gmra.mxu0 %v1464
    %v1466 = vpop.f32.mrf.mxu0
    %v1467 = vadd.f32 %v1318, %v1466
    %v1468 = vand.u32 %v410, 4294901760
    %1469 = vmatmul.f32.gmra.mxu0 %v1468
    %v1470 = vpop.f32.mrf.mxu0
    %v1471 = vadd.f32 %v1326, %v1470
    %1472 = vdwg.mxu0
    %v1473 = vand.u32 %v426, 4294901760
    %v1474 = vsub.f32 %v426, %v1473
    %1475 = vmatpush.msra.mxu0 %v1474
    %v1476 = vand.u32 %v425, 4294901760
    %v1477 = vsub.f32 %v425, %v1476
    %1478 = vmatpush.msra.mxu0 %v1477
    %v1479 = vand.u32 %v424, 4294901760
    %v1480 = vsub.f32 %v424, %v1479
    %1481 = vmatpush.msra.mxu0 %v1480
    %v1482 = vand.u32 %v423, 4294901760
    %v1483 = vsub.f32 %v423, %v1482
    %1484 = vmatpush.msra.mxu0 %v1483
    %v1485 = vand.u32 %v422, 4294901760
    %v1486 = vsub.f32 %v422, %v1485
    %1487 = vmatpush.msra.mxu0 %v1486
    %v1488 = vand.u32 %v421, 4294901760
    %v1489 = vsub.f32 %v421, %v1488
    %1490 = vmatpush.msra.mxu0 %v1489
    %v1491 = vand.u32 %v420, 4294901760
    %v1492 = vsub.f32 %v420, %v1491
    %1493 = vmatpush.msra.mxu0 %v1492
    %v1494 = vand.u32 %v419, 4294901760
    %v1495 = vsub.f32 %v419, %v1494
    %1496 = vmatpush.msra.mxu0 %v1495
    %v1497 = vand.u32 %v418, 4294901760
    %v1498 = vsub.f32 %v418, %v1497
    %1499 = vmatpush.msra.mxu0 %v1498
    %v1500 = vand.u32 %v417, 4294901760
    %v1501 = vsub.f32 %v417, %v1500
    %1502 = vmatpush.msra.mxu0 %v1501
    %v1503 = vand.u32 %v416, 4294901760
    %v1504 = vsub.f32 %v416, %v1503
    %1505 = vmatpush.msra.mxu0 %v1504
    %v1506 = vand.u32 %v415, 4294901760
    %v1507 = vsub.f32 %v415, %v1506
    %1508 = vmatpush.msra.mxu0 %v1507
    %v1509 = vand.u32 %v414, 4294901760
    %v1510 = vsub.f32 %v414, %v1509
    %1511 = vmatpush.msra.mxu0 %v1510
    %v1512 = vand.u32 %v413, 4294901760
    %v1513 = vsub.f32 %v413, %v1512
    %1514 = vmatpush.msra.mxu0 %v1513
    %v1515 = vand.u32 %v412, 4294901760
    %v1516 = vsub.f32 %v412, %v1515
    %1517 = vmatpush.msra.mxu0 %v1516
    %v1518 = vand.u32 %v411, 4294901760
    %v1519 = vsub.f32 %v411, %v1518
    %1520 = vmatpush.msra.mxu0 %v1519
    %v1521 = vand.u32 %v399, 4294901760
    %v1522 = vsub.f32 %v399, %v1521
    %1523 = vmatmul.f32.gmra.mxu0 %v1522
    %v1524 = vpop.f32.mrf.mxu0
    %v1525 = vadd.f32 %v1427, %v1524
    %v1526 = vand.u32 %v400, 4294901760
    %v1527 = vsub.f32 %v400, %v1526
    %1528 = vmatmul.f32.gmra.mxu0 %v1527
    %v1529 = vpop.f32.mrf.mxu0
    %v1530 = vadd.f32 %v1431, %v1529
    %v1531 = vand.u32 %v401, 4294901760
    %v1532 = vsub.f32 %v401, %v1531
    %1533 = vmatmul.f32.gmra.mxu0 %v1532
    %v1534 = vpop.f32.mrf.mxu0
    %v1535 = vadd.f32 %v1435, %v1534
    %v1536 = vand.u32 %v402, 4294901760
    %v1537 = vsub.f32 %v402, %v1536
    %1538 = vmatmul.f32.gmra.mxu0 %v1537
    %v1539 = vpop.f32.mrf.mxu0
    %v1540 = vadd.f32 %v1439, %v1539
    %v1541 = vand.u32 %v403, 4294901760
    %v1542 = vsub.f32 %v403, %v1541
    %1543 = vmatmul.f32.gmra.mxu0 %v1542
    %v1544 = vpop.f32.mrf.mxu0
    %v1545 = vadd.f32 %v1443, %v1544
    %v1546 = vand.u32 %v404, 4294901760
    %v1547 = vsub.f32 %v404, %v1546
    %1548 = vmatmul.f32.gmra.mxu0 %v1547
    %v1549 = vpop.f32.mrf.mxu0
    %v1550 = vadd.f32 %v1447, %v1549
    %v1551 = vand.u32 %v405, 4294901760
    %v1552 = vsub.f32 %v405, %v1551
    %1553 = vmatmul.f32.gmra.mxu0 %v1552
    %v1554 = vpop.f32.mrf.mxu0
    %v1555 = vadd.f32 %v1451, %v1554
    %v1556 = vand.u32 %v406, 4294901760
    %v1557 = vsub.f32 %v406, %v1556
    %1558 = vmatmul.f32.gmra.mxu0 %v1557
    %v1559 = vpop.f32.mrf.mxu0
    %v1560 = vadd.f32 %v1455, %v1559
    %v1561 = vand.u32 %v407, 4294901760
    %v1562 = vsub.f32 %v407, %v1561
    %1563 = vmatmul.f32.gmra.mxu0 %v1562
    %v1564 = vpop.f32.mrf.mxu0
    %v1565 = vadd.f32 %v1459, %v1564
    %v1566 = vand.u32 %v408, 4294901760
    %v1567 = vsub.f32 %v408, %v1566
    %1568 = vmatmul.f32.gmra.mxu0 %v1567
    %v1569 = vpop.f32.mrf.mxu0
    %v1570 = vadd.f32 %v1463, %v1569
    %v1571 = vand.u32 %v409, 4294901760
    %v1572 = vsub.f32 %v409, %v1571
    %1573 = vmatmul.f32.gmra.mxu0 %v1572
    %v1574 = vpop.f32.mrf.mxu0
    %v1575 = vadd.f32 %v1467, %v1574
    %v1576 = vand.u32 %v410, 4294901760
    %v1577 = vsub.f32 %v410, %v1576
    %1578 = vmatmul.f32.gmra.mxu0 %v1577
    %v1579 = vpop.f32.mrf.mxu0
    %v1580 = vadd.f32 %v1471, %v1579
    %1581 = vdwg.mxu0
    %v1582 = vand.u32 %v426, 4294901760
    %1583 = vmatpush.msra.mxu0 %v1582
    %v1584 = vand.u32 %v425, 4294901760
    %1585 = vmatpush.msra.mxu0 %v1584
    %v1586 = vand.u32 %v424, 4294901760
    %1587 = vmatpush.msra.mxu0 %v1586
    %v1588 = vand.u32 %v423, 4294901760
    %1589 = vmatpush.msra.mxu0 %v1588
    %v1590 = vand.u32 %v422, 4294901760
    %1591 = vmatpush.msra.mxu0 %v1590
    %v1592 = vand.u32 %v421, 4294901760
    %1593 = vmatpush.msra.mxu0 %v1592
    %v1594 = vand.u32 %v420, 4294901760
    %1595 = vmatpush.msra.mxu0 %v1594
    %v1596 = vand.u32 %v419, 4294901760
    %1597 = vmatpush.msra.mxu0 %v1596
    %v1598 = vand.u32 %v418, 4294901760
    %1599 = vmatpush.msra.mxu0 %v1598
    %v1600 = vand.u32 %v417, 4294901760
    %1601 = vmatpush.msra.mxu0 %v1600
    %v1602 = vand.u32 %v416, 4294901760
    %1603 = vmatpush.msra.mxu0 %v1602
    %v1604 = vand.u32 %v415, 4294901760
    %1605 = vmatpush.msra.mxu0 %v1604
    %v1606 = vand.u32 %v414, 4294901760
    %1607 = vmatpush.msra.mxu0 %v1606
    %v1608 = vand.u32 %v413, 4294901760
    %1609 = vmatpush.msra.mxu0 %v1608
    %v1610 = vand.u32 %v412, 4294901760
    %1611 = vmatpush.msra.mxu0 %v1610
    %v1612 = vand.u32 %v411, 4294901760
    %1613 = vmatpush.msra.mxu0 %v1612
    %v1614 = vand.u32 %v399, 4294901760
    %v1615 = vsub.f32 %v399, %v1614
    %v1616 = vand.u32 %v1615, 4294901760
    %1617 = vmatmul.f32.gmra.mxu0 %v1616
    %v1618 = vpop.f32.mrf.mxu0
    %v1619 = vadd.f32 %v1525, %v1618
    %v1620 = vand.u32 %v400, 4294901760
    %v1621 = vsub.f32 %v400, %v1620
    %v1622 = vand.u32 %v1621, 4294901760
    %1623 = vmatmul.f32.gmra.mxu0 %v1622
    %v1624 = vpop.f32.mrf.mxu0
    %v1625 = vadd.f32 %v1530, %v1624
    %v1626 = vand.u32 %v401, 4294901760
    %v1627 = vsub.f32 %v401, %v1626
    %v1628 = vand.u32 %v1627, 4294901760
    %1629 = vmatmul.f32.gmra.mxu0 %v1628
    %v1630 = vpop.f32.mrf.mxu0
    %v1631 = vadd.f32 %v1535, %v1630
    %v1632 = vand.u32 %v402, 4294901760
    %v1633 = vsub.f32 %v402, %v1632
    %v1634 = vand.u32 %v1633, 4294901760
    %1635 = vmatmul.f32.gmra.mxu0 %v1634
    %v1636 = vpop.f32.mrf.mxu0
    %v1637 = vadd.f32 %v1540, %v1636
    %v1638 = vand.u32 %v403, 4294901760
    %v1639 = vsub.f32 %v403, %v1638
    %v1640 = vand.u32 %v1639, 4294901760
    %1641 = vmatmul.f32.gmra.mxu0 %v1640
    %v1642 = vpop.f32.mrf.mxu0
    %v1643 = vadd.f32 %v1545, %v1642
    %v1644 = vand.u32 %v404, 4294901760
    %v1645 = vsub.f32 %v404, %v1644
    %v1646 = vand.u32 %v1645, 4294901760
    %1647 = vmatmul.f32.gmra.mxu0 %v1646
    %v1648 = vpop.f32.mrf.mxu0
    %v1649 = vadd.f32 %v1550, %v1648
    %v1650 = vand.u32 %v405, 4294901760
    %v1651 = vsub.f32 %v405, %v1650
    %v1652 = vand.u32 %v1651, 4294901760
    %1653 = vmatmul.f32.gmra.mxu0 %v1652
    %v1654 = vpop.f32.mrf.mxu0
    %v1655 = vadd.f32 %v1555, %v1654
    %v1656 = vand.u32 %v406, 4294901760
    %v1657 = vsub.f32 %v406, %v1656
    %v1658 = vand.u32 %v1657, 4294901760
    %1659 = vmatmul.f32.gmra.mxu0 %v1658
    %v1660 = vpop.f32.mrf.mxu0
    %v1661 = vadd.f32 %v1560, %v1660
    %v1662 = vand.u32 %v407, 4294901760
    %v1663 = vsub.f32 %v407, %v1662
    %v1664 = vand.u32 %v1663, 4294901760
    %1665 = vmatmul.f32.gmra.mxu0 %v1664
    %v1666 = vpop.f32.mrf.mxu0
    %v1667 = vadd.f32 %v1565, %v1666
    %v1668 = vand.u32 %v408, 4294901760
    %v1669 = vsub.f32 %v408, %v1668
    %v1670 = vand.u32 %v1669, 4294901760
    %1671 = vmatmul.f32.gmra.mxu0 %v1670
    %v1672 = vpop.f32.mrf.mxu0
    %v1673 = vadd.f32 %v1570, %v1672
    %v1674 = vand.u32 %v409, 4294901760
    %v1675 = vsub.f32 %v409, %v1674
    %v1676 = vand.u32 %v1675, 4294901760
    %1677 = vmatmul.f32.gmra.mxu0 %v1676
    %v1678 = vpop.f32.mrf.mxu0
    %v1679 = vadd.f32 %v1575, %v1678
    %v1680 = vand.u32 %v410, 4294901760
    %v1681 = vsub.f32 %v410, %v1680
    %v1682 = vand.u32 %v1681, 4294901760
    %1683 = vmatmul.f32.gmra.mxu0 %v1682
    %v1684 = vpop.f32.mrf.mxu0
    %v1685 = vadd.f32 %v1580, %v1684
    %1686 = vdwg.mxu0
    %v1687 = vand.u32 %v426, 4294901760
    %v1688 = vsub.f32 %v426, %v1687
    %v1689 = vand.u32 %v1688, 4294901760
    %1690 = vmatpush.msra.mxu0 %v1689
    %v1691 = vand.u32 %v425, 4294901760
    %v1692 = vsub.f32 %v425, %v1691
    %v1693 = vand.u32 %v1692, 4294901760
    %1694 = vmatpush.msra.mxu0 %v1693
    %v1695 = vand.u32 %v424, 4294901760
    %v1696 = vsub.f32 %v424, %v1695
    %v1697 = vand.u32 %v1696, 4294901760
    %1698 = vmatpush.msra.mxu0 %v1697
    %v1699 = vand.u32 %v423, 4294901760
    %v1700 = vsub.f32 %v423, %v1699
    %v1701 = vand.u32 %v1700, 4294901760
    %1702 = vmatpush.msra.mxu0 %v1701
    %v1703 = vand.u32 %v422, 4294901760
    %v1704 = vsub.f32 %v422, %v1703
    %v1705 = vand.u32 %v1704, 4294901760
    %1706 = vmatpush.msra.mxu0 %v1705
    %v1707 = vand.u32 %v421, 4294901760
    %v1708 = vsub.f32 %v421, %v1707
    %v1709 = vand.u32 %v1708, 4294901760
    %1710 = vmatpush.msra.mxu0 %v1709
    %v1711 = vand.u32 %v420, 4294901760
    %v1712 = vsub.f32 %v420, %v1711
    %v1713 = vand.u32 %v1712, 4294901760
    %1714 = vmatpush.msra.mxu0 %v1713
    %v1715 = vand.u32 %v419, 4294901760
    %v1716 = vsub.f32 %v419, %v1715
    %v1717 = vand.u32 %v1716, 4294901760
    %1718 = vmatpush.msra.mxu0 %v1717
    %v1719 = vand.u32 %v418, 4294901760
    %v1720 = vsub.f32 %v418, %v1719
    %v1721 = vand.u32 %v1720, 4294901760
    %1722 = vmatpush.msra.mxu0 %v1721
    %v1723 = vand.u32 %v417, 4294901760
    %v1724 = vsub.f32 %v417, %v1723
    %v1725 = vand.u32 %v1724, 4294901760
    %1726 = vmatpush.msra.mxu0 %v1725
    %v1727 = vand.u32 %v416, 4294901760
    %v1728 = vsub.f32 %v416, %v1727
    %v1729 = vand.u32 %v1728, 4294901760
    %1730 = vmatpush.msra.mxu0 %v1729
    %v1731 = vand.u32 %v415, 4294901760
    %v1732 = vsub.f32 %v415, %v1731
    %v1733 = vand.u32 %v1732, 4294901760
    %1734 = vmatpush.msra.mxu0 %v1733
    %v1735 = vand.u32 %v414, 4294901760
    %v1736 = vsub.f32 %v414, %v1735
    %v1737 = vand.u32 %v1736, 4294901760
    %1738 = vmatpush.msra.mxu0 %v1737
    %v1739 = vand.u32 %v413, 4294901760
    %v1740 = vsub.f32 %v413, %v1739
    %v1741 = vand.u32 %v1740, 4294901760
    %1742 = vmatpush.msra.mxu0 %v1741
    %v1743 = vand.u32 %v412, 4294901760
    %v1744 = vsub.f32 %v412, %v1743
    %v1745 = vand.u32 %v1744, 4294901760
    %1746 = vmatpush.msra.mxu0 %v1745
    %v1747 = vand.u32 %v411, 4294901760
    %v1748 = vsub.f32 %v411, %v1747
    %v1749 = vand.u32 %v1748, 4294901760
    %1750 = vmatpush.msra.mxu0 %v1749
    %v1751 = vand.u32 %v399, 4294901760
    %1752 = vmatmul.f32.gmra.mxu0 %v1751
    %v1753 = vpop.f32.mrf.mxu0
    %v1754 = vadd.f32 %v1619, %v1753
    %v1755 = vand.u32 %v400, 4294901760
    %1756 = vmatmul.f32.gmra.mxu0 %v1755
    %v1757 = vpop.f32.mrf.mxu0
    %v1758 = vadd.f32 %v1625, %v1757
    %v1759 = vand.u32 %v401, 4294901760
    %1760 = vmatmul.f32.gmra.mxu0 %v1759
    %v1761 = vpop.f32.mrf.mxu0
    %v1762 = vadd.f32 %v1631, %v1761
    %v1763 = vand.u32 %v402, 4294901760
    %1764 = vmatmul.f32.gmra.mxu0 %v1763
    %v1765 = vpop.f32.mrf.mxu0
    %v1766 = vadd.f32 %v1637, %v1765
    %v1767 = vand.u32 %v403, 4294901760
    %1768 = vmatmul.f32.gmra.mxu0 %v1767
    %v1769 = vpop.f32.mrf.mxu0
    %v1770 = vadd.f32 %v1643, %v1769
    %v1771 = vand.u32 %v404, 4294901760
    %1772 = vmatmul.f32.gmra.mxu0 %v1771
    %v1773 = vpop.f32.mrf.mxu0
    %v1774 = vadd.f32 %v1649, %v1773
    %v1775 = vand.u32 %v405, 4294901760
    %1776 = vmatmul.f32.gmra.mxu0 %v1775
    %v1777 = vpop.f32.mrf.mxu0
    %v1778 = vadd.f32 %v1655, %v1777
    %v1779 = vand.u32 %v406, 4294901760
    %1780 = vmatmul.f32.gmra.mxu0 %v1779
    %v1781 = vpop.f32.mrf.mxu0
    %v1782 = vadd.f32 %v1661, %v1781
    %v1783 = vand.u32 %v407, 4294901760
    %1784 = vmatmul.f32.gmra.mxu0 %v1783
    %v1785 = vpop.f32.mrf.mxu0
    %v1786 = vadd.f32 %v1667, %v1785
    %v1787 = vand.u32 %v408, 4294901760
    %1788 = vmatmul.f32.gmra.mxu0 %v1787
    %v1789 = vpop.f32.mrf.mxu0
    %v1790 = vadd.f32 %v1673, %v1789
    %v1791 = vand.u32 %v409, 4294901760
    %1792 = vmatmul.f32.gmra.mxu0 %v1791
    %v1793 = vpop.f32.mrf.mxu0
    %v1794 = vadd.f32 %v1679, %v1793
    %v1795 = vand.u32 %v410, 4294901760
    %1796 = vmatmul.f32.gmra.mxu0 %v1795
    %v1797 = vpop.f32.mrf.mxu0
    %v1798 = vadd.f32 %v1685, %v1797
    %1799 = vdwg.mxu0
    %v1800 = vand.u32 %v426, 4294901760
    %1801 = vmatpush.msra.mxu0 %v1800
    %v1802 = vand.u32 %v425, 4294901760
    %1803 = vmatpush.msra.mxu0 %v1802
    %v1804 = vand.u32 %v424, 4294901760
    %1805 = vmatpush.msra.mxu0 %v1804
    %v1806 = vand.u32 %v423, 4294901760
    %1807 = vmatpush.msra.mxu0 %v1806
    %v1808 = vand.u32 %v422, 4294901760
    %1809 = vmatpush.msra.mxu0 %v1808
    %v1810 = vand.u32 %v421, 4294901760
    %1811 = vmatpush.msra.mxu0 %v1810
    %v1812 = vand.u32 %v420, 4294901760
    %1813 = vmatpush.msra.mxu0 %v1812
    %v1814 = vand.u32 %v419, 4294901760
    %1815 = vmatpush.msra.mxu0 %v1814
    %v1816 = vand.u32 %v418, 4294901760
    %1817 = vmatpush.msra.mxu0 %v1816
    %v1818 = vand.u32 %v417, 4294901760
    %1819 = vmatpush.msra.mxu0 %v1818
    %v1820 = vand.u32 %v416, 4294901760
    %1821 = vmatpush.msra.mxu0 %v1820
    %v1822 = vand.u32 %v415, 4294901760
    %1823 = vmatpush.msra.mxu0 %v1822
    %v1824 = vand.u32 %v414, 4294901760
    %1825 = vmatpush.msra.mxu0 %v1824
    %v1826 = vand.u32 %v413, 4294901760
    %1827 = vmatpush.msra.mxu0 %v1826
    %v1828 = vand.u32 %v412, 4294901760
    %1829 = vmatpush.msra.mxu0 %v1828
    %v1830 = vand.u32 %v411, 4294901760
    %1831 = vmatpush.msra.mxu0 %v1830
    %v1832 = vand.u32 %v399, 4294901760
    %1833 = vmatmul.f32.gmra.mxu0 %v1832
    %v1834 = vpop.f32.mrf.mxu0
    %v1835 = vadd.f32 %v1754, %v1834
    %v1836 = vand.u32 %v400, 4294901760
    %1837 = vmatmul.f32.gmra.mxu0 %v1836
    %v1838 = vpop.f32.mrf.mxu0
    %v1839 = vadd.f32 %v1758, %v1838
    %v1840 = vand.u32 %v401, 4294901760
    %1841 = vmatmul.f32.gmra.mxu0 %v1840
    %v1842 = vpop.f32.mrf.mxu0
    %v1843 = vadd.f32 %v1762, %v1842
    %v1844 = vand.u32 %v402, 4294901760
    %1845 = vmatmul.f32.gmra.mxu0 %v1844
    %v1846 = vpop.f32.mrf.mxu0
    %v1847 = vadd.f32 %v1766, %v1846
    %v1848 = vand.u32 %v403, 4294901760
    %1849 = vmatmul.f32.gmra.mxu0 %v1848
    %v1850 = vpop.f32.mrf.mxu0
    %v1851 = vadd.f32 %v1770, %v1850
    %v1852 = vand.u32 %v404, 4294901760
    %1853 = vmatmul.f32.gmra.mxu0 %v1852
    %v1854 = vpop.f32.mrf.mxu0
    %v1855 = vadd.f32 %v1774, %v1854
    %v1856 = vand.u32 %v405, 4294901760
    %1857 = vmatmul.f32.gmra.mxu0 %v1856
    %v1858 = vpop.f32.mrf.mxu0
    %v1859 = vadd.f32 %v1778, %v1858
    %v1860 = vand.u32 %v406, 4294901760
    %1861 = vmatmul.f32.gmra.mxu0 %v1860
    %v1862 = vpop.f32.mrf.mxu0
    %v1863 = vadd.f32 %v1782, %v1862
    %v1864 = vand.u32 %v407, 4294901760
    %1865 = vmatmul.f32.gmra.mxu0 %v1864
    %v1866 = vpop.f32.mrf.mxu0
    %v1867 = vadd.f32 %v1786, %v1866
    %v1868 = vand.u32 %v408, 4294901760
    %1869 = vmatmul.f32.gmra.mxu0 %v1868
    %v1870 = vpop.f32.mrf.mxu0
    %v1871 = vadd.f32 %v1790, %v1870
    %v1872 = vand.u32 %v409, 4294901760
    %1873 = vmatmul.f32.gmra.mxu0 %v1872
    %v1874 = vpop.f32.mrf.mxu0
    %v1875 = vadd.f32 %v1794, %v1874
    %v1876 = vand.u32 %v410, 4294901760
    %1877 = vmatmul.f32.gmra.mxu0 %v1876
    %v1878 = vpop.f32.mrf.mxu0
    %v1879 = vadd.f32 %v1798, %v1878
    %1880 = vdwg.mxu0
    %s1881 = scalar_lea.vmem [#allocation2], 256
    %v1882 = vld [vmem:[%s1881] sm:$0xff]
    %v1883 = vld [vmem:[%s1881 + $0x8] sm:$0xff]
    %v1884 = vld [vmem:[%s1881 + $0x10] sm:$0xff]
    %v1885 = vld [vmem:[%s1881 + $0x18] sm:$0xff]
    %v1886 = vld [vmem:[%s1881 + $0x20] sm:$0xff]
    %v1887 = vld [vmem:[%s1881 + $0x28] sm:$0xff]
    %v1888 = vld [vmem:[%s1881 + $0x30] sm:$0xff]
    %v1889 = vld [vmem:[%s1881 + $0x38] sm:$0xff]
    %v1890 = vld [vmem:[%s1881 + $0x40] sm:$0xff]
    %v1891 = vld [vmem:[%s1881 + $0x48] sm:$0xff]
    %v1892 = vld [vmem:[%s1881 + $0x50] sm:$0xff]
    %v1893 = vld [vmem:[%s1881 + $0x58] sm:$0xff]
    %v1894 = vld [vmem:[%s1881 + $0x60] sm:$0xff]
    %v1895 = vld [vmem:[%s1881 + $0x68] sm:$0xff]
    %v1896 = vld [vmem:[%s1881 + $0x70] sm:$0xff]
    %v1897 = vld [vmem:[%s1881 + $0x78] sm:$0xff]
    %v1898 = vand.u32 %v1897, 4294901760
    %1899 = vmatpush.msra.mxu0 %v1898
    %v1900 = vand.u32 %v1896, 4294901760
    %1901 = vmatpush.msra.mxu0 %v1900
    %v1902 = vand.u32 %v1895, 4294901760
    %1903 = vmatpush.msra.mxu0 %v1902
    %v1904 = vand.u32 %v1894, 4294901760
    %1905 = vmatpush.msra.mxu0 %v1904
    %v1906 = vand.u32 %v1893, 4294901760
    %1907 = vmatpush.msra.mxu0 %v1906
    %v1908 = vand.u32 %v1892, 4294901760
    %1909 = vmatpush.msra.mxu0 %v1908
    %v1910 = vand.u32 %v1891, 4294901760
    %1911 = vmatpush.msra.mxu0 %v1910
    %v1912 = vand.u32 %v1890, 4294901760
    %1913 = vmatpush.msra.mxu0 %v1912
    %v1914 = vand.u32 %v1889, 4294901760
    %1915 = vmatpush.msra.mxu0 %v1914
    %v1916 = vand.u32 %v1888, 4294901760
    %1917 = vmatpush.msra.mxu0 %v1916
    %v1918 = vand.u32 %v1887, 4294901760
    %1919 = vmatpush.msra.mxu0 %v1918
    %v1920 = vand.u32 %v1886, 4294901760
    %1921 = vmatpush.msra.mxu0 %v1920
    %v1922 = vand.u32 %v1885, 4294901760
    %1923 = vmatpush.msra.mxu0 %v1922
    %v1924 = vand.u32 %v1884, 4294901760
    %1925 = vmatpush.msra.mxu0 %v1924
    %v1926 = vand.u32 %v1883, 4294901760
    %1927 = vmatpush.msra.mxu0 %v1926
    %v1928 = vand.u32 %v1882, 4294901760
    %1929 = vmatpush.msra.mxu0 %v1928
    %v1930 = vand.u32 %v169, 4294901760
    %v1931 = vsub.f32 %v169, %v1930
    %v1932 = vand.u32 %v1931, 4294901760
    %v1933 = vsub.f32 %v1931, %v1932
    %v1934 = vand.u32 %v1933, 4294901760
    %1935 = vmatmul.f32.gmra.mxu0 %v1934
    %v1936 = vpop.f32.mrf.mxu0
    %v1937 = vadd.f32 0.0, %v1936
    %v1938 = vand.u32 %v170, 4294901760
    %v1939 = vsub.f32 %v170, %v1938
    %v1940 = vand.u32 %v1939, 4294901760
    %v1941 = vsub.f32 %v1939, %v1940
    %v1942 = vand.u32 %v1941, 4294901760
    %1943 = vmatmul.f32.gmra.mxu0 %v1942
    %v1944 = vpop.f32.mrf.mxu0
    %v1945 = vadd.f32 0.0, %v1944
    %v1946 = vand.u32 %v171, 4294901760
    %v1947 = vsub.f32 %v171, %v1946
    %v1948 = vand.u32 %v1947, 4294901760
    %v1949 = vsub.f32 %v1947, %v1948
    %v1950 = vand.u32 %v1949, 4294901760
    %1951 = vmatmul.f32.gmra.mxu0 %v1950
    %v1952 = vpop.f32.mrf.mxu0
    %v1953 = vadd.f32 0.0, %v1952
    %v1954 = vand.u32 %v172, 4294901760
    %v1955 = vsub.f32 %v172, %v1954
    %v1956 = vand.u32 %v1955, 4294901760
    %v1957 = vsub.f32 %v1955, %v1956
    %v1958 = vand.u32 %v1957, 4294901760
    %1959 = vmatmul.f32.gmra.mxu0 %v1958
    %v1960 = vpop.f32.mrf.mxu0
    %v1961 = vadd.f32 0.0, %v1960
    %v1962 = vand.u32 %v173, 4294901760
    %v1963 = vsub.f32 %v173, %v1962
    %v1964 = vand.u32 %v1963, 4294901760
    %v1965 = vsub.f32 %v1963, %v1964
    %v1966 = vand.u32 %v1965, 4294901760
    %1967 = vmatmul.f32.gmra.mxu0 %v1966
    %v1968 = vpop.f32.mrf.mxu0
    %v1969 = vadd.f32 0.0, %v1968
    %v1970 = vand.u32 %v174, 4294901760
    %v1971 = vsub.f32 %v174, %v1970
    %v1972 = vand.u32 %v1971, 4294901760
    %v1973 = vsub.f32 %v1971, %v1972
    %v1974 = vand.u32 %v1973, 4294901760
    %1975 = vmatmul.f32.gmra.mxu0 %v1974
    %v1976 = vpop.f32.mrf.mxu0
    %v1977 = vadd.f32 0.0, %v1976
    %v1978 = vand.u32 %v175, 4294901760
    %v1979 = vsub.f32 %v175, %v1978
    %v1980 = vand.u32 %v1979, 4294901760
    %v1981 = vsub.f32 %v1979, %v1980
    %v1982 = vand.u32 %v1981, 4294901760
    %1983 = vmatmul.f32.gmra.mxu0 %v1982
    %v1984 = vpop.f32.mrf.mxu0
    %v1985 = vadd.f32 0.0, %v1984
    %v1986 = vand.u32 %v176, 4294901760
    %v1987 = vsub.f32 %v176, %v1986
    %v1988 = vand.u32 %v1987, 4294901760
    %v1989 = vsub.f32 %v1987, %v1988
    %v1990 = vand.u32 %v1989, 4294901760
    %1991 = vmatmul.f32.gmra.mxu0 %v1990
    %v1992 = vpop.f32.mrf.mxu0
    %v1993 = vadd.f32 0.0, %v1992
    %v1994 = vand.u32 %v177, 4294901760
    %v1995 = vsub.f32 %v177, %v1994
    %v1996 = vand.u32 %v1995, 4294901760
    %v1997 = vsub.f32 %v1995, %v1996
    %v1998 = vand.u32 %v1997, 4294901760
    %1999 = vmatmul.f32.gmra.mxu0 %v1998
    %v2000 = vpop.f32.mrf.mxu0
    %v2001 = vadd.f32 0.0, %v2000
    %v2002 = vand.u32 %v178, 4294901760
    %v2003 = vsub.f32 %v178, %v2002
    %v2004 = vand.u32 %v2003, 4294901760
    %v2005 = vsub.f32 %v2003, %v2004
    %v2006 = vand.u32 %v2005, 4294901760
    %2007 = vmatmul.f32.gmra.mxu0 %v2006
    %v2008 = vpop.f32.mrf.mxu0
    %v2009 = vadd.f32 0.0, %v2008
    %v2010 = vand.u32 %v179, 4294901760
    %v2011 = vsub.f32 %v179, %v2010
    %v2012 = vand.u32 %v2011, 4294901760
    %v2013 = vsub.f32 %v2011, %v2012
    %v2014 = vand.u32 %v2013, 4294901760
    %2015 = vmatmul.f32.gmra.mxu0 %v2014
    %v2016 = vpop.f32.mrf.mxu0
    %v2017 = vadd.f32 0.0, %v2016
    %v2018 = vand.u32 %v180, 4294901760
    %v2019 = vsub.f32 %v180, %v2018
    %v2020 = vand.u32 %v2019, 4294901760
    %v2021 = vsub.f32 %v2019, %v2020
    %v2022 = vand.u32 %v2021, 4294901760
    %2023 = vmatmul.f32.gmra.mxu0 %v2022
    %v2024 = vpop.f32.mrf.mxu0
    %v2025 = vadd.f32 0.0, %v2024
    %2026 = vdwg.mxu0
    %v2027 = vand.u32 %v1897, 4294901760
    %v2028 = vsub.f32 %v1897, %v2027
    %v2029 = vand.u32 %v2028, 4294901760
    %v2030 = vsub.f32 %v2028, %v2029
    %v2031 = vand.u32 %v2030, 4294901760
    %2032 = vmatpush.msra.mxu0 %v2031
    %v2033 = vand.u32 %v1896, 4294901760
    %v2034 = vsub.f32 %v1896, %v2033
    %v2035 = vand.u32 %v2034, 4294901760
    %v2036 = vsub.f32 %v2034, %v2035
    %v2037 = vand.u32 %v2036, 4294901760
    %2038 = vmatpush.msra.mxu0 %v2037
    %v2039 = vand.u32 %v1895, 4294901760
    %v2040 = vsub.f32 %v1895, %v2039
    %v2041 = vand.u32 %v2040, 4294901760
    %v2042 = vsub.f32 %v2040, %v2041
    %v2043 = vand.u32 %v2042, 4294901760
    %2044 = vmatpush.msra.mxu0 %v2043
    %v2045 = vand.u32 %v1894, 4294901760
    %v2046 = vsub.f32 %v1894, %v2045
    %v2047 = vand.u32 %v2046, 4294901760
    %v2048 = vsub.f32 %v2046, %v2047
    %v2049 = vand.u32 %v2048, 4294901760
    %2050 = vmatpush.msra.mxu0 %v2049
    %v2051 = vand.u32 %v1893, 4294901760
    %v2052 = vsub.f32 %v1893, %v2051
    %v2053 = vand.u32 %v2052, 4294901760
    %v2054 = vsub.f32 %v2052, %v2053
    %v2055 = vand.u32 %v2054, 4294901760
    %2056 = vmatpush.msra.mxu0 %v2055
    %v2057 = vand.u32 %v1892, 4294901760
    %v2058 = vsub.f32 %v1892, %v2057
    %v2059 = vand.u32 %v2058, 4294901760
    %v2060 = vsub.f32 %v2058, %v2059
    %v2061 = vand.u32 %v2060, 4294901760
    %2062 = vmatpush.msra.mxu0 %v2061
    %v2063 = vand.u32 %v1891, 4294901760
    %v2064 = vsub.f32 %v1891, %v2063
    %v2065 = vand.u32 %v2064, 4294901760
    %v2066 = vsub.f32 %v2064, %v2065
    %v2067 = vand.u32 %v2066, 4294901760
    %2068 = vmatpush.msra.mxu0 %v2067
    %v2069 = vand.u32 %v1890, 4294901760
    %v2070 = vsub.f32 %v1890, %v2069
    %v2071 = vand.u32 %v2070, 4294901760
    %v2072 = vsub.f32 %v2070, %v2071
    %v2073 = vand.u32 %v2072, 4294901760
    %2074 = vmatpush.msra.mxu0 %v2073
    %v2075 = vand.u32 %v1889, 4294901760
    %v2076 = vsub.f32 %v1889, %v2075
    %v2077 = vand.u32 %v2076, 4294901760
    %v2078 = vsub.f32 %v2076, %v2077
    %v2079 = vand.u32 %v2078, 4294901760
    %2080 = vmatpush.msra.mxu0 %v2079
    %v2081 = vand.u32 %v1888, 4294901760
    %v2082 = vsub.f32 %v1888, %v2081
    %v2083 = vand.u32 %v2082, 4294901760
    %v2084 = vsub.f32 %v2082, %v2083
    %v2085 = vand.u32 %v2084, 4294901760
    %2086 = vmatpush.msra.mxu0 %v2085
    %v2087 = vand.u32 %v1887, 4294901760
    %v2088 = vsub.f32 %v1887, %v2087
    %v2089 = vand.u32 %v2088, 4294901760
    %v2090 = vsub.f32 %v2088, %v2089
    %v2091 = vand.u32 %v2090, 4294901760
    %2092 = vmatpush.msra.mxu0 %v2091
    %v2093 = vand.u32 %v1886, 4294901760
    %v2094 = vsub.f32 %v1886, %v2093
    %v2095 = vand.u32 %v2094, 4294901760
    %v2096 = vsub.f32 %v2094, %v2095
    %v2097 = vand.u32 %v2096, 4294901760
    %2098 = vmatpush.msra.mxu0 %v2097
    %v2099 = vand.u32 %v1885, 4294901760
    %v2100 = vsub.f32 %v1885, %v2099
    %v2101 = vand.u32 %v2100, 4294901760
    %v2102 = vsub.f32 %v2100, %v2101
    %v2103 = vand.u32 %v2102, 4294901760
    %2104 = vmatpush.msra.mxu0 %v2103
    %v2105 = vand.u32 %v1884, 4294901760
    %v2106 = vsub.f32 %v1884, %v2105
    %v2107 = vand.u32 %v2106, 4294901760
    %v2108 = vsub.f32 %v2106, %v2107
    %v2109 = vand.u32 %v2108, 4294901760
    %2110 = vmatpush.msra.mxu0 %v2109
    %v2111 = vand.u32 %v1883, 4294901760
    %v2112 = vsub.f32 %v1883, %v2111
    %v2113 = vand.u32 %v2112, 4294901760
    %v2114 = vsub.f32 %v2112, %v2113
    %v2115 = vand.u32 %v2114, 4294901760
    %2116 = vmatpush.msra.mxu0 %v2115
    %v2117 = vand.u32 %v1882, 4294901760
    %v2118 = vsub.f32 %v1882, %v2117
    %v2119 = vand.u32 %v2118, 4294901760
    %v2120 = vsub.f32 %v2118, %v2119
    %v2121 = vand.u32 %v2120, 4294901760
    %2122 = vmatpush.msra.mxu0 %v2121
    %v2123 = vand.u32 %v169, 4294901760
    %2124 = vmatmul.f32.gmra.mxu0 %v2123
    %v2125 = vpop.f32.mrf.mxu0
    %v2126 = vadd.f32 %v1937, %v2125
    %v2127 = vand.u32 %v170, 4294901760
    %2128 = vmatmul.f32.gmra.mxu0 %v2127
    %v2129 = vpop.f32.mrf.mxu0
    %v2130 = vadd.f32 %v1945, %v2129
    %v2131 = vand.u32 %v171, 4294901760
    %2132 = vmatmul.f32.gmra.mxu0 %v2131
    %v2133 = vpop.f32.mrf.mxu0
    %v2134 = vadd.f32 %v1953, %v2133
    %v2135 = vand.u32 %v172, 4294901760
    %2136 = vmatmul.f32.gmra.mxu0 %v2135
    %v2137 = vpop.f32.mrf.mxu0
    %v2138 = vadd.f32 %v1961, %v2137
    %v2139 = vand.u32 %v173, 4294901760
    %2140 = vmatmul.f32.gmra.mxu0 %v2139
    %v2141 = vpop.f32.mrf.mxu0
    %v2142 = vadd.f32 %v1969, %v2141
    %v2143 = vand.u32 %v174, 4294901760
    %2144 = vmatmul.f32.gmra.mxu0 %v2143
    %v2145 = vpop.f32.mrf.mxu0
    %v2146 = vadd.f32 %v1977, %v2145
    %v2147 = vand.u32 %v175, 4294901760
    %2148 = vmatmul.f32.gmra.mxu0 %v2147
    %v2149 = vpop.f32.mrf.mxu0
    %v2150 = vadd.f32 %v1985, %v2149
    %v2151 = vand.u32 %v176, 4294901760
    %2152 = vmatmul.f32.gmra.mxu0 %v2151
    %v2153 = vpop.f32.mrf.mxu0
    %v2154 = vadd.f32 %v1993, %v2153
    %v2155 = vand.u32 %v177, 4294901760
    %2156 = vmatmul.f32.gmra.mxu0 %v2155
    %v2157 = vpop.f32.mrf.mxu0
    %v2158 = vadd.f32 %v2001, %v2157
    %v2159 = vand.u32 %v178, 4294901760
    %2160 = vmatmul.f32.gmra.mxu0 %v2159
    %v2161 = vpop.f32.mrf.mxu0
    %v2162 = vadd.f32 %v2009, %v2161
    %v2163 = vand.u32 %v179, 4294901760
    %2164 = vmatmul.f32.gmra.mxu0 %v2163
    %v2165 = vpop.f32.mrf.mxu0
    %v2166 = vadd.f32 %v2017, %v2165
    %v2167 = vand.u32 %v180, 4294901760
    %2168 = vmatmul.f32.gmra.mxu0 %v2167
    %v2169 = vpop.f32.mrf.mxu0
    %v2170 = vadd.f32 %v2025, %v2169
    %2171 = vdwg.mxu0
    %v2172 = vand.u32 %v1897, 4294901760
    %v2173 = vsub.f32 %v1897, %v2172
    %2174 = vmatpush.msra.mxu0 %v2173
    %v2175 = vand.u32 %v1896, 4294901760
    %v2176 = vsub.f32 %v1896, %v2175
    %2177 = vmatpush.msra.mxu0 %v2176
    %v2178 = vand.u32 %v1895, 4294901760
    %v2179 = vsub.f32 %v1895, %v2178
    %2180 = vmatpush.msra.mxu0 %v2179
    %v2181 = vand.u32 %v1894, 4294901760
    %v2182 = vsub.f32 %v1894, %v2181
    %2183 = vmatpush.msra.mxu0 %v2182
    %v2184 = vand.u32 %v1893, 4294901760
    %v2185 = vsub.f32 %v1893, %v2184
    %2186 = vmatpush.msra.mxu0 %v2185
    %v2187 = vand.u32 %v1892, 4294901760
    %v2188 = vsub.f32 %v1892, %v2187
    %2189 = vmatpush.msra.mxu0 %v2188
    %v2190 = vand.u32 %v1891, 4294901760
    %v2191 = vsub.f32 %v1891, %v2190
    %2192 = vmatpush.msra.mxu0 %v2191
    %v2193 = vand.u32 %v1890, 4294901760
    %v2194 = vsub.f32 %v1890, %v2193
    %2195 = vmatpush.msra.mxu0 %v2194
    %v2196 = vand.u32 %v1889, 4294901760
    %v2197 = vsub.f32 %v1889, %v2196
    %2198 = vmatpush.msra.mxu0 %v2197
    %v2199 = vand.u32 %v1888, 4294901760
    %v2200 = vsub.f32 %v1888, %v2199
    %2201 = vmatpush.msra.mxu0 %v2200
    %v2202 = vand.u32 %v1887, 4294901760
    %v2203 = vsub.f32 %v1887, %v2202
    %2204 = vmatpush.msra.mxu0 %v2203
    %v2205 = vand.u32 %v1886, 4294901760
    %v2206 = vsub.f32 %v1886, %v2205
    %2207 = vmatpush.msra.mxu0 %v2206
    %v2208 = vand.u32 %v1885, 4294901760
    %v2209 = vsub.f32 %v1885, %v2208
    %2210 = vmatpush.msra.mxu0 %v2209
    %v2211 = vand.u32 %v1884, 4294901760
    %v2212 = vsub.f32 %v1884, %v2211
    %2213 = vmatpush.msra.mxu0 %v2212
    %v2214 = vand.u32 %v1883, 4294901760
    %v2215 = vsub.f32 %v1883, %v2214
    %2216 = vmatpush.msra.mxu0 %v2215
    %v2217 = vand.u32 %v1882, 4294901760
    %v2218 = vsub.f32 %v1882, %v2217
    %2219 = vmatpush.msra.mxu0 %v2218
    %v2220 = vand.u32 %v169, 4294901760
    %v2221 = vsub.f32 %v169, %v2220
    %2222 = vmatmul.f32.gmra.mxu0 %v2221
    %v2223 = vpop.f32.mrf.mxu0
    %v2224 = vadd.f32 %v2126, %v2223
    %v2225 = vand.u32 %v170, 4294901760
    %v2226 = vsub.f32 %v170, %v2225
    %2227 = vmatmul.f32.gmra.mxu0 %v2226
    %v2228 = vpop.f32.mrf.mxu0
    %v2229 = vadd.f32 %v2130, %v2228
    %v2230 = vand.u32 %v171, 4294901760
    %v2231 = vsub.f32 %v171, %v2230
    %2232 = vmatmul.f32.gmra.mxu0 %v2231
    %v2233 = vpop.f32.mrf.mxu0
    %v2234 = vadd.f32 %v2134, %v2233
    %v2235 = vand.u32 %v172, 4294901760
    %v2236 = vsub.f32 %v172, %v2235
    %2237 = vmatmul.f32.gmra.mxu0 %v2236
    %v2238 = vpop.f32.mrf.mxu0
    %v2239 = vadd.f32 %v2138, %v2238
    %v2240 = vand.u32 %v173, 4294901760
    %v2241 = vsub.f32 %v173, %v2240
    %2242 = vmatmul.f32.gmra.mxu0 %v2241
    %v2243 = vpop.f32.mrf.mxu0
    %v2244 = vadd.f32 %v2142, %v2243
    %v2245 = vand.u32 %v174, 4294901760
    %v2246 = vsub.f32 %v174, %v2245
    %2247 = vmatmul.f32.gmra.mxu0 %v2246
    %v2248 = vpop.f32.mrf.mxu0
    %v2249 = vadd.f32 %v2146, %v2248
    %v2250 = vand.u32 %v175, 4294901760
    %v2251 = vsub.f32 %v175, %v2250
    %2252 = vmatmul.f32.gmra.mxu0 %v2251
    %v2253 = vpop.f32.mrf.mxu0
    %v2254 = vadd.f32 %v2150, %v2253
    %v2255 = vand.u32 %v176, 4294901760
    %v2256 = vsub.f32 %v176, %v2255
    %2257 = vmatmul.f32.gmra.mxu0 %v2256
    %v2258 = vpop.f32.mrf.mxu0
    %v2259 = vadd.f32 %v2154, %v2258
    %v2260 = vand.u32 %v177, 4294901760
    %v2261 = vsub.f32 %v177, %v2260
    %2262 = vmatmul.f32.gmra.mxu0 %v2261
    %v2263 = vpop.f32.mrf.mxu0
    %v2264 = vadd.f32 %v2158, %v2263
    %v2265 = vand.u32 %v178, 4294901760
    %v2266 = vsub.f32 %v178, %v2265
    %2267 = vmatmul.f32.gmra.mxu0 %v2266
    %v2268 = vpop.f32.mrf.mxu0
    %v2269 = vadd.f32 %v2162, %v2268
    %v2270 = vand.u32 %v179, 4294901760
    %v2271 = vsub.f32 %v179, %v2270
    %2272 = vmatmul.f32.gmra.mxu0 %v2271
    %v2273 = vpop.f32.mrf.mxu0
    %v2274 = vadd.f32 %v2166, %v2273
    %v2275 = vand.u32 %v180, 4294901760
    %v2276 = vsub.f32 %v180, %v2275
    %2277 = vmatmul.f32.gmra.mxu0 %v2276
    %v2278 = vpop.f32.mrf.mxu0
    %v2279 = vadd.f32 %v2170, %v2278
    %2280 = vdwg.mxu0
    %v2281 = vand.u32 %v1897, 4294901760
    %2282 = vmatpush.msra.mxu0 %v2281
    %v2283 = vand.u32 %v1896, 4294901760
    %2284 = vmatpush.msra.mxu0 %v2283
    %v2285 = vand.u32 %v1895, 4294901760
    %2286 = vmatpush.msra.mxu0 %v2285
    %v2287 = vand.u32 %v1894, 4294901760
    %2288 = vmatpush.msra.mxu0 %v2287
    %v2289 = vand.u32 %v1893, 4294901760
    %2290 = vmatpush.msra.mxu0 %v2289
    %v2291 = vand.u32 %v1892, 4294901760
    %2292 = vmatpush.msra.mxu0 %v2291
    %v2293 = vand.u32 %v1891, 4294901760
    %2294 = vmatpush.msra.mxu0 %v2293
    %v2295 = vand.u32 %v1890, 4294901760
    %2296 = vmatpush.msra.mxu0 %v2295
    %v2297 = vand.u32 %v1889, 4294901760
    %2298 = vmatpush.msra.mxu0 %v2297
    %v2299 = vand.u32 %v1888, 4294901760
    %2300 = vmatpush.msra.mxu0 %v2299
    %v2301 = vand.u32 %v1887, 4294901760
    %2302 = vmatpush.msra.mxu0 %v2301
    %v2303 = vand.u32 %v1886, 4294901760
    %2304 = vmatpush.msra.mxu0 %v2303
    %v2305 = vand.u32 %v1885, 4294901760
    %2306 = vmatpush.msra.mxu0 %v2305
    %v2307 = vand.u32 %v1884, 4294901760
    %2308 = vmatpush.msra.mxu0 %v2307
    %v2309 = vand.u32 %v1883, 4294901760
    %2310 = vmatpush.msra.mxu0 %v2309
    %v2311 = vand.u32 %v1882, 4294901760
    %2312 = vmatpush.msra.mxu0 %v2311
    %v2313 = vand.u32 %v169, 4294901760
    %v2314 = vsub.f32 %v169, %v2313
    %v2315 = vand.u32 %v2314, 4294901760
    %2316 = vmatmul.f32.gmra.mxu0 %v2315
    %v2317 = vpop.f32.mrf.mxu0
    %v2318 = vadd.f32 %v2224, %v2317
    %v2319 = vand.u32 %v170, 4294901760
    %v2320 = vsub.f32 %v170, %v2319
    %v2321 = vand.u32 %v2320, 4294901760
    %2322 = vmatmul.f32.gmra.mxu0 %v2321
    %v2323 = vpop.f32.mrf.mxu0
    %v2324 = vadd.f32 %v2229, %v2323
    %v2325 = vand.u32 %v171, 4294901760
    %v2326 = vsub.f32 %v171, %v2325
    %v2327 = vand.u32 %v2326, 4294901760
    %2328 = vmatmul.f32.gmra.mxu0 %v2327
    %v2329 = vpop.f32.mrf.mxu0
    %v2330 = vadd.f32 %v2234, %v2329
    %v2331 = vand.u32 %v172, 4294901760
    %v2332 = vsub.f32 %v172, %v2331
    %v2333 = vand.u32 %v2332, 4294901760
    %2334 = vmatmul.f32.gmra.mxu0 %v2333
    %v2335 = vpop.f32.mrf.mxu0
    %v2336 = vadd.f32 %v2239, %v2335
    %v2337 = vand.u32 %v173, 4294901760
    %v2338 = vsub.f32 %v173, %v2337
    %v2339 = vand.u32 %v2338, 4294901760
    %2340 = vmatmul.f32.gmra.mxu0 %v2339
    %v2341 = vpop.f32.mrf.mxu0
    %v2342 = vadd.f32 %v2244, %v2341
    %v2343 = vand.u32 %v174, 4294901760
    %v2344 = vsub.f32 %v174, %v2343
    %v2345 = vand.u32 %v2344, 4294901760
    %2346 = vmatmul.f32.gmra.mxu0 %v2345
    %v2347 = vpop.f32.mrf.mxu0
    %v2348 = vadd.f32 %v2249, %v2347
    %v2349 = vand.u32 %v175, 4294901760
    %v2350 = vsub.f32 %v175, %v2349
    %v2351 = vand.u32 %v2350, 4294901760
    %2352 = vmatmul.f32.gmra.mxu0 %v2351
    %v2353 = vpop.f32.mrf.mxu0
    %v2354 = vadd.f32 %v2254, %v2353
    %v2355 = vand.u32 %v176, 4294901760
    %v2356 = vsub.f32 %v176, %v2355
    %v2357 = vand.u32 %v2356, 4294901760
    %2358 = vmatmul.f32.gmra.mxu0 %v2357
    %v2359 = vpop.f32.mrf.mxu0
    %v2360 = vadd.f32 %v2259, %v2359
    %v2361 = vand.u32 %v177, 4294901760
    %v2362 = vsub.f32 %v177, %v2361
    %v2363 = vand.u32 %v2362, 4294901760
    %2364 = vmatmul.f32.gmra.mxu0 %v2363
    %v2365 = vpop.f32.mrf.mxu0
    %v2366 = vadd.f32 %v2264, %v2365
    %v2367 = vand.u32 %v178, 4294901760
    %v2368 = vsub.f32 %v178, %v2367
    %v2369 = vand.u32 %v2368, 4294901760
    %2370 = vmatmul.f32.gmra.mxu0 %v2369
    %v2371 = vpop.f32.mrf.mxu0
    %v2372 = vadd.f32 %v2269, %v2371
    %v2373 = vand.u32 %v179, 4294901760
    %v2374 = vsub.f32 %v179, %v2373
    %v2375 = vand.u32 %v2374, 4294901760
    %2376 = vmatmul.f32.gmra.mxu0 %v2375
    %v2377 = vpop.f32.mrf.mxu0
    %v2378 = vadd.f32 %v2274, %v2377
    %v2379 = vand.u32 %v180, 4294901760
    %v2380 = vsub.f32 %v180, %v2379
    %v2381 = vand.u32 %v2380, 4294901760
    %2382 = vmatmul.f32.gmra.mxu0 %v2381
    %v2383 = vpop.f32.mrf.mxu0
    %v2384 = vadd.f32 %v2279, %v2383
    %2385 = vdwg.mxu0
    %v2386 = vand.u32 %v1897, 4294901760
    %v2387 = vsub.f32 %v1897, %v2386
    %v2388 = vand.u32 %v2387, 4294901760
    %2389 = vmatpush.msra.mxu0 %v2388
    %v2390 = vand.u32 %v1896, 4294901760
    %v2391 = vsub.f32 %v1896, %v2390
    %v2392 = vand.u32 %v2391, 4294901760
    %2393 = vmatpush.msra.mxu0 %v2392
    %v2394 = vand.u32 %v1895, 4294901760
    %v2395 = vsub.f32 %v1895, %v2394
    %v2396 = vand.u32 %v2395, 4294901760
    %2397 = vmatpush.msra.mxu0 %v2396
    %v2398 = vand.u32 %v1894, 4294901760
    %v2399 = vsub.f32 %v1894, %v2398
    %v2400 = vand.u32 %v2399, 4294901760
    %2401 = vmatpush.msra.mxu0 %v2400
    %v2402 = vand.u32 %v1893, 4294901760
    %v2403 = vsub.f32 %v1893, %v2402
    %v2404 = vand.u32 %v2403, 4294901760
    %2405 = vmatpush.msra.mxu0 %v2404
    %v2406 = vand.u32 %v1892, 4294901760
    %v2407 = vsub.f32 %v1892, %v2406
    %v2408 = vand.u32 %v2407, 4294901760
    %2409 = vmatpush.msra.mxu0 %v2408
    %v2410 = vand.u32 %v1891, 4294901760
    %v2411 = vsub.f32 %v1891, %v2410
    %v2412 = vand.u32 %v2411, 4294901760
    %2413 = vmatpush.msra.mxu0 %v2412
    %v2414 = vand.u32 %v1890, 4294901760
    %v2415 = vsub.f32 %v1890, %v2414
    %v2416 = vand.u32 %v2415, 4294901760
    %2417 = vmatpush.msra.mxu0 %v2416
    %v2418 = vand.u32 %v1889, 4294901760
    %v2419 = vsub.f32 %v1889, %v2418
    %v2420 = vand.u32 %v2419, 4294901760
    %2421 = vmatpush.msra.mxu0 %v2420
    %v2422 = vand.u32 %v1888, 4294901760
    %v2423 = vsub.f32 %v1888, %v2422
    %v2424 = vand.u32 %v2423, 4294901760
    %2425 = vmatpush.msra.mxu0 %v2424
    %v2426 = vand.u32 %v1887, 4294901760
    %v2427 = vsub.f32 %v1887, %v2426
    %v2428 = vand.u32 %v2427, 4294901760
    %2429 = vmatpush.msra.mxu0 %v2428
    %v2430 = vand.u32 %v1886, 4294901760
    %v2431 = vsub.f32 %v1886, %v2430
    %v2432 = vand.u32 %v2431, 4294901760
    %2433 = vmatpush.msra.mxu0 %v2432
    %v2434 = vand.u32 %v1885, 4294901760
    %v2435 = vsub.f32 %v1885, %v2434
    %v2436 = vand.u32 %v2435, 4294901760
    %2437 = vmatpush.msra.mxu0 %v2436
    %v2438 = vand.u32 %v1884, 4294901760
    %v2439 = vsub.f32 %v1884, %v2438
    %v2440 = vand.u32 %v2439, 4294901760
    %2441 = vmatpush.msra.mxu0 %v2440
    %v2442 = vand.u32 %v1883, 4294901760
    %v2443 = vsub.f32 %v1883, %v2442
    %v2444 = vand.u32 %v2443, 4294901760
    %2445 = vmatpush.msra.mxu0 %v2444
    %v2446 = vand.u32 %v1882, 4294901760
    %v2447 = vsub.f32 %v1882, %v2446
    %v2448 = vand.u32 %v2447, 4294901760
    %2449 = vmatpush.msra.mxu0 %v2448
    %v2450 = vand.u32 %v169, 4294901760
    %2451 = vmatmul.f32.gmra.mxu0 %v2450
    %v2452 = vpop.f32.mrf.mxu0
    %v2453 = vadd.f32 %v2318, %v2452
    %v2454 = vand.u32 %v170, 4294901760
    %2455 = vmatmul.f32.gmra.mxu0 %v2454
    %v2456 = vpop.f32.mrf.mxu0
    %v2457 = vadd.f32 %v2324, %v2456
    %v2458 = vand.u32 %v171, 4294901760
    %2459 = vmatmul.f32.gmra.mxu0 %v2458
    %v2460 = vpop.f32.mrf.mxu0
    %v2461 = vadd.f32 %v2330, %v2460
    %v2462 = vand.u32 %v172, 4294901760
    %2463 = vmatmul.f32.gmra.mxu0 %v2462
    %v2464 = vpop.f32.mrf.mxu0
    %v2465 = vadd.f32 %v2336, %v2464
    %v2466 = vand.u32 %v173, 4294901760
    %2467 = vmatmul.f32.gmra.mxu0 %v2466
    %v2468 = vpop.f32.mrf.mxu0
    %v2469 = vadd.f32 %v2342, %v2468
    %v2470 = vand.u32 %v174, 4294901760
    %2471 = vmatmul.f32.gmra.mxu0 %v2470
    %v2472 = vpop.f32.mrf.mxu0
    %v2473 = vadd.f32 %v2348, %v2472
    %v2474 = vand.u32 %v175, 4294901760
    %2475 = vmatmul.f32.gmra.mxu0 %v2474
    %v2476 = vpop.f32.mrf.mxu0
    %v2477 = vadd.f32 %v2354, %v2476
    %v2478 = vand.u32 %v176, 4294901760
    %2479 = vmatmul.f32.gmra.mxu0 %v2478
    %v2480 = vpop.f32.mrf.mxu0
    %v2481 = vadd.f32 %v2360, %v2480
    %v2482 = vand.u32 %v177, 4294901760
    %2483 = vmatmul.f32.gmra.mxu0 %v2482
    %v2484 = vpop.f32.mrf.mxu0
    %v2485 = vadd.f32 %v2366, %v2484
    %v2486 = vand.u32 %v178, 4294901760
    %2487 = vmatmul.f32.gmra.mxu0 %v2486
    %v2488 = vpop.f32.mrf.mxu0
    %v2489 = vadd.f32 %v2372, %v2488
    %v2490 = vand.u32 %v179, 4294901760
    %2491 = vmatmul.f32.gmra.mxu0 %v2490
    %v2492 = vpop.f32.mrf.mxu0
    %v2493 = vadd.f32 %v2378, %v2492
    %v2494 = vand.u32 %v180, 4294901760
    %2495 = vmatmul.f32.gmra.mxu0 %v2494
    %v2496 = vpop.f32.mrf.mxu0
    %v2497 = vadd.f32 %v2384, %v2496
    %2498 = vdwg.mxu0
    %v2499 = vand.u32 %v1897, 4294901760
    %2500 = vmatpush.msra.mxu0 %v2499
    %v2501 = vand.u32 %v1896, 4294901760
    %2502 = vmatpush.msra.mxu0 %v2501
    %v2503 = vand.u32 %v1895, 4294901760
    %2504 = vmatpush.msra.mxu0 %v2503
    %v2505 = vand.u32 %v1894, 4294901760
    %2506 = vmatpush.msra.mxu0 %v2505
    %v2507 = vand.u32 %v1893, 4294901760
    %2508 = vmatpush.msra.mxu0 %v2507
    %v2509 = vand.u32 %v1892, 4294901760
    %2510 = vmatpush.msra.mxu0 %v2509
    %v2511 = vand.u32 %v1891, 4294901760
    %2512 = vmatpush.msra.mxu0 %v2511
    %v2513 = vand.u32 %v1890, 4294901760
    %2514 = vmatpush.msra.mxu0 %v2513
    %v2515 = vand.u32 %v1889, 4294901760
    %2516 = vmatpush.msra.mxu0 %v2515
    %v2517 = vand.u32 %v1888, 4294901760
    %2518 = vmatpush.msra.mxu0 %v2517
    %v2519 = vand.u32 %v1887, 4294901760
    %2520 = vmatpush.msra.mxu0 %v2519
    %v2521 = vand.u32 %v1886, 4294901760
    %2522 = vmatpush.msra.mxu0 %v2521
    %v2523 = vand.u32 %v1885, 4294901760
    %2524 = vmatpush.msra.mxu0 %v2523
    %v2525 = vand.u32 %v1884, 4294901760
    %2526 = vmatpush.msra.mxu0 %v2525
    %v2527 = vand.u32 %v1883, 4294901760
    %2528 = vmatpush.msra.mxu0 %v2527
    %v2529 = vand.u32 %v1882, 4294901760
    %2530 = vmatpush.msra.mxu0 %v2529
    %v2531 = vand.u32 %v169, 4294901760
    %2532 = vmatmul.f32.gmra.mxu0 %v2531
    %v2533 = vpop.f32.mrf.mxu0
    %v2534 = vadd.f32 %v2453, %v2533
    %v2535 = vand.u32 %v170, 4294901760
    %2536 = vmatmul.f32.gmra.mxu0 %v2535
    %v2537 = vpop.f32.mrf.mxu0
    %v2538 = vadd.f32 %v2457, %v2537
    %v2539 = vand.u32 %v171, 4294901760
    %2540 = vmatmul.f32.gmra.mxu0 %v2539
    %v2541 = vpop.f32.mrf.mxu0
    %v2542 = vadd.f32 %v2461, %v2541
    %v2543 = vand.u32 %v172, 4294901760
    %2544 = vmatmul.f32.gmra.mxu0 %v2543
    %v2545 = vpop.f32.mrf.mxu0
    %v2546 = vadd.f32 %v2465, %v2545
    %v2547 = vand.u32 %v173, 4294901760
    %2548 = vmatmul.f32.gmra.mxu0 %v2547
    %v2549 = vpop.f32.mrf.mxu0
    %v2550 = vadd.f32 %v2469, %v2549
    %v2551 = vand.u32 %v174, 4294901760
    %2552 = vmatmul.f32.gmra.mxu0 %v2551
    %v2553 = vpop.f32.mrf.mxu0
    %v2554 = vadd.f32 %v2473, %v2553
    %v2555 = vand.u32 %v175, 4294901760
    %2556 = vmatmul.f32.gmra.mxu0 %v2555
    %v2557 = vpop.f32.mrf.mxu0
    %v2558 = vadd.f32 %v2477, %v2557
    %v2559 = vand.u32 %v176, 4294901760
    %2560 = vmatmul.f32.gmra.mxu0 %v2559
    %v2561 = vpop.f32.mrf.mxu0
    %v2562 = vadd.f32 %v2481, %v2561
    %v2563 = vand.u32 %v177, 4294901760
    %2564 = vmatmul.f32.gmra.mxu0 %v2563
    %v2565 = vpop.f32.mrf.mxu0
    %v2566 = vadd.f32 %v2485, %v2565
    %v2567 = vand.u32 %v178, 4294901760
    %2568 = vmatmul.f32.gmra.mxu0 %v2567
    %v2569 = vpop.f32.mrf.mxu0
    %v2570 = vadd.f32 %v2489, %v2569
    %v2571 = vand.u32 %v179, 4294901760
    %2572 = vmatmul.f32.gmra.mxu0 %v2571
    %v2573 = vpop.f32.mrf.mxu0
    %v2574 = vadd.f32 %v2493, %v2573
    %v2575 = vand.u32 %v180, 4294901760
    %2576 = vmatmul.f32.gmra.mxu0 %v2575
    %v2577 = vpop.f32.mrf.mxu0
    %v2578 = vadd.f32 %v2497, %v2577
    %2579 = vdwg.mxu0
    %v2580 = vadd.f32 %v1835, %v2534
    %v2581 = vadd.f32 %v1839, %v2538
    %v2582 = vadd.f32 %v1843, %v2542
    %v2583 = vadd.f32 %v1847, %v2546
    %v2584 = vadd.f32 %v1851, %v2550
    %v2585 = vadd.f32 %v1855, %v2554
    %v2586 = vadd.f32 %v1859, %v2558
    %v2587 = vadd.f32 %v1863, %v2562
    %v2588 = vadd.f32 %v1867, %v2566
    %v2589 = vadd.f32 %v1871, %v2570
    %v2590 = vadd.f32 %v1875, %v2574
    %v2591 = vadd.f32 %v1879, %v2578
    %v2592 = vrot.slane %v169, 1
    %v2593 = vrot.slane %v170, 1
    %v2594 = vrot.slane %v171, 1
    %v2595 = vrot.slane %v172, 1
    %v2596 = vrot.slane %v173, 1
    %v2597 = vrot.slane %v174, 1
    %v2598 = vrot.slane %v175, 1
    %v2599 = vrot.slane %v176, 1
    %v2600 = vrot.slane %v177, 1
    %v2601 = vrot.slane %v178, 1
    %v2602 = vrot.slane %v179, 1
    %v2603 = vrot.slane %v180, 1
    %vm2604 = vcmp.lt.s32.totalorder %v182, 7
    %v2605 = vsel %vm2604, %v2602, %v2603
    %v2606 = vsel %vm2604, %v2601, %v2602
    %v2607 = vsel %vm2604, %v2600, %v2601
    %v2608 = vsel %vm2604, %v2599, %v2600
    %v2609 = vsel %vm2604, %v2598, %v2599
    %v2610 = vsel %vm2604, %v2597, %v2598
    %v2611 = vsel %vm2604, %v2596, %v2597
    %v2612 = vsel %vm2604, %v2595, %v2596
    %v2613 = vsel %vm2604, %v2594, %v2595
    %v2614 = vsel %vm2604, %v2593, %v2594
    %v2615 = vsel %vm2604, %v2592, %v2593
    %v2616 = vsel %vm2604, %v2603, %v2592
    %vm2617 = vcmp.ge.s32.totalorder %v326, 4294967295
    %vm2618 = vcmp.ge.s32.totalorder %v327, 4294967295
    %vm2619 = vcmp.ge.s32.totalorder %v328, 4294967295
    %vm2620 = vcmp.ge.s32.totalorder %v329, 4294967295
    %vm2621 = vcmp.ge.s32.totalorder %v330, 4294967295
    %vm2622 = vcmp.ge.s32.totalorder %v331, 4294967295
    %vm2623 = vcmp.ge.s32.totalorder %v332, 4294967295
    %vm2624 = vcmp.ge.s32.totalorder %v333, 4294967295
    %vm2625 = vcmp.ge.s32.totalorder %v334, 4294967295
    %vm2626 = vcmp.ge.s32.totalorder %v335, 4294967295
    %vm2627 = vcmp.ge.s32.totalorder %v336, 4294967295
    %vm2628 = vcmp.ge.s32.totalorder %v337, 4294967295
    %vm2629 = vcmp.lt.s32.totalorder %v326, 31
    %vm2630 = vcmp.lt.s32.totalorder %v327, 31
    %vm2631 = vcmp.lt.s32.totalorder %v328, 31
    %vm2632 = vcmp.lt.s32.totalorder %v329, 31
    %vm2633 = vcmp.lt.s32.totalorder %v330, 31
    %vm2634 = vcmp.lt.s32.totalorder %v331, 31
    %vm2635 = vcmp.lt.s32.totalorder %v332, 31
    %vm2636 = vcmp.lt.s32.totalorder %v333, 31
    %vm2637 = vcmp.lt.s32.totalorder %v334, 31
    %vm2638 = vcmp.lt.s32.totalorder %v335, 31
    %vm2639 = vcmp.lt.s32.totalorder %v336, 31
    %vm2640 = vcmp.lt.s32.totalorder %v337, 31
    %vm2641 = vmand %vm2617, %vm2629
    %vm2642 = vmand %vm2618, %vm2630
    %vm2643 = vmand %vm2619, %vm2631
    %vm2644 = vmand %vm2620, %vm2632
    %vm2645 = vmand %vm2621, %vm2633
    %vm2646 = vmand %vm2622, %vm2634
    %vm2647 = vmand %vm2623, %vm2635
    %vm2648 = vmand %vm2624, %vm2636
    %vm2649 = vmand %vm2625, %vm2637
    %vm2650 = vmand %vm2626, %vm2638
    %vm2651 = vmand %vm2627, %vm2639
    %vm2652 = vmand %vm2628, %vm2640
    %v2653 = vsel %vm2641, %v2615, 0.0
    %v2654 = vsel %vm2642, %v2614, 0.0
    %v2655 = vsel %vm2643, %v2613, 0.0
    %v2656 = vsel %vm2644, %v2612, 0.0
    %v2657 = vsel %vm2645, %v2611, 0.0
    %v2658 = vsel %vm2646, %v2610, 0.0
    %v2659 = vsel %vm2647, %v2609, 0.0
    %v2660 = vsel %vm2648, %v2608, 0.0
    %v2661 = vsel %vm2649, %v2607, 0.0
    %v2662 = vsel %vm2650, %v2606, 0.0
    %v2663 = vsel %vm2651, %v2605, 0.0
    %v2664 = vsel %vm2652, %v2616, 0.0
    %s2665 = scalar_lea.vmem [#allocation2], 384
    %v2666 = vld [vmem:[%s2665] sm:$0xff]
    %v2667 = vld [vmem:[%s2665 + $0x8] sm:$0xff]
    %v2668 = vld [vmem:[%s2665 + $0x10] sm:$0xff]
    %v2669 = vld [vmem:[%s2665 + $0x18] sm:$0xff]
    %v2670 = vld [vmem:[%s2665 + $0x20] sm:$0xff]
    %v2671 = vld [vmem:[%s2665 + $0x28] sm:$0xff]
    %v2672 = vld [vmem:[%s2665 + $0x30] sm:$0xff]
    %v2673 = vld [vmem:[%s2665 + $0x38] sm:$0xff]
    %v2674 = vld [vmem:[%s2665 + $0x40] sm:$0xff]
    %v2675 = vld [vmem:[%s2665 + $0x48] sm:$0xff]
    %v2676 = vld [vmem:[%s2665 + $0x50] sm:$0xff]
    %v2677 = vld [vmem:[%s2665 + $0x58] sm:$0xff]
    %v2678 = vld [vmem:[%s2665 + $0x60] sm:$0xff]
    %v2679 = vld [vmem:[%s2665 + $0x68] sm:$0xff]
    %v2680 = vld [vmem:[%s2665 + $0x70] sm:$0xff]
    %v2681 = vld [vmem:[%s2665 + $0x78] sm:$0xff]
    %v2682 = vand.u32 %v2681, 4294901760
    %2683 = vmatpush.msra.mxu0 %v2682
    %v2684 = vand.u32 %v2680, 4294901760
    %2685 = vmatpush.msra.mxu0 %v2684
    %v2686 = vand.u32 %v2679, 4294901760
    %2687 = vmatpush.msra.mxu0 %v2686
    %v2688 = vand.u32 %v2678, 4294901760
    %2689 = vmatpush.msra.mxu0 %v2688
    %v2690 = vand.u32 %v2677, 4294901760
    %2691 = vmatpush.msra.mxu0 %v2690
    %v2692 = vand.u32 %v2676, 4294901760
    %2693 = vmatpush.msra.mxu0 %v2692
    %v2694 = vand.u32 %v2675, 4294901760
    %2695 = vmatpush.msra.mxu0 %v2694
    %v2696 = vand.u32 %v2674, 4294901760
    %2697 = vmatpush.msra.mxu0 %v2696
    %v2698 = vand.u32 %v2673, 4294901760
    %2699 = vmatpush.msra.mxu0 %v2698
    %v2700 = vand.u32 %v2672, 4294901760
    %2701 = vmatpush.msra.mxu0 %v2700
    %v2702 = vand.u32 %v2671, 4294901760
    %2703 = vmatpush.msra.mxu0 %v2702
    %v2704 = vand.u32 %v2670, 4294901760
    %2705 = vmatpush.msra.mxu0 %v2704
    %v2706 = vand.u32 %v2669, 4294901760
    %2707 = vmatpush.msra.mxu0 %v2706
    %v2708 = vand.u32 %v2668, 4294901760
    %2709 = vmatpush.msra.mxu0 %v2708
    %v2710 = vand.u32 %v2667, 4294901760
    %2711 = vmatpush.msra.mxu0 %v2710
    %v2712 = vand.u32 %v2666, 4294901760
    %2713 = vmatpush.msra.mxu0 %v2712
    %v2714 = vand.u32 %v2653, 4294901760
    %v2715 = vsub.f32 %v2653, %v2714
    %v2716 = vand.u32 %v2715, 4294901760
    %v2717 = vsub.f32 %v2715, %v2716
    %v2718 = vand.u32 %v2717, 4294901760
    %2719 = vmatmul.f32.gmra.mxu0 %v2718
    %v2720 = vpop.f32.mrf.mxu0
    %v2721 = vadd.f32 0.0, %v2720
    %v2722 = vand.u32 %v2654, 4294901760
    %v2723 = vsub.f32 %v2654, %v2722
    %v2724 = vand.u32 %v2723, 4294901760
    %v2725 = vsub.f32 %v2723, %v2724
    %v2726 = vand.u32 %v2725, 4294901760
    %2727 = vmatmul.f32.gmra.mxu0 %v2726
    %v2728 = vpop.f32.mrf.mxu0
    %v2729 = vadd.f32 0.0, %v2728
    %v2730 = vand.u32 %v2655, 4294901760
    %v2731 = vsub.f32 %v2655, %v2730
    %v2732 = vand.u32 %v2731, 4294901760
    %v2733 = vsub.f32 %v2731, %v2732
    %v2734 = vand.u32 %v2733, 4294901760
    %2735 = vmatmul.f32.gmra.mxu0 %v2734
    %v2736 = vpop.f32.mrf.mxu0
    %v2737 = vadd.f32 0.0, %v2736
    %v2738 = vand.u32 %v2656, 4294901760
    %v2739 = vsub.f32 %v2656, %v2738
    %v2740 = vand.u32 %v2739, 4294901760
    %v2741 = vsub.f32 %v2739, %v2740
    %v2742 = vand.u32 %v2741, 4294901760
    %2743 = vmatmul.f32.gmra.mxu0 %v2742
    %v2744 = vpop.f32.mrf.mxu0
    %v2745 = vadd.f32 0.0, %v2744
    %v2746 = vand.u32 %v2657, 4294901760
    %v2747 = vsub.f32 %v2657, %v2746
    %v2748 = vand.u32 %v2747, 4294901760
    %v2749 = vsub.f32 %v2747, %v2748
    %v2750 = vand.u32 %v2749, 4294901760
    %2751 = vmatmul.f32.gmra.mxu0 %v2750
    %v2752 = vpop.f32.mrf.mxu0
    %v2753 = vadd.f32 0.0, %v2752
    %v2754 = vand.u32 %v2658, 4294901760
    %v2755 = vsub.f32 %v2658, %v2754
    %v2756 = vand.u32 %v2755, 4294901760
    %v2757 = vsub.f32 %v2755, %v2756
    %v2758 = vand.u32 %v2757, 4294901760
    %2759 = vmatmul.f32.gmra.mxu0 %v2758
    %v2760 = vpop.f32.mrf.mxu0
    %v2761 = vadd.f32 0.0, %v2760
    %v2762 = vand.u32 %v2659, 4294901760
    %v2763 = vsub.f32 %v2659, %v2762
    %v2764 = vand.u32 %v2763, 4294901760
    %v2765 = vsub.f32 %v2763, %v2764
    %v2766 = vand.u32 %v2765, 4294901760
    %2767 = vmatmul.f32.gmra.mxu0 %v2766
    %v2768 = vpop.f32.mrf.mxu0
    %v2769 = vadd.f32 0.0, %v2768
    %v2770 = vand.u32 %v2660, 4294901760
    %v2771 = vsub.f32 %v2660, %v2770
    %v2772 = vand.u32 %v2771, 4294901760
    %v2773 = vsub.f32 %v2771, %v2772
    %v2774 = vand.u32 %v2773, 4294901760
    %2775 = vmatmul.f32.gmra.mxu0 %v2774
    %v2776 = vpop.f32.mrf.mxu0
    %v2777 = vadd.f32 0.0, %v2776
    %v2778 = vand.u32 %v2661, 4294901760
    %v2779 = vsub.f32 %v2661, %v2778
    %v2780 = vand.u32 %v2779, 4294901760
    %v2781 = vsub.f32 %v2779, %v2780
    %v2782 = vand.u32 %v2781, 4294901760
    %2783 = vmatmul.f32.gmra.mxu0 %v2782
    %v2784 = vpop.f32.mrf.mxu0
    %v2785 = vadd.f32 0.0, %v2784
    %v2786 = vand.u32 %v2662, 4294901760
    %v2787 = vsub.f32 %v2662, %v2786
    %v2788 = vand.u32 %v2787, 4294901760
    %v2789 = vsub.f32 %v2787, %v2788
    %v2790 = vand.u32 %v2789, 4294901760
    %2791 = vmatmul.f32.gmra.mxu0 %v2790
    %v2792 = vpop.f32.mrf.mxu0
    %v2793 = vadd.f32 0.0, %v2792
    %v2794 = vand.u32 %v2663, 4294901760
    %v2795 = vsub.f32 %v2663, %v2794
    %v2796 = vand.u32 %v2795, 4294901760
    %v2797 = vsub.f32 %v2795, %v2796
    %v2798 = vand.u32 %v2797, 4294901760
    %2799 = vmatmul.f32.gmra.mxu0 %v2798
    %v2800 = vpop.f32.mrf.mxu0
    %v2801 = vadd.f32 0.0, %v2800
    %v2802 = vand.u32 %v2664, 4294901760
    %v2803 = vsub.f32 %v2664, %v2802
    %v2804 = vand.u32 %v2803, 4294901760
    %v2805 = vsub.f32 %v2803, %v2804
    %v2806 = vand.u32 %v2805, 4294901760
    %2807 = vmatmul.f32.gmra.mxu0 %v2806
    %v2808 = vpop.f32.mrf.mxu0
    %v2809 = vadd.f32 0.0, %v2808
    %2810 = vdwg.mxu0
    %v2811 = vand.u32 %v2681, 4294901760
    %v2812 = vsub.f32 %v2681, %v2811
    %v2813 = vand.u32 %v2812, 4294901760
    %v2814 = vsub.f32 %v2812, %v2813
    %v2815 = vand.u32 %v2814, 4294901760
    %2816 = vmatpush.msra.mxu0 %v2815
    %v2817 = vand.u32 %v2680, 4294901760
    %v2818 = vsub.f32 %v2680, %v2817
    %v2819 = vand.u32 %v2818, 4294901760
    %v2820 = vsub.f32 %v2818, %v2819
    %v2821 = vand.u32 %v2820, 4294901760
    %2822 = vmatpush.msra.mxu0 %v2821
    %v2823 = vand.u32 %v2679, 4294901760
    %v2824 = vsub.f32 %v2679, %v2823
    %v2825 = vand.u32 %v2824, 4294901760
    %v2826 = vsub.f32 %v2824, %v2825
    %v2827 = vand.u32 %v2826, 4294901760
    %2828 = vmatpush.msra.mxu0 %v2827
    %v2829 = vand.u32 %v2678, 4294901760
    %v2830 = vsub.f32 %v2678, %v2829
    %v2831 = vand.u32 %v2830, 4294901760
    %v2832 = vsub.f32 %v2830, %v2831
    %v2833 = vand.u32 %v2832, 4294901760
    %2834 = vmatpush.msra.mxu0 %v2833
    %v2835 = vand.u32 %v2677, 4294901760
    %v2836 = vsub.f32 %v2677, %v2835
    %v2837 = vand.u32 %v2836, 4294901760
    %v2838 = vsub.f32 %v2836, %v2837
    %v2839 = vand.u32 %v2838, 4294901760
    %2840 = vmatpush.msra.mxu0 %v2839
    %v2841 = vand.u32 %v2676, 4294901760
    %v2842 = vsub.f32 %v2676, %v2841
    %v2843 = vand.u32 %v2842, 4294901760
    %v2844 = vsub.f32 %v2842, %v2843
    %v2845 = vand.u32 %v2844, 4294901760
    %2846 = vmatpush.msra.mxu0 %v2845
    %v2847 = vand.u32 %v2675, 4294901760
    %v2848 = vsub.f32 %v2675, %v2847
    %v2849 = vand.u32 %v2848, 4294901760
    %v2850 = vsub.f32 %v2848, %v2849
    %v2851 = vand.u32 %v2850, 4294901760
    %2852 = vmatpush.msra.mxu0 %v2851
    %v2853 = vand.u32 %v2674, 4294901760
    %v2854 = vsub.f32 %v2674, %v2853
    %v2855 = vand.u32 %v2854, 4294901760
    %v2856 = vsub.f32 %v2854, %v2855
    %v2857 = vand.u32 %v2856, 4294901760
    %2858 = vmatpush.msra.mxu0 %v2857
    %v2859 = vand.u32 %v2673, 4294901760
    %v2860 = vsub.f32 %v2673, %v2859
    %v2861 = vand.u32 %v2860, 4294901760
    %v2862 = vsub.f32 %v2860, %v2861
    %v2863 = vand.u32 %v2862, 4294901760
    %2864 = vmatpush.msra.mxu0 %v2863
    %v2865 = vand.u32 %v2672, 4294901760
    %v2866 = vsub.f32 %v2672, %v2865
    %v2867 = vand.u32 %v2866, 4294901760
    %v2868 = vsub.f32 %v2866, %v2867
    %v2869 = vand.u32 %v2868, 4294901760
    %2870 = vmatpush.msra.mxu0 %v2869
    %v2871 = vand.u32 %v2671, 4294901760
    %v2872 = vsub.f32 %v2671, %v2871
    %v2873 = vand.u32 %v2872, 4294901760
    %v2874 = vsub.f32 %v2872, %v2873
    %v2875 = vand.u32 %v2874, 4294901760
    %2876 = vmatpush.msra.mxu0 %v2875
    %v2877 = vand.u32 %v2670, 4294901760
    %v2878 = vsub.f32 %v2670, %v2877
    %v2879 = vand.u32 %v2878, 4294901760
    %v2880 = vsub.f32 %v2878, %v2879
    %v2881 = vand.u32 %v2880, 4294901760
    %2882 = vmatpush.msra.mxu0 %v2881
    %v2883 = vand.u32 %v2669, 4294901760
    %v2884 = vsub.f32 %v2669, %v2883
    %v2885 = vand.u32 %v2884, 4294901760
    %v2886 = vsub.f32 %v2884, %v2885
    %v2887 = vand.u32 %v2886, 4294901760
    %2888 = vmatpush.msra.mxu0 %v2887
    %v2889 = vand.u32 %v2668, 4294901760
    %v2890 = vsub.f32 %v2668, %v2889
    %v2891 = vand.u32 %v2890, 4294901760
    %v2892 = vsub.f32 %v2890, %v2891
    %v2893 = vand.u32 %v2892, 4294901760
    %2894 = vmatpush.msra.mxu0 %v2893
    %v2895 = vand.u32 %v2667, 4294901760
    %v2896 = vsub.f32 %v2667, %v2895
    %v2897 = vand.u32 %v2896, 4294901760
    %v2898 = vsub.f32 %v2896, %v2897
    %v2899 = vand.u32 %v2898, 4294901760
    %2900 = vmatpush.msra.mxu0 %v2899
    %v2901 = vand.u32 %v2666, 4294901760
    %v2902 = vsub.f32 %v2666, %v2901
    %v2903 = vand.u32 %v2902, 4294901760
    %v2904 = vsub.f32 %v2902, %v2903
    %v2905 = vand.u32 %v2904, 4294901760
    %2906 = vmatpush.msra.mxu0 %v2905
    %v2907 = vand.u32 %v2653, 4294901760
    %2908 = vmatmul.f32.gmra.mxu0 %v2907
    %v2909 = vpop.f32.mrf.mxu0
    %v2910 = vadd.f32 %v2721, %v2909
    %v2911 = vand.u32 %v2654, 4294901760
    %2912 = vmatmul.f32.gmra.mxu0 %v2911
    %v2913 = vpop.f32.mrf.mxu0
    %v2914 = vadd.f32 %v2729, %v2913
    %v2915 = vand.u32 %v2655, 4294901760
    %2916 = vmatmul.f32.gmra.mxu0 %v2915
    %v2917 = vpop.f32.mrf.mxu0
    %v2918 = vadd.f32 %v2737, %v2917
    %v2919 = vand.u32 %v2656, 4294901760
    %2920 = vmatmul.f32.gmra.mxu0 %v2919
    %v2921 = vpop.f32.mrf.mxu0
    %v2922 = vadd.f32 %v2745, %v2921
    %v2923 = vand.u32 %v2657, 4294901760
    %2924 = vmatmul.f32.gmra.mxu0 %v2923
    %v2925 = vpop.f32.mrf.mxu0
    %v2926 = vadd.f32 %v2753, %v2925
    %v2927 = vand.u32 %v2658, 4294901760
    %2928 = vmatmul.f32.gmra.mxu0 %v2927
    %v2929 = vpop.f32.mrf.mxu0
    %v2930 = vadd.f32 %v2761, %v2929
    %v2931 = vand.u32 %v2659, 4294901760
    %2932 = vmatmul.f32.gmra.mxu0 %v2931
    %v2933 = vpop.f32.mrf.mxu0
    %v2934 = vadd.f32 %v2769, %v2933
    %v2935 = vand.u32 %v2660, 4294901760
    %2936 = vmatmul.f32.gmra.mxu0 %v2935
    %v2937 = vpop.f32.mrf.mxu0
    %v2938 = vadd.f32 %v2777, %v2937
    %v2939 = vand.u32 %v2661, 4294901760
    %2940 = vmatmul.f32.gmra.mxu0 %v2939
    %v2941 = vpop.f32.mrf.mxu0
    %v2942 = vadd.f32 %v2785, %v2941
    %v2943 = vand.u32 %v2662, 4294901760
    %2944 = vmatmul.f32.gmra.mxu0 %v2943
    %v2945 = vpop.f32.mrf.mxu0
    %v2946 = vadd.f32 %v2793, %v2945
    %v2947 = vand.u32 %v2663, 4294901760
    %2948 = vmatmul.f32.gmra.mxu0 %v2947
    %v2949 = vpop.f32.mrf.mxu0
    %v2950 = vadd.f32 %v2801, %v2949
    %v2951 = vand.u32 %v2664, 4294901760
    %2952 = vmatmul.f32.gmra.mxu0 %v2951
    %v2953 = vpop.f32.mrf.mxu0
    %v2954 = vadd.f32 %v2809, %v2953
    %2955 = vdwg.mxu0
    %v2956 = vand.u32 %v2681, 4294901760
    %v2957 = vsub.f32 %v2681, %v2956
    %2958 = vmatpush.msra.mxu0 %v2957
    %v2959 = vand.u32 %v2680, 4294901760
    %v2960 = vsub.f32 %v2680, %v2959
    %2961 = vmatpush.msra.mxu0 %v2960
    %v2962 = vand.u32 %v2679, 4294901760
    %v2963 = vsub.f32 %v2679, %v2962
    %2964 = vmatpush.msra.mxu0 %v2963
    %v2965 = vand.u32 %v2678, 4294901760
    %v2966 = vsub.f32 %v2678, %v2965
    %2967 = vmatpush.msra.mxu0 %v2966
    %v2968 = vand.u32 %v2677, 4294901760
    %v2969 = vsub.f32 %v2677, %v2968
    %2970 = vmatpush.msra.mxu0 %v2969
    %v2971 = vand.u32 %v2676, 4294901760
    %v2972 = vsub.f32 %v2676, %v2971
    %2973 = vmatpush.msra.mxu0 %v2972
    %v2974 = vand.u32 %v2675, 4294901760
    %v2975 = vsub.f32 %v2675, %v2974
    %2976 = vmatpush.msra.mxu0 %v2975
    %v2977 = vand.u32 %v2674, 4294901760
    %v2978 = vsub.f32 %v2674, %v2977
    %2979 = vmatpush.msra.mxu0 %v2978
    %v2980 = vand.u32 %v2673, 4294901760
    %v2981 = vsub.f32 %v2673, %v2980
    %2982 = vmatpush.msra.mxu0 %v2981
    %v2983 = vand.u32 %v2672, 4294901760
    %v2984 = vsub.f32 %v2672, %v2983
    %2985 = vmatpush.msra.mxu0 %v2984
    %v2986 = vand.u32 %v2671, 4294901760
    %v2987 = vsub.f32 %v2671, %v2986
    %2988 = vmatpush.msra.mxu0 %v2987
    %v2989 = vand.u32 %v2670, 4294901760
    %v2990 = vsub.f32 %v2670, %v2989
    %2991 = vmatpush.msra.mxu0 %v2990
    %v2992 = vand.u32 %v2669, 4294901760
    %v2993 = vsub.f32 %v2669, %v2992
    %2994 = vmatpush.msra.mxu0 %v2993
    %v2995 = vand.u32 %v2668, 4294901760
    %v2996 = vsub.f32 %v2668, %v2995
    %2997 = vmatpush.msra.mxu0 %v2996
    %v2998 = vand.u32 %v2667, 4294901760
    %v2999 = vsub.f32 %v2667, %v2998
    %3000 = vmatpush.msra.mxu0 %v2999
    %v3001 = vand.u32 %v2666, 4294901760
    %v3002 = vsub.f32 %v2666, %v3001
    %3003 = vmatpush.msra.mxu0 %v3002
    %v3004 = vand.u32 %v2653, 4294901760
    %v3005 = vsub.f32 %v2653, %v3004
    %3006 = vmatmul.f32.gmra.mxu0 %v3005
    %v3007 = vpop.f32.mrf.mxu0
    %v3008 = vadd.f32 %v2910, %v3007
    %v3009 = vand.u32 %v2654, 4294901760
    %v3010 = vsub.f32 %v2654, %v3009
    %3011 = vmatmul.f32.gmra.mxu0 %v3010
    %v3012 = vpop.f32.mrf.mxu0
    %v3013 = vadd.f32 %v2914, %v3012
    %v3014 = vand.u32 %v2655, 4294901760
    %v3015 = vsub.f32 %v2655, %v3014
    %3016 = vmatmul.f32.gmra.mxu0 %v3015
    %v3017 = vpop.f32.mrf.mxu0
    %v3018 = vadd.f32 %v2918, %v3017
    %v3019 = vand.u32 %v2656, 4294901760
    %v3020 = vsub.f32 %v2656, %v3019
    %3021 = vmatmul.f32.gmra.mxu0 %v3020
    %v3022 = vpop.f32.mrf.mxu0
    %v3023 = vadd.f32 %v2922, %v3022
    %v3024 = vand.u32 %v2657, 4294901760
    %v3025 = vsub.f32 %v2657, %v3024
    %3026 = vmatmul.f32.gmra.mxu0 %v3025
    %v3027 = vpop.f32.mrf.mxu0
    %v3028 = vadd.f32 %v2926, %v3027
    %v3029 = vand.u32 %v2658, 4294901760
    %v3030 = vsub.f32 %v2658, %v3029
    %3031 = vmatmul.f32.gmra.mxu0 %v3030
    %v3032 = vpop.f32.mrf.mxu0
    %v3033 = vadd.f32 %v2930, %v3032
    %v3034 = vand.u32 %v2659, 4294901760
    %v3035 = vsub.f32 %v2659, %v3034
    %3036 = vmatmul.f32.gmra.mxu0 %v3035
    %v3037 = vpop.f32.mrf.mxu0
    %v3038 = vadd.f32 %v2934, %v3037
    %v3039 = vand.u32 %v2660, 4294901760
    %v3040 = vsub.f32 %v2660, %v3039
    %3041 = vmatmul.f32.gmra.mxu0 %v3040
    %v3042 = vpop.f32.mrf.mxu0
    %v3043 = vadd.f32 %v2938, %v3042
    %v3044 = vand.u32 %v2661, 4294901760
    %v3045 = vsub.f32 %v2661, %v3044
    %3046 = vmatmul.f32.gmra.mxu0 %v3045
    %v3047 = vpop.f32.mrf.mxu0
    %v3048 = vadd.f32 %v2942, %v3047
    %v3049 = vand.u32 %v2662, 4294901760
    %v3050 = vsub.f32 %v2662, %v3049
    %3051 = vmatmul.f32.gmra.mxu0 %v3050
    %v3052 = vpop.f32.mrf.mxu0
    %v3053 = vadd.f32 %v2946, %v3052
    %v3054 = vand.u32 %v2663, 4294901760
    %v3055 = vsub.f32 %v2663, %v3054
    %3056 = vmatmul.f32.gmra.mxu0 %v3055
    %v3057 = vpop.f32.mrf.mxu0
    %v3058 = vadd.f32 %v2950, %v3057
    %v3059 = vand.u32 %v2664, 4294901760
    %v3060 = vsub.f32 %v2664, %v3059
    %3061 = vmatmul.f32.gmra.mxu0 %v3060
    %v3062 = vpop.f32.mrf.mxu0
    %v3063 = vadd.f32 %v2954, %v3062
    %3064 = vdwg.mxu0
    %v3065 = vand.u32 %v2681, 4294901760
    %3066 = vmatpush.msra.mxu0 %v3065
    %v3067 = vand.u32 %v2680, 4294901760
    %3068 = vmatpush.msra.mxu0 %v3067
    %v3069 = vand.u32 %v2679, 4294901760
    %3070 = vmatpush.msra.mxu0 %v3069
    %v3071 = vand.u32 %v2678, 4294901760
    %3072 = vmatpush.msra.mxu0 %v3071
    %v3073 = vand.u32 %v2677, 4294901760
    %3074 = vmatpush.msra.mxu0 %v3073
    %v3075 = vand.u32 %v2676, 4294901760
    %3076 = vmatpush.msra.mxu0 %v3075
    %v3077 = vand.u32 %v2675, 4294901760
    %3078 = vmatpush.msra.mxu0 %v3077
    %v3079 = vand.u32 %v2674, 4294901760
    %3080 = vmatpush.msra.mxu0 %v3079
    %v3081 = vand.u32 %v2673, 4294901760
    %3082 = vmatpush.msra.mxu0 %v3081
    %v3083 = vand.u32 %v2672, 4294901760
    %3084 = vmatpush.msra.mxu0 %v3083
    %v3085 = vand.u32 %v2671, 4294901760
    %3086 = vmatpush.msra.mxu0 %v3085
    %v3087 = vand.u32 %v2670, 4294901760
    %3088 = vmatpush.msra.mxu0 %v3087
    %v3089 = vand.u32 %v2669, 4294901760
    %3090 = vmatpush.msra.mxu0 %v3089
    %v3091 = vand.u32 %v2668, 4294901760
    %3092 = vmatpush.msra.mxu0 %v3091
    %v3093 = vand.u32 %v2667, 4294901760
    %3094 = vmatpush.msra.mxu0 %v3093
    %v3095 = vand.u32 %v2666, 4294901760
    %3096 = vmatpush.msra.mxu0 %v3095
    %v3097 = vand.u32 %v2653, 4294901760
    %v3098 = vsub.f32 %v2653, %v3097
    %v3099 = vand.u32 %v3098, 4294901760
    %3100 = vmatmul.f32.gmra.mxu0 %v3099
    %v3101 = vpop.f32.mrf.mxu0
    %v3102 = vadd.f32 %v3008, %v3101
    %v3103 = vand.u32 %v2654, 4294901760
    %v3104 = vsub.f32 %v2654, %v3103
    %v3105 = vand.u32 %v3104, 4294901760
    %3106 = vmatmul.f32.gmra.mxu0 %v3105
    %v3107 = vpop.f32.mrf.mxu0
    %v3108 = vadd.f32 %v3013, %v3107
    %v3109 = vand.u32 %v2655, 4294901760
    %v3110 = vsub.f32 %v2655, %v3109
    %v3111 = vand.u32 %v3110, 4294901760
    %3112 = vmatmul.f32.gmra.mxu0 %v3111
    %v3113 = vpop.f32.mrf.mxu0
    %v3114 = vadd.f32 %v3018, %v3113
    %v3115 = vand.u32 %v2656, 4294901760
    %v3116 = vsub.f32 %v2656, %v3115
    %v3117 = vand.u32 %v3116, 4294901760
    %3118 = vmatmul.f32.gmra.mxu0 %v3117
    %v3119 = vpop.f32.mrf.mxu0
    %v3120 = vadd.f32 %v3023, %v3119
    %v3121 = vand.u32 %v2657, 4294901760
    %v3122 = vsub.f32 %v2657, %v3121
    %v3123 = vand.u32 %v3122, 4294901760
    %3124 = vmatmul.f32.gmra.mxu0 %v3123
    %v3125 = vpop.f32.mrf.mxu0
    %v3126 = vadd.f32 %v3028, %v3125
    %v3127 = vand.u32 %v2658, 4294901760
    %v3128 = vsub.f32 %v2658, %v3127
    %v3129 = vand.u32 %v3128, 4294901760
    %3130 = vmatmul.f32.gmra.mxu0 %v3129
    %v3131 = vpop.f32.mrf.mxu0
    %v3132 = vadd.f32 %v3033, %v3131
    %v3133 = vand.u32 %v2659, 4294901760
    %v3134 = vsub.f32 %v2659, %v3133
    %v3135 = vand.u32 %v3134, 4294901760
    %3136 = vmatmul.f32.gmra.mxu0 %v3135
    %v3137 = vpop.f32.mrf.mxu0
    %v3138 = vadd.f32 %v3038, %v3137
    %v3139 = vand.u32 %v2660, 4294901760
    %v3140 = vsub.f32 %v2660, %v3139
    %v3141 = vand.u32 %v3140, 4294901760
    %3142 = vmatmul.f32.gmra.mxu0 %v3141
    %v3143 = vpop.f32.mrf.mxu0
    %v3144 = vadd.f32 %v3043, %v3143
    %v3145 = vand.u32 %v2661, 4294901760
    %v3146 = vsub.f32 %v2661, %v3145
    %v3147 = vand.u32 %v3146, 4294901760
    %3148 = vmatmul.f32.gmra.mxu0 %v3147
    %v3149 = vpop.f32.mrf.mxu0
    %v3150 = vadd.f32 %v3048, %v3149
    %v3151 = vand.u32 %v2662, 4294901760
    %v3152 = vsub.f32 %v2662, %v3151
    %v3153 = vand.u32 %v3152, 4294901760
    %3154 = vmatmul.f32.gmra.mxu0 %v3153
    %v3155 = vpop.f32.mrf.mxu0
    %v3156 = vadd.f32 %v3053, %v3155
    %v3157 = vand.u32 %v2663, 4294901760
    %v3158 = vsub.f32 %v2663, %v3157
    %v3159 = vand.u32 %v3158, 4294901760
    %3160 = vmatmul.f32.gmra.mxu0 %v3159
    %v3161 = vpop.f32.mrf.mxu0
    %v3162 = vadd.f32 %v3058, %v3161
    %v3163 = vand.u32 %v2664, 4294901760
    %v3164 = vsub.f32 %v2664, %v3163
    %v3165 = vand.u32 %v3164, 4294901760
    %3166 = vmatmul.f32.gmra.mxu0 %v3165
    %v3167 = vpop.f32.mrf.mxu0
    %v3168 = vadd.f32 %v3063, %v3167
    %3169 = vdwg.mxu0
    %v3170 = vand.u32 %v2681, 4294901760
    %v3171 = vsub.f32 %v2681, %v3170
    %v3172 = vand.u32 %v3171, 4294901760
    %3173 = vmatpush.msra.mxu0 %v3172
    %v3174 = vand.u32 %v2680, 4294901760
    %v3175 = vsub.f32 %v2680, %v3174
    %v3176 = vand.u32 %v3175, 4294901760
    %3177 = vmatpush.msra.mxu0 %v3176
    %v3178 = vand.u32 %v2679, 4294901760
    %v3179 = vsub.f32 %v2679, %v3178
    %v3180 = vand.u32 %v3179, 4294901760
    %3181 = vmatpush.msra.mxu0 %v3180
    %v3182 = vand.u32 %v2678, 4294901760
    %v3183 = vsub.f32 %v2678, %v3182
    %v3184 = vand.u32 %v3183, 4294901760
    %3185 = vmatpush.msra.mxu0 %v3184
    %v3186 = vand.u32 %v2677, 4294901760
    %v3187 = vsub.f32 %v2677, %v3186
    %v3188 = vand.u32 %v3187, 4294901760
    %3189 = vmatpush.msra.mxu0 %v3188
    %v3190 = vand.u32 %v2676, 4294901760
    %v3191 = vsub.f32 %v2676, %v3190
    %v3192 = vand.u32 %v3191, 4294901760
    %3193 = vmatpush.msra.mxu0 %v3192
    %v3194 = vand.u32 %v2675, 4294901760
    %v3195 = vsub.f32 %v2675, %v3194
    %v3196 = vand.u32 %v3195, 4294901760
    %3197 = vmatpush.msra.mxu0 %v3196
    %v3198 = vand.u32 %v2674, 4294901760
    %v3199 = vsub.f32 %v2674, %v3198
    %v3200 = vand.u32 %v3199, 4294901760
    %3201 = vmatpush.msra.mxu0 %v3200
    %v3202 = vand.u32 %v2673, 4294901760
    %v3203 = vsub.f32 %v2673, %v3202
    %v3204 = vand.u32 %v3203, 4294901760
    %3205 = vmatpush.msra.mxu0 %v3204
    %v3206 = vand.u32 %v2672, 4294901760
    %v3207 = vsub.f32 %v2672, %v3206
    %v3208 = vand.u32 %v3207, 4294901760
    %3209 = vmatpush.msra.mxu0 %v3208
    %v3210 = vand.u32 %v2671, 4294901760
    %v3211 = vsub.f32 %v2671, %v3210
    %v3212 = vand.u32 %v3211, 4294901760
    %3213 = vmatpush.msra.mxu0 %v3212
    %v3214 = vand.u32 %v2670, 4294901760
    %v3215 = vsub.f32 %v2670, %v3214
    %v3216 = vand.u32 %v3215, 4294901760
    %3217 = vmatpush.msra.mxu0 %v3216
    %v3218 = vand.u32 %v2669, 4294901760
    %v3219 = vsub.f32 %v2669, %v3218
    %v3220 = vand.u32 %v3219, 4294901760
    %3221 = vmatpush.msra.mxu0 %v3220
    %v3222 = vand.u32 %v2668, 4294901760
    %v3223 = vsub.f32 %v2668, %v3222
    %v3224 = vand.u32 %v3223, 4294901760
    %3225 = vmatpush.msra.mxu0 %v3224
    %v3226 = vand.u32 %v2667, 4294901760
    %v3227 = vsub.f32 %v2667, %v3226
    %v3228 = vand.u32 %v3227, 4294901760
    %3229 = vmatpush.msra.mxu0 %v3228
    %v3230 = vand.u32 %v2666, 4294901760
    %v3231 = vsub.f32 %v2666, %v3230
    %v3232 = vand.u32 %v3231, 4294901760
    %3233 = vmatpush.msra.mxu0 %v3232
    %v3234 = vand.u32 %v2653, 4294901760
    %3235 = vmatmul.f32.gmra.mxu0 %v3234
    %v3236 = vpop.f32.mrf.mxu0
    %v3237 = vadd.f32 %v3102, %v3236
    %v3238 = vand.u32 %v2654, 4294901760
    %3239 = vmatmul.f32.gmra.mxu0 %v3238
    %v3240 = vpop.f32.mrf.mxu0
    %v3241 = vadd.f32 %v3108, %v3240
    %v3242 = vand.u32 %v2655, 4294901760
    %3243 = vmatmul.f32.gmra.mxu0 %v3242
    %v3244 = vpop.f32.mrf.mxu0
    %v3245 = vadd.f32 %v3114, %v3244
    %v3246 = vand.u32 %v2656, 4294901760
    %3247 = vmatmul.f32.gmra.mxu0 %v3246
    %v3248 = vpop.f32.mrf.mxu0
    %v3249 = vadd.f32 %v3120, %v3248
    %v3250 = vand.u32 %v2657, 4294901760
    %3251 = vmatmul.f32.gmra.mxu0 %v3250
    %v3252 = vpop.f32.mrf.mxu0
    %v3253 = vadd.f32 %v3126, %v3252
    %v3254 = vand.u32 %v2658, 4294901760
    %3255 = vmatmul.f32.gmra.mxu0 %v3254
    %v3256 = vpop.f32.mrf.mxu0
    %v3257 = vadd.f32 %v3132, %v3256
    %v3258 = vand.u32 %v2659, 4294901760
    %3259 = vmatmul.f32.gmra.mxu0 %v3258
    %v3260 = vpop.f32.mrf.mxu0
    %v3261 = vadd.f32 %v3138, %v3260
    %v3262 = vand.u32 %v2660, 4294901760
    %3263 = vmatmul.f32.gmra.mxu0 %v3262
    %v3264 = vpop.f32.mrf.mxu0
    %v3265 = vadd.f32 %v3144, %v3264
    %v3266 = vand.u32 %v2661, 4294901760
    %3267 = vmatmul.f32.gmra.mxu0 %v3266
    %v3268 = vpop.f32.mrf.mxu0
    %v3269 = vadd.f32 %v3150, %v3268
    %v3270 = vand.u32 %v2662, 4294901760
    %3271 = vmatmul.f32.gmra.mxu0 %v3270
    %v3272 = vpop.f32.mrf.mxu0
    %v3273 = vadd.f32 %v3156, %v3272
    %v3274 = vand.u32 %v2663, 4294901760
    %3275 = vmatmul.f32.gmra.mxu0 %v3274
    %v3276 = vpop.f32.mrf.mxu0
    %v3277 = vadd.f32 %v3162, %v3276
    %v3278 = vand.u32 %v2664, 4294901760
    %3279 = vmatmul.f32.gmra.mxu0 %v3278
    %v3280 = vpop.f32.mrf.mxu0
    %v3281 = vadd.f32 %v3168, %v3280
    %3282 = vdwg.mxu0
    %v3283 = vand.u32 %v2681, 4294901760
    %3284 = vmatpush.msra.mxu0 %v3283
    %v3285 = vand.u32 %v2680, 4294901760
    %3286 = vmatpush.msra.mxu0 %v3285
    %v3287 = vand.u32 %v2679, 4294901760
    %3288 = vmatpush.msra.mxu0 %v3287
    %v3289 = vand.u32 %v2678, 4294901760
    %3290 = vmatpush.msra.mxu0 %v3289
    %v3291 = vand.u32 %v2677, 4294901760
    %3292 = vmatpush.msra.mxu0 %v3291
    %v3293 = vand.u32 %v2676, 4294901760
    %3294 = vmatpush.msra.mxu0 %v3293
    %v3295 = vand.u32 %v2675, 4294901760
    %3296 = vmatpush.msra.mxu0 %v3295
    %v3297 = vand.u32 %v2674, 4294901760
    %3298 = vmatpush.msra.mxu0 %v3297
    %v3299 = vand.u32 %v2673, 4294901760
    %3300 = vmatpush.msra.mxu0 %v3299
    %v3301 = vand.u32 %v2672, 4294901760
    %3302 = vmatpush.msra.mxu0 %v3301
    %v3303 = vand.u32 %v2671, 4294901760
    %3304 = vmatpush.msra.mxu0 %v3303
    %v3305 = vand.u32 %v2670, 4294901760
    %3306 = vmatpush.msra.mxu0 %v3305
    %v3307 = vand.u32 %v2669, 4294901760
    %3308 = vmatpush.msra.mxu0 %v3307
    %v3309 = vand.u32 %v2668, 4294901760
    %3310 = vmatpush.msra.mxu0 %v3309
    %v3311 = vand.u32 %v2667, 4294901760
    %3312 = vmatpush.msra.mxu0 %v3311
    %v3313 = vand.u32 %v2666, 4294901760
    %3314 = vmatpush.msra.mxu0 %v3313
    %v3315 = vand.u32 %v2653, 4294901760
    %3316 = vmatmul.f32.gmra.mxu0 %v3315
    %v3317 = vpop.f32.mrf.mxu0
    %v3318 = vadd.f32 %v3237, %v3317
    %v3319 = vand.u32 %v2654, 4294901760
    %3320 = vmatmul.f32.gmra.mxu0 %v3319
    %v3321 = vpop.f32.mrf.mxu0
    %v3322 = vadd.f32 %v3241, %v3321
    %v3323 = vand.u32 %v2655, 4294901760
    %3324 = vmatmul.f32.gmra.mxu0 %v3323
    %v3325 = vpop.f32.mrf.mxu0
    %v3326 = vadd.f32 %v3245, %v3325
    %v3327 = vand.u32 %v2656, 4294901760
    %3328 = vmatmul.f32.gmra.mxu0 %v3327
    %v3329 = vpop.f32.mrf.mxu0
    %v3330 = vadd.f32 %v3249, %v3329
    %v3331 = vand.u32 %v2657, 4294901760
    %3332 = vmatmul.f32.gmra.mxu0 %v3331
    %v3333 = vpop.f32.mrf.mxu0
    %v3334 = vadd.f32 %v3253, %v3333
    %v3335 = vand.u32 %v2658, 4294901760
    %3336 = vmatmul.f32.gmra.mxu0 %v3335
    %v3337 = vpop.f32.mrf.mxu0
    %v3338 = vadd.f32 %v3257, %v3337
    %v3339 = vand.u32 %v2659, 4294901760
    %3340 = vmatmul.f32.gmra.mxu0 %v3339
    %v3341 = vpop.f32.mrf.mxu0
    %v3342 = vadd.f32 %v3261, %v3341
    %v3343 = vand.u32 %v2660, 4294901760
    %3344 = vmatmul.f32.gmra.mxu0 %v3343
    %v3345 = vpop.f32.mrf.mxu0
    %v3346 = vadd.f32 %v3265, %v3345
    %v3347 = vand.u32 %v2661, 4294901760
    %3348 = vmatmul.f32.gmra.mxu0 %v3347
    %v3349 = vpop.f32.mrf.mxu0
    %v3350 = vadd.f32 %v3269, %v3349
    %v3351 = vand.u32 %v2662, 4294901760
    %3352 = vmatmul.f32.gmra.mxu0 %v3351
    %v3353 = vpop.f32.mrf.mxu0
    %v3354 = vadd.f32 %v3273, %v3353
    %v3355 = vand.u32 %v2663, 4294901760
    %3356 = vmatmul.f32.gmra.mxu0 %v3355
    %v3357 = vpop.f32.mrf.mxu0
    %v3358 = vadd.f32 %v3277, %v3357
    %v3359 = vand.u32 %v2664, 4294901760
    %3360 = vmatmul.f32.gmra.mxu0 %v3359
    %v3361 = vpop.f32.mrf.mxu0
    %v3362 = vadd.f32 %v3281, %v3361
    %3363 = vdwg.mxu0
    %v3364 = vadd.f32 %v2580, %v3318
    %v3365 = vadd.f32 %v2581, %v3322
    %v3366 = vadd.f32 %v2582, %v3326
    %v3367 = vadd.f32 %v2583, %v3330
    %v3368 = vadd.f32 %v2584, %v3334
    %v3369 = vadd.f32 %v2585, %v3338
    %v3370 = vadd.f32 %v2586, %v3342
    %v3371 = vadd.f32 %v2587, %v3346
    %v3372 = vadd.f32 %v2588, %v3350
    %v3373 = vadd.f32 %v2589, %v3354
    %v3374 = vadd.f32 %v2590, %v3358
    %v3375 = vadd.f32 %v2591, %v3362
    %v3376 = vrot.slane %v169, 2
    %v3377 = vrot.slane %v170, 2
    %v3378 = vrot.slane %v171, 2
    %v3379 = vrot.slane %v172, 2
    %v3380 = vrot.slane %v173, 2
    %v3381 = vrot.slane %v174, 2
    %v3382 = vrot.slane %v175, 2
    %v3383 = vrot.slane %v176, 2
    %v3384 = vrot.slane %v177, 2
    %v3385 = vrot.slane %v178, 2
    %v3386 = vrot.slane %v179, 2
    %v3387 = vrot.slane %v180, 2
    %vm3388 = vcmp.lt.s32.totalorder %v182, 6
    %v3389 = vsel %vm3388, %v3386, %v3387
    %v3390 = vsel %vm3388, %v3385, %v3386
    %v3391 = vsel %vm3388, %v3384, %v3385
    %v3392 = vsel %vm3388, %v3383, %v3384
    %v3393 = vsel %vm3388, %v3382, %v3383
    %v3394 = vsel %vm3388, %v3381, %v3382
    %v3395 = vsel %vm3388, %v3380, %v3381
    %v3396 = vsel %vm3388, %v3379, %v3380
    %v3397 = vsel %vm3388, %v3378, %v3379
    %v3398 = vsel %vm3388, %v3377, %v3378
    %v3399 = vsel %vm3388, %v3376, %v3377
    %v3400 = vsel %vm3388, %v3387, %v3376
    %vm3401 = vcmp.ge.s32.totalorder %v326, 4294967294
    %vm3402 = vcmp.ge.s32.totalorder %v327, 4294967294
    %vm3403 = vcmp.ge.s32.totalorder %v328, 4294967294
    %vm3404 = vcmp.ge.s32.totalorder %v329, 4294967294
    %vm3405 = vcmp.ge.s32.totalorder %v330, 4294967294
    %vm3406 = vcmp.ge.s32.totalorder %v331, 4294967294
    %vm3407 = vcmp.ge.s32.totalorder %v332, 4294967294
    %vm3408 = vcmp.ge.s32.totalorder %v333, 4294967294
    %vm3409 = vcmp.ge.s32.totalorder %v334, 4294967294
    %vm3410 = vcmp.ge.s32.totalorder %v335, 4294967294
    %vm3411 = vcmp.ge.s32.totalorder %v336, 4294967294
    %vm3412 = vcmp.ge.s32.totalorder %v337, 4294967294
    %vm3413 = vcmp.lt.s32.totalorder %v326, 30
    %vm3414 = vcmp.lt.s32.totalorder %v327, 30
    %vm3415 = vcmp.lt.s32.totalorder %v328, 30
    %vm3416 = vcmp.lt.s32.totalorder %v329, 30
    %vm3417 = vcmp.lt.s32.totalorder %v330, 30
    %vm3418 = vcmp.lt.s32.totalorder %v331, 30
    %vm3419 = vcmp.lt.s32.totalorder %v332, 30
    %vm3420 = vcmp.lt.s32.totalorder %v333, 30
    %vm3421 = vcmp.lt.s32.totalorder %v334, 30
    %vm3422 = vcmp.lt.s32.totalorder %v335, 30
    %vm3423 = vcmp.lt.s32.totalorder %v336, 30
    %vm3424 = vcmp.lt.s32.totalorder %v337, 30
    %vm3425 = vmand %vm3401, %vm3413
    %vm3426 = vmand %vm3402, %vm3414
    %vm3427 = vmand %vm3403, %vm3415
    %vm3428 = vmand %vm3404, %vm3416
    %vm3429 = vmand %vm3405, %vm3417
    %vm3430 = vmand %vm3406, %vm3418
    %vm3431 = vmand %vm3407, %vm3419
    %vm3432 = vmand %vm3408, %vm3420
    %vm3433 = vmand %vm3409, %vm3421
    %vm3434 = vmand %vm3410, %vm3422
    %vm3435 = vmand %vm3411, %vm3423
    %vm3436 = vmand %vm3412, %vm3424
    %v3437 = vsel %vm3425, %v3399, 0.0
    %v3438 = vsel %vm3426, %v3398, 0.0
    %v3439 = vsel %vm3427, %v3397, 0.0
    %v3440 = vsel %vm3428, %v3396, 0.0
    %v3441 = vsel %vm3429, %v3395, 0.0
    %v3442 = vsel %vm3430, %v3394, 0.0
    %v3443 = vsel %vm3431, %v3393, 0.0
    %v3444 = vsel %vm3432, %v3392, 0.0
    %v3445 = vsel %vm3433, %v3391, 0.0
    %v3446 = vsel %vm3434, %v3390, 0.0
    %v3447 = vsel %vm3435, %v3389, 0.0
    %v3448 = vsel %vm3436, %v3400, 0.0
    %s3449 = scalar_lea.vmem [#allocation2], 512
    %v3450 = vld [vmem:[%s3449] sm:$0xff]
    %v3451 = vld [vmem:[%s3449 + $0x8] sm:$0xff]
    %v3452 = vld [vmem:[%s3449 + $0x10] sm:$0xff]
    %v3453 = vld [vmem:[%s3449 + $0x18] sm:$0xff]
    %v3454 = vld [vmem:[%s3449 + $0x20] sm:$0xff]
    %v3455 = vld [vmem:[%s3449 + $0x28] sm:$0xff]
    %v3456 = vld [vmem:[%s3449 + $0x30] sm:$0xff]
    %v3457 = vld [vmem:[%s3449 + $0x38] sm:$0xff]
    %v3458 = vld [vmem:[%s3449 + $0x40] sm:$0xff]
    %v3459 = vld [vmem:[%s3449 + $0x48] sm:$0xff]
    %v3460 = vld [vmem:[%s3449 + $0x50] sm:$0xff]
    %v3461 = vld [vmem:[%s3449 + $0x58] sm:$0xff]
    %v3462 = vld [vmem:[%s3449 + $0x60] sm:$0xff]
    %v3463 = vld [vmem:[%s3449 + $0x68] sm:$0xff]
    %v3464 = vld [vmem:[%s3449 + $0x70] sm:$0xff]
    %v3465 = vld [vmem:[%s3449 + $0x78] sm:$0xff]
    %v3466 = vand.u32 %v3465, 4294901760
    %3467 = vmatpush.msra.mxu0 %v3466
    %v3468 = vand.u32 %v3464, 4294901760
    %3469 = vmatpush.msra.mxu0 %v3468
    %v3470 = vand.u32 %v3463, 4294901760
    %3471 = vmatpush.msra.mxu0 %v3470
    %v3472 = vand.u32 %v3462, 4294901760
    %3473 = vmatpush.msra.mxu0 %v3472
    %v3474 = vand.u32 %v3461, 4294901760
    %3475 = vmatpush.msra.mxu0 %v3474
    %v3476 = vand.u32 %v3460, 4294901760
    %3477 = vmatpush.msra.mxu0 %v3476
    %v3478 = vand.u32 %v3459, 4294901760
    %3479 = vmatpush.msra.mxu0 %v3478
    %v3480 = vand.u32 %v3458, 4294901760
    %3481 = vmatpush.msra.mxu0 %v3480
    %v3482 = vand.u32 %v3457, 4294901760
    %3483 = vmatpush.msra.mxu0 %v3482
    %v3484 = vand.u32 %v3456, 4294901760
    %3485 = vmatpush.msra.mxu0 %v3484
    %v3486 = vand.u32 %v3455, 4294901760
    %3487 = vmatpush.msra.mxu0 %v3486
    %v3488 = vand.u32 %v3454, 4294901760
    %3489 = vmatpush.msra.mxu0 %v3488
    %v3490 = vand.u32 %v3453, 4294901760
    %3491 = vmatpush.msra.mxu0 %v3490
    %v3492 = vand.u32 %v3452, 4294901760
    %3493 = vmatpush.msra.mxu0 %v3492
    %v3494 = vand.u32 %v3451, 4294901760
    %3495 = vmatpush.msra.mxu0 %v3494
    %v3496 = vand.u32 %v3450, 4294901760
    %3497 = vmatpush.msra.mxu0 %v3496
    %v3498 = vand.u32 %v3437, 4294901760
    %v3499 = vsub.f32 %v3437, %v3498
    %v3500 = vand.u32 %v3499, 4294901760
    %v3501 = vsub.f32 %v3499, %v3500
    %v3502 = vand.u32 %v3501, 4294901760
    %3503 = vmatmul.f32.gmra.mxu0 %v3502
    %v3504 = vpop.f32.mrf.mxu0
    %v3505 = vadd.f32 0.0, %v3504
    %v3506 = vand.u32 %v3438, 4294901760
    %v3507 = vsub.f32 %v3438, %v3506
    %v3508 = vand.u32 %v3507, 4294901760
    %v3509 = vsub.f32 %v3507, %v3508
    %v3510 = vand.u32 %v3509, 4294901760
    %3511 = vmatmul.f32.gmra.mxu0 %v3510
    %v3512 = vpop.f32.mrf.mxu0
    %v3513 = vadd.f32 0.0, %v3512
    %v3514 = vand.u32 %v3439, 4294901760
    %v3515 = vsub.f32 %v3439, %v3514
    %v3516 = vand.u32 %v3515, 4294901760
    %v3517 = vsub.f32 %v3515, %v3516
    %v3518 = vand.u32 %v3517, 4294901760
    %3519 = vmatmul.f32.gmra.mxu0 %v3518
    %v3520 = vpop.f32.mrf.mxu0
    %v3521 = vadd.f32 0.0, %v3520
    %v3522 = vand.u32 %v3440, 4294901760
    %v3523 = vsub.f32 %v3440, %v3522
    %v3524 = vand.u32 %v3523, 4294901760
    %v3525 = vsub.f32 %v3523, %v3524
    %v3526 = vand.u32 %v3525, 4294901760
    %3527 = vmatmul.f32.gmra.mxu0 %v3526
    %v3528 = vpop.f32.mrf.mxu0
    %v3529 = vadd.f32 0.0, %v3528
    %v3530 = vand.u32 %v3441, 4294901760
    %v3531 = vsub.f32 %v3441, %v3530
    %v3532 = vand.u32 %v3531, 4294901760
    %v3533 = vsub.f32 %v3531, %v3532
    %v3534 = vand.u32 %v3533, 4294901760
    %3535 = vmatmul.f32.gmra.mxu0 %v3534
    %v3536 = vpop.f32.mrf.mxu0
    %v3537 = vadd.f32 0.0, %v3536
    %v3538 = vand.u32 %v3442, 4294901760
    %v3539 = vsub.f32 %v3442, %v3538
    %v3540 = vand.u32 %v3539, 4294901760
    %v3541 = vsub.f32 %v3539, %v3540
    %v3542 = vand.u32 %v3541, 4294901760
    %3543 = vmatmul.f32.gmra.mxu0 %v3542
    %v3544 = vpop.f32.mrf.mxu0
    %v3545 = vadd.f32 0.0, %v3544
    %v3546 = vand.u32 %v3443, 4294901760
    %v3547 = vsub.f32 %v3443, %v3546
    %v3548 = vand.u32 %v3547, 4294901760
    %v3549 = vsub.f32 %v3547, %v3548
    %v3550 = vand.u32 %v3549, 4294901760
    %3551 = vmatmul.f32.gmra.mxu0 %v3550
    %v3552 = vpop.f32.mrf.mxu0
    %v3553 = vadd.f32 0.0, %v3552
    %v3554 = vand.u32 %v3444, 4294901760
    %v3555 = vsub.f32 %v3444, %v3554
    %v3556 = vand.u32 %v3555, 4294901760
    %v3557 = vsub.f32 %v3555, %v3556
    %v3558 = vand.u32 %v3557, 4294901760
    %3559 = vmatmul.f32.gmra.mxu0 %v3558
    %v3560 = vpop.f32.mrf.mxu0
    %v3561 = vadd.f32 0.0, %v3560
    %v3562 = vand.u32 %v3445, 4294901760
    %v3563 = vsub.f32 %v3445, %v3562
    %v3564 = vand.u32 %v3563, 4294901760
    %v3565 = vsub.f32 %v3563, %v3564
    %v3566 = vand.u32 %v3565, 4294901760
    %3567 = vmatmul.f32.gmra.mxu0 %v3566
    %v3568 = vpop.f32.mrf.mxu0
    %v3569 = vadd.f32 0.0, %v3568
    %v3570 = vand.u32 %v3446, 4294901760
    %v3571 = vsub.f32 %v3446, %v3570
    %v3572 = vand.u32 %v3571, 4294901760
    %v3573 = vsub.f32 %v3571, %v3572
    %v3574 = vand.u32 %v3573, 4294901760
    %3575 = vmatmul.f32.gmra.mxu0 %v3574
    %v3576 = vpop.f32.mrf.mxu0
    %v3577 = vadd.f32 0.0, %v3576
    %v3578 = vand.u32 %v3447, 4294901760
    %v3579 = vsub.f32 %v3447, %v3578
    %v3580 = vand.u32 %v3579, 4294901760
    %v3581 = vsub.f32 %v3579, %v3580
    %v3582 = vand.u32 %v3581, 4294901760
    %3583 = vmatmul.f32.gmra.mxu0 %v3582
    %v3584 = vpop.f32.mrf.mxu0
    %v3585 = vadd.f32 0.0, %v3584
    %v3586 = vand.u32 %v3448, 4294901760
    %v3587 = vsub.f32 %v3448, %v3586
    %v3588 = vand.u32 %v3587, 4294901760
    %v3589 = vsub.f32 %v3587, %v3588
    %v3590 = vand.u32 %v3589, 4294901760
    %3591 = vmatmul.f32.gmra.mxu0 %v3590
    %v3592 = vpop.f32.mrf.mxu0
    %v3593 = vadd.f32 0.0, %v3592
    %3594 = vdwg.mxu0
    %v3595 = vand.u32 %v3465, 4294901760
    %v3596 = vsub.f32 %v3465, %v3595
    %v3597 = vand.u32 %v3596, 4294901760
    %v3598 = vsub.f32 %v3596, %v3597
    %v3599 = vand.u32 %v3598, 4294901760
    %3600 = vmatpush.msra.mxu0 %v3599
    %v3601 = vand.u32 %v3464, 4294901760
    %v3602 = vsub.f32 %v3464, %v3601
    %v3603 = vand.u32 %v3602, 4294901760
    %v3604 = vsub.f32 %v3602, %v3603
    %v3605 = vand.u32 %v3604, 4294901760
    %3606 = vmatpush.msra.mxu0 %v3605
    %v3607 = vand.u32 %v3463, 4294901760
    %v3608 = vsub.f32 %v3463, %v3607
    %v3609 = vand.u32 %v3608, 4294901760
    %v3610 = vsub.f32 %v3608, %v3609
    %v3611 = vand.u32 %v3610, 4294901760
    %3612 = vmatpush.msra.mxu0 %v3611
    %v3613 = vand.u32 %v3462, 4294901760
    %v3614 = vsub.f32 %v3462, %v3613
    %v3615 = vand.u32 %v3614, 4294901760
    %v3616 = vsub.f32 %v3614, %v3615
    %v3617 = vand.u32 %v3616, 4294901760
    %3618 = vmatpush.msra.mxu0 %v3617
    %v3619 = vand.u32 %v3461, 4294901760
    %v3620 = vsub.f32 %v3461, %v3619
    %v3621 = vand.u32 %v3620, 4294901760
    %v3622 = vsub.f32 %v3620, %v3621
    %v3623 = vand.u32 %v3622, 4294901760
    %3624 = vmatpush.msra.mxu0 %v3623
    %v3625 = vand.u32 %v3460, 4294901760
    %v3626 = vsub.f32 %v3460, %v3625
    %v3627 = vand.u32 %v3626, 4294901760
    %v3628 = vsub.f32 %v3626, %v3627
    %v3629 = vand.u32 %v3628, 4294901760
    %3630 = vmatpush.msra.mxu0 %v3629
    %v3631 = vand.u32 %v3459, 4294901760
    %v3632 = vsub.f32 %v3459, %v3631
    %v3633 = vand.u32 %v3632, 4294901760
    %v3634 = vsub.f32 %v3632, %v3633
    %v3635 = vand.u32 %v3634, 4294901760
    %3636 = vmatpush.msra.mxu0 %v3635
    %v3637 = vand.u32 %v3458, 4294901760
    %v3638 = vsub.f32 %v3458, %v3637
    %v3639 = vand.u32 %v3638, 4294901760
    %v3640 = vsub.f32 %v3638, %v3639
    %v3641 = vand.u32 %v3640, 4294901760
    %3642 = vmatpush.msra.mxu0 %v3641
    %v3643 = vand.u32 %v3457, 4294901760
    %v3644 = vsub.f32 %v3457, %v3643
    %v3645 = vand.u32 %v3644, 4294901760
    %v3646 = vsub.f32 %v3644, %v3645
    %v3647 = vand.u32 %v3646, 4294901760
    %3648 = vmatpush.msra.mxu0 %v3647
    %v3649 = vand.u32 %v3456, 4294901760
    %v3650 = vsub.f32 %v3456, %v3649
    %v3651 = vand.u32 %v3650, 4294901760
    %v3652 = vsub.f32 %v3650, %v3651
    %v3653 = vand.u32 %v3652, 4294901760
    %3654 = vmatpush.msra.mxu0 %v3653
    %v3655 = vand.u32 %v3455, 4294901760
    %v3656 = vsub.f32 %v3455, %v3655
    %v3657 = vand.u32 %v3656, 4294901760
    %v3658 = vsub.f32 %v3656, %v3657
    %v3659 = vand.u32 %v3658, 4294901760
    %3660 = vmatpush.msra.mxu0 %v3659
    %v3661 = vand.u32 %v3454, 4294901760
    %v3662 = vsub.f32 %v3454, %v3661
    %v3663 = vand.u32 %v3662, 4294901760
    %v3664 = vsub.f32 %v3662, %v3663
    %v3665 = vand.u32 %v3664, 4294901760
    %3666 = vmatpush.msra.mxu0 %v3665
    %v3667 = vand.u32 %v3453, 4294901760
    %v3668 = vsub.f32 %v3453, %v3667
    %v3669 = vand.u32 %v3668, 4294901760
    %v3670 = vsub.f32 %v3668, %v3669
    %v3671 = vand.u32 %v3670, 4294901760
    %3672 = vmatpush.msra.mxu0 %v3671
    %v3673 = vand.u32 %v3452, 4294901760
    %v3674 = vsub.f32 %v3452, %v3673
    %v3675 = vand.u32 %v3674, 4294901760
    %v3676 = vsub.f32 %v3674, %v3675
    %v3677 = vand.u32 %v3676, 4294901760
    %3678 = vmatpush.msra.mxu0 %v3677
    %v3679 = vand.u32 %v3451, 4294901760
    %v3680 = vsub.f32 %v3451, %v3679
    %v3681 = vand.u32 %v3680, 4294901760
    %v3682 = vsub.f32 %v3680, %v3681
    %v3683 = vand.u32 %v3682, 4294901760
    %3684 = vmatpush.msra.mxu0 %v3683
    %v3685 = vand.u32 %v3450, 4294901760
    %v3686 = vsub.f32 %v3450, %v3685
    %v3687 = vand.u32 %v3686, 4294901760
    %v3688 = vsub.f32 %v3686, %v3687
    %v3689 = vand.u32 %v3688, 4294901760
    %3690 = vmatpush.msra.mxu0 %v3689
    %v3691 = vand.u32 %v3437, 4294901760
    %3692 = vmatmul.f32.gmra.mxu0 %v3691
    %v3693 = vpop.f32.mrf.mxu0
    %v3694 = vadd.f32 %v3505, %v3693
    %v3695 = vand.u32 %v3438, 4294901760
    %3696 = vmatmul.f32.gmra.mxu0 %v3695
    %v3697 = vpop.f32.mrf.mxu0
    %v3698 = vadd.f32 %v3513, %v3697
    %v3699 = vand.u32 %v3439, 4294901760
    %3700 = vmatmul.f32.gmra.mxu0 %v3699
    %v3701 = vpop.f32.mrf.mxu0
    %v3702 = vadd.f32 %v3521, %v3701
    %v3703 = vand.u32 %v3440, 4294901760
    %3704 = vmatmul.f32.gmra.mxu0 %v3703
    %v3705 = vpop.f32.mrf.mxu0
    %v3706 = vadd.f32 %v3529, %v3705
    %v3707 = vand.u32 %v3441, 4294901760
    %3708 = vmatmul.f32.gmra.mxu0 %v3707
    %v3709 = vpop.f32.mrf.mxu0
    %v3710 = vadd.f32 %v3537, %v3709
    %v3711 = vand.u32 %v3442, 4294901760
    %3712 = vmatmul.f32.gmra.mxu0 %v3711
    %v3713 = vpop.f32.mrf.mxu0
    %v3714 = vadd.f32 %v3545, %v3713
    %v3715 = vand.u32 %v3443, 4294901760
    %3716 = vmatmul.f32.gmra.mxu0 %v3715
    %v3717 = vpop.f32.mrf.mxu0
    %v3718 = vadd.f32 %v3553, %v3717
    %v3719 = vand.u32 %v3444, 4294901760
    %3720 = vmatmul.f32.gmra.mxu0 %v3719
    %v3721 = vpop.f32.mrf.mxu0
    %v3722 = vadd.f32 %v3561, %v3721
    %v3723 = vand.u32 %v3445, 4294901760
    %3724 = vmatmul.f32.gmra.mxu0 %v3723
    %v3725 = vpop.f32.mrf.mxu0
    %v3726 = vadd.f32 %v3569, %v3725
    %v3727 = vand.u32 %v3446, 4294901760
    %3728 = vmatmul.f32.gmra.mxu0 %v3727
    %v3729 = vpop.f32.mrf.mxu0
    %v3730 = vadd.f32 %v3577, %v3729
    %v3731 = vand.u32 %v3447, 4294901760
    %3732 = vmatmul.f32.gmra.mxu0 %v3731
    %v3733 = vpop.f32.mrf.mxu0
    %v3734 = vadd.f32 %v3585, %v3733
    %v3735 = vand.u32 %v3448, 4294901760
    %3736 = vmatmul.f32.gmra.mxu0 %v3735
    %v3737 = vpop.f32.mrf.mxu0
    %v3738 = vadd.f32 %v3593, %v3737
    %3739 = vdwg.mxu0
    %v3740 = vand.u32 %v3465, 4294901760
    %v3741 = vsub.f32 %v3465, %v3740
    %3742 = vmatpush.msra.mxu0 %v3741
    %v3743 = vand.u32 %v3464, 4294901760
    %v3744 = vsub.f32 %v3464, %v3743
    %3745 = vmatpush.msra.mxu0 %v3744
    %v3746 = vand.u32 %v3463, 4294901760
    %v3747 = vsub.f32 %v3463, %v3746
    %3748 = vmatpush.msra.mxu0 %v3747
    %v3749 = vand.u32 %v3462, 4294901760
    %v3750 = vsub.f32 %v3462, %v3749
    %3751 = vmatpush.msra.mxu0 %v3750
    %v3752 = vand.u32 %v3461, 4294901760
    %v3753 = vsub.f32 %v3461, %v3752
    %3754 = vmatpush.msra.mxu0 %v3753
    %v3755 = vand.u32 %v3460, 4294901760
    %v3756 = vsub.f32 %v3460, %v3755
    %3757 = vmatpush.msra.mxu0 %v3756
    %v3758 = vand.u32 %v3459, 4294901760
    %v3759 = vsub.f32 %v3459, %v3758
    %3760 = vmatpush.msra.mxu0 %v3759
    %v3761 = vand.u32 %v3458, 4294901760
    %v3762 = vsub.f32 %v3458, %v3761
    %3763 = vmatpush.msra.mxu0 %v3762
    %v3764 = vand.u32 %v3457, 4294901760
    %v3765 = vsub.f32 %v3457, %v3764
    %3766 = vmatpush.msra.mxu0 %v3765
    %v3767 = vand.u32 %v3456, 4294901760
    %v3768 = vsub.f32 %v3456, %v3767
    %3769 = vmatpush.msra.mxu0 %v3768
    %v3770 = vand.u32 %v3455, 4294901760
    %v3771 = vsub.f32 %v3455, %v3770
    %3772 = vmatpush.msra.mxu0 %v3771
    %v3773 = vand.u32 %v3454, 4294901760
    %v3774 = vsub.f32 %v3454, %v3773
    %3775 = vmatpush.msra.mxu0 %v3774
    %v3776 = vand.u32 %v3453, 4294901760
    %v3777 = vsub.f32 %v3453, %v3776
    %3778 = vmatpush.msra.mxu0 %v3777
    %v3779 = vand.u32 %v3452, 4294901760
    %v3780 = vsub.f32 %v3452, %v3779
    %3781 = vmatpush.msra.mxu0 %v3780
    %v3782 = vand.u32 %v3451, 4294901760
    %v3783 = vsub.f32 %v3451, %v3782
    %3784 = vmatpush.msra.mxu0 %v3783
    %v3785 = vand.u32 %v3450, 4294901760
    %v3786 = vsub.f32 %v3450, %v3785
    %3787 = vmatpush.msra.mxu0 %v3786
    %v3788 = vand.u32 %v3437, 4294901760
    %v3789 = vsub.f32 %v3437, %v3788
    %3790 = vmatmul.f32.gmra.mxu0 %v3789
    %v3791 = vpop.f32.mrf.mxu0
    %v3792 = vadd.f32 %v3694, %v3791
    %v3793 = vand.u32 %v3438, 4294901760
    %v3794 = vsub.f32 %v3438, %v3793
    %3795 = vmatmul.f32.gmra.mxu0 %v3794
    %v3796 = vpop.f32.mrf.mxu0
    %v3797 = vadd.f32 %v3698, %v3796
    %v3798 = vand.u32 %v3439, 4294901760
    %v3799 = vsub.f32 %v3439, %v3798
    %3800 = vmatmul.f32.gmra.mxu0 %v3799
    %v3801 = vpop.f32.mrf.mxu0
    %v3802 = vadd.f32 %v3702, %v3801
    %v3803 = vand.u32 %v3440, 4294901760
    %v3804 = vsub.f32 %v3440, %v3803
    %3805 = vmatmul.f32.gmra.mxu0 %v3804
    %v3806 = vpop.f32.mrf.mxu0
    %v3807 = vadd.f32 %v3706, %v3806
    %v3808 = vand.u32 %v3441, 4294901760
    %v3809 = vsub.f32 %v3441, %v3808
    %3810 = vmatmul.f32.gmra.mxu0 %v3809
    %v3811 = vpop.f32.mrf.mxu0
    %v3812 = vadd.f32 %v3710, %v3811
    %v3813 = vand.u32 %v3442, 4294901760
    %v3814 = vsub.f32 %v3442, %v3813
    %3815 = vmatmul.f32.gmra.mxu0 %v3814
    %v3816 = vpop.f32.mrf.mxu0
    %v3817 = vadd.f32 %v3714, %v3816
    %v3818 = vand.u32 %v3443, 4294901760
    %v3819 = vsub.f32 %v3443, %v3818
    %3820 = vmatmul.f32.gmra.mxu0 %v3819
    %v3821 = vpop.f32.mrf.mxu0
    %v3822 = vadd.f32 %v3718, %v3821
    %v3823 = vand.u32 %v3444, 4294901760
    %v3824 = vsub.f32 %v3444, %v3823
    %3825 = vmatmul.f32.gmra.mxu0 %v3824
    %v3826 = vpop.f32.mrf.mxu0
    %v3827 = vadd.f32 %v3722, %v3826
    %v3828 = vand.u32 %v3445, 4294901760
    %v3829 = vsub.f32 %v3445, %v3828
    %3830 = vmatmul.f32.gmra.mxu0 %v3829
    %v3831 = vpop.f32.mrf.mxu0
    %v3832 = vadd.f32 %v3726, %v3831
    %v3833 = vand.u32 %v3446, 4294901760
    %v3834 = vsub.f32 %v3446, %v3833
    %3835 = vmatmul.f32.gmra.mxu0 %v3834
    %v3836 = vpop.f32.mrf.mxu0
    %v3837 = vadd.f32 %v3730, %v3836
    %v3838 = vand.u32 %v3447, 4294901760
    %v3839 = vsub.f32 %v3447, %v3838
    %3840 = vmatmul.f32.gmra.mxu0 %v3839
    %v3841 = vpop.f32.mrf.mxu0
    %v3842 = vadd.f32 %v3734, %v3841
    %v3843 = vand.u32 %v3448, 4294901760
    %v3844 = vsub.f32 %v3448, %v3843
    %3845 = vmatmul.f32.gmra.mxu0 %v3844
    %v3846 = vpop.f32.mrf.mxu0
    %v3847 = vadd.f32 %v3738, %v3846
    %3848 = vdwg.mxu0
    %v3849 = vand.u32 %v3465, 4294901760
    %3850 = vmatpush.msra.mxu0 %v3849
    %v3851 = vand.u32 %v3464, 4294901760
    %3852 = vmatpush.msra.mxu0 %v3851
    %v3853 = vand.u32 %v3463, 4294901760
    %3854 = vmatpush.msra.mxu0 %v3853
    %v3855 = vand.u32 %v3462, 4294901760
    %3856 = vmatpush.msra.mxu0 %v3855
    %v3857 = vand.u32 %v3461, 4294901760
    %3858 = vmatpush.msra.mxu0 %v3857
    %v3859 = vand.u32 %v3460, 4294901760
    %3860 = vmatpush.msra.mxu0 %v3859
    %v3861 = vand.u32 %v3459, 4294901760
    %3862 = vmatpush.msra.mxu0 %v3861
    %v3863 = vand.u32 %v3458, 4294901760
    %3864 = vmatpush.msra.mxu0 %v3863
    %v3865 = vand.u32 %v3457, 4294901760
    %3866 = vmatpush.msra.mxu0 %v3865
    %v3867 = vand.u32 %v3456, 4294901760
    %3868 = vmatpush.msra.mxu0 %v3867
    %v3869 = vand.u32 %v3455, 4294901760
    %3870 = vmatpush.msra.mxu0 %v3869
    %v3871 = vand.u32 %v3454, 4294901760
    %3872 = vmatpush.msra.mxu0 %v3871
    %v3873 = vand.u32 %v3453, 4294901760
    %3874 = vmatpush.msra.mxu0 %v3873
    %v3875 = vand.u32 %v3452, 4294901760
    %3876 = vmatpush.msra.mxu0 %v3875
    %v3877 = vand.u32 %v3451, 4294901760
    %3878 = vmatpush.msra.mxu0 %v3877
    %v3879 = vand.u32 %v3450, 4294901760
    %3880 = vmatpush.msra.mxu0 %v3879
    %v3881 = vand.u32 %v3437, 4294901760
    %v3882 = vsub.f32 %v3437, %v3881
    %v3883 = vand.u32 %v3882, 4294901760
    %3884 = vmatmul.f32.gmra.mxu0 %v3883
    %v3885 = vpop.f32.mrf.mxu0
    %v3886 = vadd.f32 %v3792, %v3885
    %v3887 = vand.u32 %v3438, 4294901760
    %v3888 = vsub.f32 %v3438, %v3887
    %v3889 = vand.u32 %v3888, 4294901760
    %3890 = vmatmul.f32.gmra.mxu0 %v3889
    %v3891 = vpop.f32.mrf.mxu0
    %v3892 = vadd.f32 %v3797, %v3891
    %v3893 = vand.u32 %v3439, 4294901760
    %v3894 = vsub.f32 %v3439, %v3893
    %v3895 = vand.u32 %v3894, 4294901760
    %3896 = vmatmul.f32.gmra.mxu0 %v3895
    %v3897 = vpop.f32.mrf.mxu0
    %v3898 = vadd.f32 %v3802, %v3897
    %v3899 = vand.u32 %v3440, 4294901760
    %v3900 = vsub.f32 %v3440, %v3899
    %v3901 = vand.u32 %v3900, 4294901760
    %3902 = vmatmul.f32.gmra.mxu0 %v3901
    %v3903 = vpop.f32.mrf.mxu0
    %v3904 = vadd.f32 %v3807, %v3903
    %v3905 = vand.u32 %v3441, 4294901760
    %v3906 = vsub.f32 %v3441, %v3905
    %v3907 = vand.u32 %v3906, 4294901760
    %3908 = vmatmul.f32.gmra.mxu0 %v3907
    %v3909 = vpop.f32.mrf.mxu0
    %v3910 = vadd.f32 %v3812, %v3909
    %v3911 = vand.u32 %v3442, 4294901760
    %v3912 = vsub.f32 %v3442, %v3911
    %v3913 = vand.u32 %v3912, 4294901760
    %3914 = vmatmul.f32.gmra.mxu0 %v3913
    %v3915 = vpop.f32.mrf.mxu0
    %v3916 = vadd.f32 %v3817, %v3915
    %v3917 = vand.u32 %v3443, 4294901760
    %v3918 = vsub.f32 %v3443, %v3917
    %v3919 = vand.u32 %v3918, 4294901760
    %3920 = vmatmul.f32.gmra.mxu0 %v3919
    %v3921 = vpop.f32.mrf.mxu0
    %v3922 = vadd.f32 %v3822, %v3921
    %v3923 = vand.u32 %v3444, 4294901760
    %v3924 = vsub.f32 %v3444, %v3923
    %v3925 = vand.u32 %v3924, 4294901760
    %3926 = vmatmul.f32.gmra.mxu0 %v3925
    %v3927 = vpop.f32.mrf.mxu0
    %v3928 = vadd.f32 %v3827, %v3927
    %v3929 = vand.u32 %v3445, 4294901760
    %v3930 = vsub.f32 %v3445, %v3929
    %v3931 = vand.u32 %v3930, 4294901760
    %3932 = vmatmul.f32.gmra.mxu0 %v3931
    %v3933 = vpop.f32.mrf.mxu0
    %v3934 = vadd.f32 %v3832, %v3933
    %v3935 = vand.u32 %v3446, 4294901760
    %v3936 = vsub.f32 %v3446, %v3935
    %v3937 = vand.u32 %v3936, 4294901760
    %3938 = vmatmul.f32.gmra.mxu0 %v3937
    %v3939 = vpop.f32.mrf.mxu0
    %v3940 = vadd.f32 %v3837, %v3939
    %v3941 = vand.u32 %v3447, 4294901760
    %v3942 = vsub.f32 %v3447, %v3941
    %v3943 = vand.u32 %v3942, 4294901760
    %3944 = vmatmul.f32.gmra.mxu0 %v3943
    %v3945 = vpop.f32.mrf.mxu0
    %v3946 = vadd.f32 %v3842, %v3945
    %v3947 = vand.u32 %v3448, 4294901760
    %v3948 = vsub.f32 %v3448, %v3947
    %v3949 = vand.u32 %v3948, 4294901760
    %3950 = vmatmul.f32.gmra.mxu0 %v3949
    %v3951 = vpop.f32.mrf.mxu0
    %v3952 = vadd.f32 %v3847, %v3951
    %3953 = vdwg.mxu0
    %v3954 = vand.u32 %v3465, 4294901760
    %v3955 = vsub.f32 %v3465, %v3954
    %v3956 = vand.u32 %v3955, 4294901760
    %3957 = vmatpush.msra.mxu0 %v3956
    %v3958 = vand.u32 %v3464, 4294901760
    %v3959 = vsub.f32 %v3464, %v3958
    %v3960 = vand.u32 %v3959, 4294901760
    %3961 = vmatpush.msra.mxu0 %v3960
    %v3962 = vand.u32 %v3463, 4294901760
    %v3963 = vsub.f32 %v3463, %v3962
    %v3964 = vand.u32 %v3963, 4294901760
    %3965 = vmatpush.msra.mxu0 %v3964
    %v3966 = vand.u32 %v3462, 4294901760
    %v3967 = vsub.f32 %v3462, %v3966
    %v3968 = vand.u32 %v3967, 4294901760
    %3969 = vmatpush.msra.mxu0 %v3968
    %v3970 = vand.u32 %v3461, 4294901760
    %v3971 = vsub.f32 %v3461, %v3970
    %v3972 = vand.u32 %v3971, 4294901760
    %3973 = vmatpush.msra.mxu0 %v3972
    %v3974 = vand.u32 %v3460, 4294901760
    %v3975 = vsub.f32 %v3460, %v3974
    %v3976 = vand.u32 %v3975, 4294901760
    %3977 = vmatpush.msra.mxu0 %v3976
    %v3978 = vand.u32 %v3459, 4294901760
    %v3979 = vsub.f32 %v3459, %v3978
    %v3980 = vand.u32 %v3979, 4294901760
    %3981 = vmatpush.msra.mxu0 %v3980
    %v3982 = vand.u32 %v3458, 4294901760
    %v3983 = vsub.f32 %v3458, %v3982
    %v3984 = vand.u32 %v3983, 4294901760
    %3985 = vmatpush.msra.mxu0 %v3984
    %v3986 = vand.u32 %v3457, 4294901760
    %v3987 = vsub.f32 %v3457, %v3986
    %v3988 = vand.u32 %v3987, 4294901760
    %3989 = vmatpush.msra.mxu0 %v3988
    %v3990 = vand.u32 %v3456, 4294901760
    %v3991 = vsub.f32 %v3456, %v3990
    %v3992 = vand.u32 %v3991, 4294901760
    %3993 = vmatpush.msra.mxu0 %v3992
    %v3994 = vand.u32 %v3455, 4294901760
    %v3995 = vsub.f32 %v3455, %v3994
    %v3996 = vand.u32 %v3995, 4294901760
    %3997 = vmatpush.msra.mxu0 %v3996
    %v3998 = vand.u32 %v3454, 4294901760
    %v3999 = vsub.f32 %v3454, %v3998
    %v4000 = vand.u32 %v3999, 4294901760
    %4001 = vmatpush.msra.mxu0 %v4000
    %v4002 = vand.u32 %v3453, 4294901760
    %v4003 = vsub.f32 %v3453, %v4002
    %v4004 = vand.u32 %v4003, 4294901760
    %4005 = vmatpush.msra.mxu0 %v4004
    %v4006 = vand.u32 %v3452, 4294901760
    %v4007 = vsub.f32 %v3452, %v4006
    %v4008 = vand.u32 %v4007, 4294901760
    %4009 = vmatpush.msra.mxu0 %v4008
    %v4010 = vand.u32 %v3451, 4294901760
    %v4011 = vsub.f32 %v3451, %v4010
    %v4012 = vand.u32 %v4011, 4294901760
    %4013 = vmatpush.msra.mxu0 %v4012
    %v4014 = vand.u32 %v3450, 4294901760
    %v4015 = vsub.f32 %v3450, %v4014
    %v4016 = vand.u32 %v4015, 4294901760
    %4017 = vmatpush.msra.mxu0 %v4016
    %v4018 = vand.u32 %v3437, 4294901760
    %4019 = vmatmul.f32.gmra.mxu0 %v4018
    %v4020 = vpop.f32.mrf.mxu0
    %v4021 = vadd.f32 %v3886, %v4020
    %v4022 = vand.u32 %v3438, 4294901760
    %4023 = vmatmul.f32.gmra.mxu0 %v4022
    %v4024 = vpop.f32.mrf.mxu0
    %v4025 = vadd.f32 %v3892, %v4024
    %v4026 = vand.u32 %v3439, 4294901760
    %4027 = vmatmul.f32.gmra.mxu0 %v4026
    %v4028 = vpop.f32.mrf.mxu0
    %v4029 = vadd.f32 %v3898, %v4028
    %v4030 = vand.u32 %v3440, 4294901760
    %4031 = vmatmul.f32.gmra.mxu0 %v4030
    %v4032 = vpop.f32.mrf.mxu0
    %v4033 = vadd.f32 %v3904, %v4032
    %v4034 = vand.u32 %v3441, 4294901760
    %4035 = vmatmul.f32.gmra.mxu0 %v4034
    %v4036 = vpop.f32.mrf.mxu0
    %v4037 = vadd.f32 %v3910, %v4036
    %v4038 = vand.u32 %v3442, 4294901760
    %4039 = vmatmul.f32.gmra.mxu0 %v4038
    %v4040 = vpop.f32.mrf.mxu0
    %v4041 = vadd.f32 %v3916, %v4040
    %v4042 = vand.u32 %v3443, 4294901760
    %4043 = vmatmul.f32.gmra.mxu0 %v4042
    %v4044 = vpop.f32.mrf.mxu0
    %v4045 = vadd.f32 %v3922, %v4044
    %v4046 = vand.u32 %v3444, 4294901760
    %4047 = vmatmul.f32.gmra.mxu0 %v4046
    %v4048 = vpop.f32.mrf.mxu0
    %v4049 = vadd.f32 %v3928, %v4048
    %v4050 = vand.u32 %v3445, 4294901760
    %4051 = vmatmul.f32.gmra.mxu0 %v4050
    %v4052 = vpop.f32.mrf.mxu0
    %v4053 = vadd.f32 %v3934, %v4052
    %v4054 = vand.u32 %v3446, 4294901760
    %4055 = vmatmul.f32.gmra.mxu0 %v4054
    %v4056 = vpop.f32.mrf.mxu0
    %v4057 = vadd.f32 %v3940, %v4056
    %v4058 = vand.u32 %v3447, 4294901760
    %4059 = vmatmul.f32.gmra.mxu0 %v4058
    %v4060 = vpop.f32.mrf.mxu0
    %v4061 = vadd.f32 %v3946, %v4060
    %v4062 = vand.u32 %v3448, 4294901760
    %4063 = vmatmul.f32.gmra.mxu0 %v4062
    %v4064 = vpop.f32.mrf.mxu0
    %v4065 = vadd.f32 %v3952, %v4064
    %4066 = vdwg.mxu0
    %v4067 = vand.u32 %v3465, 4294901760
    %4068 = vmatpush.msra.mxu0 %v4067
    %v4069 = vand.u32 %v3464, 4294901760
    %4070 = vmatpush.msra.mxu0 %v4069
    %v4071 = vand.u32 %v3463, 4294901760
    %4072 = vmatpush.msra.mxu0 %v4071
    %v4073 = vand.u32 %v3462, 4294901760
    %4074 = vmatpush.msra.mxu0 %v4073
    %v4075 = vand.u32 %v3461, 4294901760
    %4076 = vmatpush.msra.mxu0 %v4075
    %v4077 = vand.u32 %v3460, 4294901760
    %4078 = vmatpush.msra.mxu0 %v4077
    %v4079 = vand.u32 %v3459, 4294901760
    %4080 = vmatpush.msra.mxu0 %v4079
    %v4081 = vand.u32 %v3458, 4294901760
    %4082 = vmatpush.msra.mxu0 %v4081
    %v4083 = vand.u32 %v3457, 4294901760
    %4084 = vmatpush.msra.mxu0 %v4083
    %v4085 = vand.u32 %v3456, 4294901760
    %4086 = vmatpush.msra.mxu0 %v4085
    %v4087 = vand.u32 %v3455, 4294901760
    %4088 = vmatpush.msra.mxu0 %v4087
    %v4089 = vand.u32 %v3454, 4294901760
    %4090 = vmatpush.msra.mxu0 %v4089
    %v4091 = vand.u32 %v3453, 4294901760
    %4092 = vmatpush.msra.mxu0 %v4091
    %v4093 = vand.u32 %v3452, 4294901760
    %4094 = vmatpush.msra.mxu0 %v4093
    %v4095 = vand.u32 %v3451, 4294901760
    %4096 = vmatpush.msra.mxu0 %v4095
    %v4097 = vand.u32 %v3450, 4294901760
    %4098 = vmatpush.msra.mxu0 %v4097
    %v4099 = vand.u32 %v3437, 4294901760
    %4100 = vmatmul.f32.gmra.mxu0 %v4099
    %v4101 = vpop.f32.mrf.mxu0
    %v4102 = vadd.f32 %v4021, %v4101
    %v4103 = vand.u32 %v3438, 4294901760
    %4104 = vmatmul.f32.gmra.mxu0 %v4103
    %v4105 = vpop.f32.mrf.mxu0
    %v4106 = vadd.f32 %v4025, %v4105
    %v4107 = vand.u32 %v3439, 4294901760
    %4108 = vmatmul.f32.gmra.mxu0 %v4107
    %v4109 = vpop.f32.mrf.mxu0
    %v4110 = vadd.f32 %v4029, %v4109
    %v4111 = vand.u32 %v3440, 4294901760
    %4112 = vmatmul.f32.gmra.mxu0 %v4111
    %v4113 = vpop.f32.mrf.mxu0
    %v4114 = vadd.f32 %v4033, %v4113
    %v4115 = vand.u32 %v3441, 4294901760
    %4116 = vmatmul.f32.gmra.mxu0 %v4115
    %v4117 = vpop.f32.mrf.mxu0
    %v4118 = vadd.f32 %v4037, %v4117
    %v4119 = vand.u32 %v3442, 4294901760
    %4120 = vmatmul.f32.gmra.mxu0 %v4119
    %v4121 = vpop.f32.mrf.mxu0
    %v4122 = vadd.f32 %v4041, %v4121
    %v4123 = vand.u32 %v3443, 4294901760
    %4124 = vmatmul.f32.gmra.mxu0 %v4123
    %v4125 = vpop.f32.mrf.mxu0
    %v4126 = vadd.f32 %v4045, %v4125
    %v4127 = vand.u32 %v3444, 4294901760
    %4128 = vmatmul.f32.gmra.mxu0 %v4127
    %v4129 = vpop.f32.mrf.mxu0
    %v4130 = vadd.f32 %v4049, %v4129
    %v4131 = vand.u32 %v3445, 4294901760
    %4132 = vmatmul.f32.gmra.mxu0 %v4131
    %v4133 = vpop.f32.mrf.mxu0
    %v4134 = vadd.f32 %v4053, %v4133
    %v4135 = vand.u32 %v3446, 4294901760
    %4136 = vmatmul.f32.gmra.mxu0 %v4135
    %v4137 = vpop.f32.mrf.mxu0
    %v4138 = vadd.f32 %v4057, %v4137
    %v4139 = vand.u32 %v3447, 4294901760
    %4140 = vmatmul.f32.gmra.mxu0 %v4139
    %v4141 = vpop.f32.mrf.mxu0
    %v4142 = vadd.f32 %v4061, %v4141
    %v4143 = vand.u32 %v3448, 4294901760
    %4144 = vmatmul.f32.gmra.mxu0 %v4143
    %v4145 = vpop.f32.mrf.mxu0
    %v4146 = vadd.f32 %v4065, %v4145
    %4147 = vdwg.mxu0
    %v4148 = vadd.f32 %v3364, %v4102
    %v4149 = vadd.f32 %v3365, %v4106
    %v4150 = vadd.f32 %v3366, %v4110
    %v4151 = vadd.f32 %v3367, %v4114
    %v4152 = vadd.f32 %v3368, %v4118
    %v4153 = vadd.f32 %v3369, %v4122
    %v4154 = vadd.f32 %v3370, %v4126
    %v4155 = vadd.f32 %v3371, %v4130
    %v4156 = vadd.f32 %v3372, %v4134
    %v4157 = vadd.f32 %v3373, %v4138
    %v4158 = vadd.f32 %v3374, %v4142
    %v4159 = vadd.f32 %v3375, %v4146
    %v4160 = vmin.f32 %v4148, %v4152
    %v4161 = vmin.f32 %v4149, %v4153
    %v4162 = vmin.f32 %v4150, %v4154
    %v4163 = vmin.f32 %v4151, %v4155
    %v4164 = vmin.f32 %v4160, %v4156
    %v4165 = vmin.f32 %v4161, %v4157
    %v4166 = vmin.f32 %v4162, %v4158
    %v4167 = vmin.f32 %v4163, %v4159
    %v4168 = vmin.f32 %v4164, %v4165
    %v4169 = vmin.f32 %v4166, %v4167
    %v4170 = vmin.f32 %v4168, %v4169
    %4171 = vmin.xlane.f32.xlu0 %v4170
    %v4172 = vpop.xlane.xlu0 %4171
    %v4173 = vrot.slane %v4172, 4
    %v4174 = vmin.f32 %v4172, %v4173
    %v4175 = vrot.slane %v4174, 2
    %v4176 = vmin.f32 %v4174, %v4175
    %v4177 = vrot.slane %v4176, 1
    %v4178 = vmin.f32 %v4176, %v4177
    %s4179 = vtos %v4178
    %v4180 = vmax.f32 %v4148, %v4152
    %v4181 = vmax.f32 %v4149, %v4153
    %v4182 = vmax.f32 %v4150, %v4154
    %v4183 = vmax.f32 %v4151, %v4155
    %v4184 = vmax.f32 %v4180, %v4156
    %v4185 = vmax.f32 %v4181, %v4157
    %v4186 = vmax.f32 %v4182, %v4158
    %v4187 = vmax.f32 %v4183, %v4159
    %v4188 = vmax.f32 %v4184, %v4185
    %v4189 = vmax.f32 %v4186, %v4187
    %v4190 = vmax.f32 %v4188, %v4189
    %4191 = vmax.xlane.f32.xlu0 %v4190
    %v4192 = vpop.xlane.xlu0 %4191
    %v4193 = vrot.slane %v4192, 4
    %v4194 = vmax.f32 %v4192, %v4193
    %v4195 = vrot.slane %v4194, 2
    %v4196 = vmax.f32 %v4194, %v4195
    %v4197 = vrot.slane %v4196, 1
    %v4198 = vmax.f32 %v4196, %v4197
    %s4199 = vtos %v4198
    %v4200 = vstv %s4179
    %v4201 = vsub.f32 %v4148, %v4200
    %v4202 = vsub.f32 %v4149, %v4200
    %v4203 = vsub.f32 %v4150, %v4200
    %v4204 = vsub.f32 %v4151, %v4200
    %v4205 = vsub.f32 %v4152, %v4200
    %v4206 = vsub.f32 %v4153, %v4200
    %v4207 = vsub.f32 %v4154, %v4200
    %v4208 = vsub.f32 %v4155, %v4200
    %v4209 = vsub.f32 %v4156, %v4200
    %v4210 = vsub.f32 %v4157, %v4200
    %v4211 = vsub.f32 %v4158, %v4200
    %v4212 = vsub.f32 %v4159, %v4200
    %s4213 = ssub.f32 %s4199, %s4179
    %v4214 = vstv %s4213
    %v4215 = vrcp.pop %v4214
    %v4216 = vmul.f32 %v4214, %v4215
    %v4217 = vsub.f32 1.0, %v4216
    %v4218 = vmul.f32 %v4215, %v4217
    %v4219 = vadd.f32 %v4215, %v4218
    %vm4220 = vweird.f32 %v4214
    %vm4221 = vweird.f32 %v4215
    %vm4222 = vmor %vm4220, %vm4221
    %v4223 = vsel %vm4222, %v4215, %v4219
    %v4224 = vand.u32 2147483647, %v4214
    %vm4225 = vcmp.eq.f32.partialorder %v4224, 8.507059e+37
    %v4226 = vand.u32 %v4214, 2147483648
    %v4227 = vor.u32 1.1754944e-38, %v4226
    %v4228 = vsel %vm4225, %v4227, %v4223
    %s4229 = vtos %v4228
    %v4230 = vstv %s4229
    %v4231 = vmul.f32 %v4201, %v4230
    %v4232 = vmul.f32 %v4202, %v4230
    %v4233 = vmul.f32 %v4203, %v4230
    %v4234 = vmul.f32 %v4204, %v4230
    %v4235 = vmul.f32 %v4205, %v4230
    %v4236 = vmul.f32 %v4206, %v4230
    %v4237 = vmul.f32 %v4207, %v4230
    %v4238 = vmul.f32 %v4208, %v4230
    %v4239 = vmul.f32 %v4209, %v4230
    %v4240 = vmul.f32 %v4210, %v4230
    %v4241 = vmul.f32 %v4211, %v4230
    %v4242 = vmul.f32 %v4212, %v4230
    %v4243 = vld [vmem:[#allocation5] sm:$0xff]
    %v4244 = vld [vmem:[#allocation5 + $0x8] sm:$0xff]
    %v4245 = vld [vmem:[#allocation5 + $0x10] sm:$0xff]
    %v4246 = vld [vmem:[#allocation5 + $0x18] sm:$0xff]
    %v4247 = vld [vmem:[#allocation5 + $0x20] sm:$0xff]
    %v4248 = vld [vmem:[#allocation5 + $0x28] sm:$0xff]
    %v4249 = vld [vmem:[#allocation5 + $0x30] sm:$0xff]
    %v4250 = vld [vmem:[#allocation5 + $0x38] sm:$0xff]
    %v4251 = vld [vmem:[#allocation5 + $0x40] sm:$0xff]
    %v4252 = vld [vmem:[#allocation5 + $0x48] sm:$0xff]
    %v4253 = vld [vmem:[#allocation5 + $0x50] sm:$0xff]
    %v4254 = vld [vmem:[#allocation5 + $0x58] sm:$0xff]
    %v4255 = vsub.f32 %v4243, %v4231
    %v4256 = vsub.f32 %v4244, %v4232
    %v4257 = vsub.f32 %v4245, %v4233
    %v4258 = vsub.f32 %v4246, %v4234
    %v4259 = vsub.f32 %v4247, %v4235
    %v4260 = vsub.f32 %v4248, %v4236
    %v4261 = vsub.f32 %v4249, %v4237
    %v4262 = vsub.f32 %v4250, %v4238
    %v4263 = vsub.f32 %v4251, %v4239
    %v4264 = vsub.f32 %v4252, %v4240
    %v4265 = vsub.f32 %v4253, %v4241
    %v4266 = vsub.f32 %v4254, %v4242
    %v4267 = vmul.f32 %v4255, %v4255
    %v4268 = vmul.f32 %v4256, %v4256
    %v4269 = vmul.f32 %v4257, %v4257
    %v4270 = vmul.f32 %v4258, %v4258
    %v4271 = vmul.f32 %v4259, %v4259
    %v4272 = vmul.f32 %v4260, %v4260
    %v4273 = vmul.f32 %v4261, %v4261
    %v4274 = vmul.f32 %v4262, %v4262
    %v4275 = vmul.f32 %v4263, %v4263
    %v4276 = vmul.f32 %v4264, %v4264
    %v4277 = vmul.f32 %v4265, %v4265
    %v4278 = vmul.f32 %v4266, %v4266
    %v4279 = vadd.f32 %v4267, %v4268
    %v4280 = vadd.f32 %v4279, %v4269
    %v4281 = vadd.f32 %v4280, %v4270
    %v4282 = vadd.f32 %v4281, %v4271
    %v4283 = vadd.f32 %v4282, %v4272
    %v4284 = vadd.f32 %v4283, %v4273
    %v4285 = vadd.f32 %v4284, %v4274
    %v4286 = vadd.f32 %v4285, %v4275
    %v4287 = vadd.f32 %v4286, %v4276
    %v4288 = vadd.f32 %v4287, %v4277
    %v4289 = vadd.f32 %v4288, %v4278
    %4290 = vadd.xlane.f32.xlu0 %v4289
    %v4291 = vpop.xlane.xlu0 %4290
    %v4292 = vrot.slane %v4291, 4
    %v4293 = vadd.f32 %v4291, %v4292
    %v4294 = vrot.slane %v4293, 2
    %v4295 = vadd.f32 %v4293, %v4294
    %v4296 = vrot.slane %v4295, 1
    %v4297 = vadd.f32 %v4295, %v4296
    %s4298 = vtos %v4297
    %v4299 = vstv %s4298
    %vm4300 = vcmask 0
    %4301 = vst.msk [vmem:[#allocation8] sm:$0x1] %vm4300, %v4299
    // Predicated region
    $region26: #{tpu_custom_call.1} parent=1 // pred_check
      _
    $region27: #{tpu_custom_call.1} parent=1 // pred_check_branch
      %4303 = sbr.rel (0) target = $region29
    $region28: #{tpu_custom_call.1} parent=1 // pred_region
      %4305 = vsyncadd [#allocation4], 0
      %s4307 = sshll.u32 [#allocation8], 4
      %s4308 = int_to_ptr.vmem [resolvable:$true] %s4307
      %s4309 = sshll.u32 %s3, 4
      %s4310 = int_to_ptr.hbm [resolvable:$true] %s4309
      %4312 = dma.vmem_to_hbm [thread:$0]  %s4308, 16, %s4310, [#allocation4]
    $region29: #{tpu_custom_call.1} parent=1 // pred_fallthru
      _
    // Predicated region
    $region30: #{tpu_custom_call.1} parent=1 // pred_check
      _
    $region31: #{tpu_custom_call.1} parent=1 // pred_check_branch
      %4314 = sbr.rel (0) target = $region33
    $region32: #{tpu_custom_call.1} parent=1 // pred_region
      %4316 = dma.done [#allocation4], 16
    $region33: #{tpu_custom_call.1} parent=1 // pred_fallthru
      _
    %4317 = vsyncpa [#allocation3], 1
    %4318 = vsyncpa [#allocation6], 1
    %4319 = vsyncpa [#allocation4], 1

</llo_original>
